<compile_context>
chip_gen: v5e
topology: v5e:2x2
jax: 0.10.0
libtpu: 0.0.40
codegen_flags: <defaults>
</compile_context>

<pallas_src>
import functools

import jax
import jax.numpy as jnp
from jax import lax
from jax.experimental import pallas as pl
from jax.experimental.pallas import tpu as pltpu


def _round_up(x, m):
    return (x + m - 1) // m * m


# ---------------------------------------------------------------------------
# Kernel
# ---------------------------------------------------------------------------
def _lstm_encoder_kernel(x_ref,        # (tt, Bt, Dp)   time tile of inputs (f32)
                         w1x_ref,      # (Dp, 4*Hp)     layer-1 input weights  [i,f,o,g]
                         w1h_ref,      # (Hp, 4*Hp)     layer-1 recurrent weights
                         b1_ref,       # (1, 4*Hp)      layer-1 bias (b_ih + b_hh)
                         w2i_ref,      # (Hp, 4*Ep)     layer-2 input weights
                         w2h_ref,      # (Ep, 4*Ep)     layer-2 recurrent weights
                         b2_ref,       # (1, 4*Ep)      layer-2 bias
                         out_ref,      # (Bt, Ep)       final h1
                         xg_sc,        # (tt, Bt, 4*Hp) precomputed x-projection (f32)
                         h0_sc, c0_sc,  # (Bt, Hp)      persistent state scratch
                         h1_sc, c1_sc,  # (Bt, Ep)
                         *, tt, hp, ep, total_steps, unroll):
    t = pl.program_id(1)          # time-tile index (innermost, "arbitrary")

    @pl.when(t == 0)
    def _init():
        h0_sc[...] = jnp.zeros_like(h0_sc)
        c0_sc[...] = jnp.zeros_like(c0_sc)
        h1_sc[...] = jnp.zeros_like(h1_sc)
        c1_sc[...] = jnp.zeros_like(c1_sc)

    bt = x_ref.shape[1]
    dp = x_ref.shape[2]
    cdt = w1x_ref.dtype           # matmul input dtype (bf16/f32); accum stays f32

    # ---- grid/time-invariant work, hoisted off the serial recurrence ----
    w1h = w1h_ref[...]
    w2i = w2i_ref[...]
    w2h = w2h_ref[...]
    # Pre-broadcast b2 once (JAX does not CSE broadcast_in_dim).
    b2 = jnp.broadcast_to(b2_ref[...], (bt, 4 * ep))

    # Layer-1 input projection for the whole time tile as ONE large GEMM
    # (M = tt*Bt rows), with b1 folded in.  Both reshapes merge/split leading
    # dims only (Bt % 8 == 0, lane dims % 128 == 0), so they stay tile-aligned.
    x2d = x_ref[...].reshape(tt * bt, dp).astype(cdt)
    xg = jnp.dot(x2d, w1x_ref[...], preferred_element_type=jnp.float32) + b1_ref[...]
    xg_sc[...] = xg.reshape(tt, bt, 4 * hp)

    def _sigmoid(v):
        # Exact EUP-based sigmoid (tanh on EUP, mul/add on VPU): no VALU divide
        # on the serial per-timestep chain.  Elementwise math stays f32.
        return 0.5 * jnp.tanh(0.5 * v) + 0.5

    def _gates(g, c, n):
        # Gate order [i, f, o, g]: one contiguous sigmoid over 3*n lanes.
        sig = _sigmoid(g[:, : 3 * n])
        i_g = sig[:, 0 * n:1 * n]
        f_g = sig[:, 1 * n:2 * n]
        o_g = sig[:, 2 * n:3 * n]
        g_g = jnp.tanh(g[:, 3 * n:4 * n])
        c_new = f_g * c + i_g * g_g
        h_new = o_g * jnp.tanh(c_new)
        return h_new, c_new

    rem_guard = (total_steps % tt) != 0   # static: only the ragged-T case pays

    def _step(i, carry):
        h0, c0, h1, c1 = carry
        # Layer-1 recurrent matmul (x-projection precomputed above).
        g1 = xg_sc[i] + jnp.dot(h0.astype(cdt), w1h,
                                preferred_element_type=jnp.float32)
        # Layer-2 h-matmul issued early: independent of the layer-1 gates, so
        # the MXU work hides under the layer-1 EUP/VPU gate math.
        g2_hh = jnp.dot(h1.astype(cdt), w2h, preferred_element_type=jnp.float32)
        h0n, c0n = _gates(g1, c0, hp)
        g2 = g2_hh + jnp.dot(h0n.astype(cdt), w2i,
                             preferred_element_type=jnp.float32) + b2
        h1n, c1n = _gates(g2, c1, ep)
        if rem_guard:
            # Remainder tile: steps past `total_steps` must not mutate state
            # (zero-padded time steps would otherwise corrupt the LSTM state).
            valid = (t * tt + i) < total_steps
            h0n = jnp.where(valid, h0n, h0)
            c0n = jnp.where(valid, c0n, c0)
            h1n = jnp.where(valid, h1n, h1)
            c1n = jnp.where(valid, c1n, c1)
        return h0n, c0n, h1n, c1n

    h0, c0, h1, c1 = lax.fori_loop(
        0, tt, _step,
        (h0_sc[...], c0_sc[...], h1_sc[...], c1_sc[...]),
        unroll=unroll)

    h0_sc[...] = h0
    c0_sc[...] = c0
    h1_sc[...] = h1
    c1_sc[...] = c1

    @pl.when(t == pl.num_programs(1) - 1)
    def _finalize():
        # Lane-dense (Ep multiple of 128) write straight from the live value.
        out_ref[...] = h1.astype(out_ref.dtype)


# ---------------------------------------------------------------------------
# Weight preparation (PyTorch-shaped params -> padded/split kernel weights)
# ---------------------------------------------------------------------------
_GATE_PERM = (0, 1, 3, 2)   # PyTorch [i, f, g, o]  ->  kernel [i, f, o, g]


def _pad_gates_2d(w_t, n, n_p):
    # w_t: (K, 4n) with PyTorch gate blocks [i,f,g,o] along the last axis.
    k = w_t.shape[0]
    w4 = w_t.reshape(k, 4, n)[:, _GATE_PERM, :]
    w4 = jnp.pad(w4, ((0, 0), (0, 0), (0, n_p - n)))
    return w4.reshape(k, 4 * n_p)


def _pad_gates_bias(b, n, n_p):
    b4 = b.reshape(4, n)[_GATE_PERM, :]
    b4 = jnp.pad(b4, ((0, 0), (0, n_p - n)))
    return b4.reshape(1, 4 * n_p).astype(jnp.float32)


def _prepare_weights(params, D, H, E, Dp, Hp, Ep, weight_dtype):
    """Split (no fused concat), transposed, gate-reordered, zero-padded weights.

    Padding correctness relies on BOTH the padded gate columns and the padded
    input rows being exactly zero (padded pre-activations = 0, so padded c/h
    stay 0 and zero h columns always meet zero weight rows).
    """
    w1_ih, w1_hh, b1_ih, b1_hh, w2_ih, w2_hh, b2_ih, b2_hh = params

    w1x = jnp.pad(_pad_gates_2d(w1_ih.T, H, Hp), ((0, Dp - D), (0, 0))).astype(weight_dtype)
    w1h = jnp.pad(_pad_gates_2d(w1_hh.T, H, Hp), ((0, Hp - H), (0, 0))).astype(weight_dtype)
    b1 = _pad_gates_bias(b1_ih + b1_hh, H, Hp)

    w2i = jnp.pad(_pad_gates_2d(w2_ih.T, E, Ep), ((0, Hp - H), (0, 0))).astype(weight_dtype)
    w2h = jnp.pad(_pad_gates_2d(w2_hh.T, E, Ep), ((0, Ep - E), (0, 0))).astype(weight_dtype)
    b2 = _pad_gates_bias(b2_ih + b2_hh, E, Ep)

    return w1x, w1h, b1, w2i, w2h, b2


# ---------------------------------------------------------------------------
# Wrapper
# ---------------------------------------------------------------------------
def lstm_encoder(time_series, params, *, time_tile=16, batch_tile=None,
                 weight_dtype=jnp.bfloat16, unroll=True, weight_buffers=None,
                 vmem_limit_bytes=None):
    """time_series: (B, T, D) float32.  Returns h1: (B, embedding_dim) float32.

    batch_tile:   None (default) = whole padded batch as one shard — best on
                  single-TC v5e/v6e.  On v7x pass a tile so Bp//batch_tile >= 2
                  and batch_tile >= 128 (two TensorCores).
    weight_dtype: bf16 default (MXU-native on v6e/v7x, half the VMEM);
                  accumulation and all gate math stay f32.
    weight_buffers: set to 1 at production sizes on v7x to single-buffer the
                  grid-invariant weight specs (pipeline_mode=pl.Buffered(1)).
    unroll:       fori_loop unroll; sweep 2/4/8/True at Bt>=256, Hp>=1024.
    """
    B, T, D = time_series.shape
    H = params[1].shape[1]     # w1_hh: (4H, H)
    E = params[5].shape[1]     # w2_hh: (4E, E)

    Dp = _round_up(D, 128)
    Hp = _round_up(H, 128)
    Ep = _round_up(E, 128)
    Bp = _round_up(B, 8)

    tt = max(1, min(time_tile, T))          # steps per time tile
    n_time_tiles = pl.cdiv(T, tt)           # remainder handled in-kernel
    Tp = n_time_tiles * tt

    Bt = Bp if batch_tile is None else batch_tile
    assert Bt % 8 == 0 and Bp % Bt == 0, \
        "batch_tile must be a multiple of 8 dividing the padded batch"

    # (B, T, D) -> (Tp, Bp, Dp): contiguous per-time-tile slabs, (8,128)-aligned.
    # Time zero-padding is safe only because of the in-kernel remainder guard.
    x = jnp.transpose(time_series, (1, 0, 2)).astype(jnp.float32)
    x = jnp.pad(x, ((0, Tp - T), (0, Bp - B), (0, Dp - D)))

    w1x, w1h, b1, w2i, w2h, b2 = _prepare_weights(
        params, D, H, E, Dp, Hp, Ep, weight_dtype)

    def _wspec(shape):
        # Grid-invariant weight/bias spec.  weight_buffers=1 drops the second
        # pipeline buffer (recommended on v7x's 64 MiB VMEM at production sizes).
        if weight_buffers is None:
            return pl.BlockSpec(shape, lambda b, t: (0, 0))
        return pl.BlockSpec(shape, lambda b, t: (0, 0),
                            pipeline_mode=pl.Buffered(weight_buffers))

    # Explicit scoped-VMEM budget sized from the actual tiles (+50% headroom),
    # clamped so it never exceeds the smallest chip's physical VMEM (v7x 64 MiB).
    if vmem_limit_bytes is None:
        wb = jnp.dtype(weight_dtype).itemsize
        n_wbuf = 2 if weight_buffers is None else weight_buffers
        work = (
            2 * tt * Bt * Dp * 4                                   # x tile (double-buffered)
            + n_wbuf * ((Dp + Hp) * 4 * Hp + (Hp + Ep) * 4 * Ep) * wb  # weights
            + n_wbuf * 4 * (Hp + Ep) * 4                           # biases (f32)
            + tt * Bt * 4 * Hp * 4                                 # xg scratch
            + 2 * Bt * (Hp + Ep) * 4                               # h/c scratch
            + 2 * Bt * Ep * 4                                      # out tile
        )
        vmem_limit_bytes = min(64 * 1024 * 1024,
                               max(32 * 1024 * 1024, int(work * 1.5) + (4 << 20)))

    grid = (Bp // Bt, n_time_tiles)   # (parallel batch shards, sequential time)
    kernel = pl.pallas_call(
        functools.partial(_lstm_encoder_kernel, tt=tt, hp=Hp, ep=Ep,
                          total_steps=T, unroll=unroll),
        out_shape=jax.ShapeDtypeStruct((Bp, Ep), jnp.float32),
        grid_spec=pltpu.PrefetchScalarGridSpec(
            num_scalar_prefetch=0,
            grid=grid,
            in_specs=[
                pl.BlockSpec((tt, Bt, Dp), lambda b, t: (t, b, 0)),  # x tile
                _wspec((Dp, 4 * Hp)),                                # w1x
                _wspec((Hp, 4 * Hp)),                                # w1h
                _wspec((1, 4 * Hp)),                                 # b1
                _wspec((Hp, 4 * Ep)),                                # w2i
                _wspec((Ep, 4 * Ep)),                                # w2h
                _wspec((1, 4 * Ep)),                                 # b2
            ],
            out_specs=pl.BlockSpec((Bt, Ep), lambda b, t: (b, 0)),
            scratch_shapes=[
                pltpu.VMEM((tt, Bt, 4 * Hp), jnp.float32),  # xg (x-projection)
                pltpu.VMEM((Bt, Hp), jnp.float32),          # h0
                pltpu.VMEM((Bt, Hp), jnp.float32),          # c0
                pltpu.VMEM((Bt, Ep), jnp.float32),          # h1
                pltpu.VMEM((Bt, Ep), jnp.float32),          # c1
            ],
        ),
        compiler_params=pltpu.CompilerParams(
            # Batch shards are independent (megacore on v7x); time must stay
            # innermost + sequential (scratch state re-initialized at t == 0).
            dimension_semantics=("parallel", "arbitrary"),
            vmem_limit_bytes=vmem_limit_bytes,
        ),
    )
    out = kernel(x, w1x, w1h, b1, w2i, w2h, b2)
    return out[:B, :E]


# ---------------------------------------------------------------------------
# Parameter init + pure-JAX reference (torch.nn.LSTMCell semantics)
# ---------------------------------------------------------------------------
def _init_params(key, input_dim, hidden_dim, embedding_dim):
    """PyTorch nn.LSTMCell-shaped parameters, uniform(-1/sqrt(hid), 1/sqrt(hid))."""
    ks = jax.random.split(key, 8)

    def u(k, shape, hid):
        s = 1.0 / jnp.sqrt(jnp.float32(hid))
        return jax.random.uniform(k, shape, jnp.float32, -s, s)

    w1_ih = u(ks[0], (4 * hidden_dim, input_dim), hidden_dim)
    w1_hh = u(ks[1], (4 * hidden_dim, hidden_dim), hidden_dim)
    b1_ih = u(ks[2], (4 * hidden_dim,), hidden_dim)
    b1_hh = u(ks[3], (4 * hidden_dim,), hidden_dim)
    w2_ih = u(ks[4], (4 * embedding_dim, hidden_dim), embedding_dim)
    w2_hh = u(ks[5], (4 * embedding_dim, embedding_dim), embedding_dim)
    b2_ih = u(ks[6], (4 * embedding_dim,), embedding_dim)
    b2_hh = u(ks[7], (4 * embedding_dim,), embedding_dim)
    return (w1_ih, w1_hh, b1_ih, b1_hh, w2_ih, w2_hh, b2_ih, b2_hh)


def _reference(time_series, params):
    w1_ih, w1_hh, b1_ih, b1_hh, w2_ih, w2_hh, b2_ih, b2_hh = params
    B, T, _ = time_series.shape
    H = w1_hh.shape[1]
    E = w2_hh.shape[1]

    def cell(x, h, c, w_ih, w_hh, b_ih, b_hh, n):
        g = x @ w_ih.T + b_ih + h @ w_hh.T + b_hh
        i = jax.nn.sigmoid(g[:, 0 * n:1 * n])
        f = jax.nn.sigmoid(g[:, 1 * n:2 * n])
        gg = jnp.tanh(g[:, 2 * n:3 * n])
        o = jax.nn.sigmoid(g[:, 3 * n:4 * n])
        c_new = f * c + i * gg
        h_new = o * jnp.tanh(c_new)
        return h_new, c_new

    h0 = jnp.zeros((B, H), jnp.float32)
    c0 = jnp.zeros((B, H), jnp.float32)
    h1 = jnp.zeros((B, E), jnp.float32)
    c1 = jnp.zeros((B, E), jnp.float32)
    for t in range(T):
        h0, c0 = cell(time_series[:, t, :], h0, c0, w1_ih, w1_hh, b1_ih, b1_hh, H)
        h1, c1 = cell(h0, h1, c1, w2_ih, w2_hh, b2_ih, b2_hh, E)
    return h1


if __name__ == "__main__":
    # Small shapes consistent with the module's forward:
    #   time_series: (batch, step, feature) ; returns (batch, embedding_dim)
    batch = 16
    step = 8
    input_dim = 16
    hidden_dim = 32
    embedding_dim = 32

    key = jax.random.PRNGKey(0)
    k_x, k_p = jax.random.split(key)
    x = jax.random.normal(k_x, (batch, step, input_dim), jnp.float32)
    params = _init_params(k_p, input_dim, hidden_dim, embedding_dim)
    ref = _reference(x, params)

    # 1) f32 weights, whole batch as one shard — tight exactness check.
    out_f32 = jax.block_until_ready(
        lstm_encoder(x, params, time_tile=16, weight_dtype=jnp.float32))
    assert out_f32.shape == (batch, embedding_dim)
    err = float(jnp.max(jnp.abs(out_f32 - ref)))
    assert jnp.allclose(out_f32, ref, atol=1e-4, rtol=1e-4), f"f32 mismatch: {err}"

    # 2) default bf16 weights + two batch shards (exercises the parallel axis).
    #    bf16 matmul inputs -> loosened tolerance (expected precision, not a bug).
    out_bf16 = jax.block_until_ready(
        lstm_encoder(x, params, time_tile=16, batch_tile=8))
    err = float(jnp.max(jnp.abs(out_bf16 - ref)))
    assert jnp.allclose(out_bf16, ref, atol=5e-2, rtol=5e-2), f"bf16 mismatch: {err}"

    # 3) awkward T (7 steps, tile of 4) — exercises the in-kernel remainder guard.
    x7 = x[:, :7, :]
    ref7 = _reference(x7, params)
    out7 = jax.block_until_ready(
        lstm_encoder(x7, params, time_tile=4, weight_dtype=jnp.float32))
    err = float(jnp.max(jnp.abs(out7 - ref7)))
    assert jnp.allclose(out7, ref7, atol=1e-4, rtol=1e-4), f"remainder-guard mismatch: {err}"

    print("KERNEL_OK")
</pallas_src>

<mosaic_0001>
module attributes {stable_mosaic.version = 11 : i64} {
  func.func @_lstm_encoder_kernel(%arg0: i32, %arg1: i32, %arg2: memref<8x16x128xf32, #tpu.memory_space<vmem>>, %arg3: memref<128x512xf32, #tpu.memory_space<vmem>>, %arg4: memref<128x512xf32, #tpu.memory_space<vmem>>, %arg5: memref<1x512xf32, #tpu.memory_space<vmem>>, %arg6: memref<128x512xf32, #tpu.memory_space<vmem>>, %arg7: memref<128x512xf32, #tpu.memory_space<vmem>>, %arg8: memref<1x512xf32, #tpu.memory_space<vmem>>, %arg9: memref<16x128xf32, #tpu.memory_space<vmem>>, %arg10: memref<8x16x512xf32, #tpu.memory_space<vmem>>, %arg11: memref<16x128xf32, #tpu.memory_space<vmem>>, %arg12: memref<16x128xf32, #tpu.memory_space<vmem>>, %arg13: memref<16x128xf32, #tpu.memory_space<vmem>>, %arg14: memref<16x128xf32, #tpu.memory_space<vmem>>) attributes {dimension_semantics = [#tpu.dimension_semantics<parallel>, #tpu.dimension_semantics<arbitrary>], iteration_bounds = array<i64: 1, 1>, scalar_prefetch = 0 : i64, scratch_operands = 5 : i64, tpu.core_type = #tpu.core_type<tc>, window_params = [{transform_indices = @transform_0, window_bounds = array<i64: 8, 16, 128>}, {pipeline_mode = #tpu.pipeline_mode<synchronous>, transform_indices = @transform_1, window_bounds = array<i64: 128, 512>}, {pipeline_mode = #tpu.pipeline_mode<synchronous>, transform_indices = @transform_2, window_bounds = array<i64: 128, 512>}, {pipeline_mode = #tpu.pipeline_mode<synchronous>, transform_indices = @transform_3, window_bounds = array<i64: 1, 512>}, {pipeline_mode = #tpu.pipeline_mode<synchronous>, transform_indices = @transform_4, window_bounds = array<i64: 128, 512>}, {pipeline_mode = #tpu.pipeline_mode<synchronous>, transform_indices = @transform_5, window_bounds = array<i64: 128, 512>}, {pipeline_mode = #tpu.pipeline_mode<synchronous>, transform_indices = @transform_6, window_bounds = array<i64: 1, 512>}, {transform_indices = @transform_7, window_bounds = array<i64: 16, 128>}]} {
    %c0_i32 = arith.constant 0 : i32
    %0 = arith.cmpi eq, %arg1, %c0_i32 : i32
    %1 = arith.extui %0 : i1 to i32
    %c0_i32_0 = arith.constant 0 : i32
    %2 = arith.cmpi ne, %1, %c0_i32_0 : i32
    scf.if %2 {
      %cst_125 = arith.constant 0.000000e+00 : f32
      %389 = vector.broadcast %cst_125 : f32 to vector<16x128xf32>
      %c0_126 = arith.constant 0 : index
      %c0_127 = arith.constant 0 : index
      %390 = vector.load %arg11[%c0_126, %c0_127] : memref<16x128xf32, #tpu.memory_space<vmem>>, vector<16x128xf32>
      tpu.vector_store %arg11[%c0_126, %c0_127], %389 {strides = array<i32>} : memref<16x128xf32, #tpu.memory_space<vmem>>, vector<16x128xf32>,
      %cst_128 = arith.constant 0.000000e+00 : f32
      %391 = vector.broadcast %cst_128 : f32 to vector<16x128xf32>
      %c0_129 = arith.constant 0 : index
      %c0_130 = arith.constant 0 : index
      %392 = vector.load %arg12[%c0_129, %c0_130] : memref<16x128xf32, #tpu.memory_space<vmem>>, vector<16x128xf32>
      tpu.vector_store %arg12[%c0_129, %c0_130], %391 {strides = array<i32>} : memref<16x128xf32, #tpu.memory_space<vmem>>, vector<16x128xf32>,
      %cst_131 = arith.constant 0.000000e+00 : f32
      %393 = vector.broadcast %cst_131 : f32 to vector<16x128xf32>
      %c0_132 = arith.constant 0 : index
      %c0_133 = arith.constant 0 : index
      %394 = vector.load %arg13[%c0_132, %c0_133] : memref<16x128xf32, #tpu.memory_space<vmem>>, vector<16x128xf32>
      tpu.vector_store %arg13[%c0_132, %c0_133], %393 {strides = array<i32>} : memref<16x128xf32, #tpu.memory_space<vmem>>, vector<16x128xf32>,
      %cst_134 = arith.constant 0.000000e+00 : f32
      %395 = vector.broadcast %cst_134 : f32 to vector<16x128xf32>
      %c0_135 = arith.constant 0 : index
      %c0_136 = arith.constant 0 : index
      %396 = vector.load %arg14[%c0_135, %c0_136] : memref<16x128xf32, #tpu.memory_space<vmem>>, vector<16x128xf32>
      tpu.vector_store %arg14[%c0_135, %c0_136], %395 {strides = array<i32>} : memref<16x128xf32, #tpu.memory_space<vmem>>, vector<16x128xf32>,
    } else {
    }
    %c0 = arith.constant 0 : index
    %c0_1 = arith.constant 0 : index
    %3 = vector.load %arg4[%c0, %c0_1] : memref<128x512xf32, #tpu.memory_space<vmem>>, vector<128x512xf32>
    %c0_2 = arith.constant 0 : index
    %c0_3 = arith.constant 0 : index
    %4 = vector.load %arg6[%c0_2, %c0_3] : memref<128x512xf32, #tpu.memory_space<vmem>>, vector<128x512xf32>
    %c0_4 = arith.constant 0 : index
    %c0_5 = arith.constant 0 : index
    %5 = vector.load %arg7[%c0_4, %c0_5] : memref<128x512xf32, #tpu.memory_space<vmem>>, vector<128x512xf32>
    %c0_6 = arith.constant 0 : index
    %c0_7 = arith.constant 0 : index
    %6 = vector.load %arg8[%c0_6, %c0_7] : memref<1x512xf32, #tpu.memory_space<vmem>>, vector<1x512xf32>
    %7 = vector.shape_cast %6 : vector<1x512xf32> to vector<1x512xf32>
    %8 = vector.broadcast %7 : vector<1x512xf32> to vector<16x512xf32>
    %c0_8 = arith.constant 0 : index
    %c0_9 = arith.constant 0 : index
    %c0_10 = arith.constant 0 : index
    %9 = vector.load %arg2[%c0_8, %c0_9, %c0_10] : memref<8x16x128xf32, #tpu.memory_space<vmem>>, vector<8x16x128xf32>
    %10 = vector.shape_cast %9 : vector<8x16x128xf32> to vector<128x128xf32>
    %c0_11 = arith.constant 0 : index
    %c0_12 = arith.constant 0 : index
    %11 = vector.load %arg3[%c0_11, %c0_12] : memref<128x512xf32, #tpu.memory_space<vmem>>, vector<128x512xf32>
    %cst = arith.constant dense<0.000000e+00> : vector<128x512xf32>
    %12 = tpu.matmul %10, %11, %cst {dimension_numbers = #tpu.dot_dimension_numbers<[1], [0], [0], [1], [0, 0, 1, 1], [], []>} : vector<128x128xf32>, vector<128x512xf32>, vector<128x512xf32> -> vector<128x512xf32>
    %c0_13 = arith.constant 0 : index
    %c0_14 = arith.constant 0 : index
    %13 = vector.load %arg5[%c0_13, %c0_14] : memref<1x512xf32, #tpu.memory_space<vmem>>, vector<1x512xf32>
    %14 = vector.broadcast %13 : vector<1x512xf32> to vector<128x512xf32>
    %15 = arith.addf %12, %14 : vector<128x512xf32>
    %16 = vector.shape_cast %15 : vector<128x512xf32> to vector<8x16x512xf32>
    %c0_15 = arith.constant 0 : index
    %c0_16 = arith.constant 0 : index
    %c0_17 = arith.constant 0 : index
    %17 = vector.load %arg10[%c0_15, %c0_16, %c0_17] : memref<8x16x512xf32, #tpu.memory_space<vmem>>, vector<8x16x512xf32>
    tpu.vector_store %arg10[%c0_15, %c0_16, %c0_17], %16 {strides = array<i32>} : memref<8x16x512xf32, #tpu.memory_space<vmem>>, vector<8x16x512xf32>,
    %c0_18 = arith.constant 0 : index
    %c0_19 = arith.constant 0 : index
    %18 = vector.load %arg11[%c0_18, %c0_19] : memref<16x128xf32, #tpu.memory_space<vmem>>, vector<16x128xf32>
    %c0_20 = arith.constant 0 : index
    %c0_21 = arith.constant 0 : index
    %19 = vector.load %arg12[%c0_20, %c0_21] : memref<16x128xf32, #tpu.memory_space<vmem>>, vector<16x128xf32>
    %c0_22 = arith.constant 0 : index
    %c0_23 = arith.constant 0 : index
    %20 = vector.load %arg13[%c0_22, %c0_23] : memref<16x128xf32, #tpu.memory_space<vmem>>, vector<16x128xf32>
    %c0_24 = arith.constant 0 : index
    %c0_25 = arith.constant 0 : index
    %21 = vector.load %arg14[%c0_24, %c0_25] : memref<16x128xf32, #tpu.memory_space<vmem>>, vector<16x128xf32>
    %c0_i32_26 = arith.constant 0 : i32
    %22 = arith.index_cast %c0_i32_26 : i32 to index
    %c0_27 = arith.constant 0 : index
    %c0_28 = arith.constant 0 : index
    %23 = vector.load %arg10[%22, %c0_27, %c0_28] : memref<8x16x512xf32, #tpu.memory_space<vmem>>, vector<1x16x512xf32>
    %24 = vector.shape_cast %23 : vector<1x16x512xf32> to vector<16x512xf32>
    %cst_29 = arith.constant dense<0.000000e+00> : vector<16x512xf32>
    %25 = tpu.matmul %18, %3, %cst_29 {dimension_numbers = #tpu.dot_dimension_numbers<[1], [0], [0], [1], [0, 0, 1, 1], [], []>} : vector<16x128xf32>, vector<128x512xf32>, vector<16x512xf32> -> vector<16x512xf32>
    %26 = arith.addf %24, %25 : vector<16x512xf32>
    %cst_30 = arith.constant dense<0.000000e+00> : vector<16x512xf32>
    %27 = tpu.matmul %20, %5, %cst_30 {dimension_numbers = #tpu.dot_dimension_numbers<[1], [0], [0], [1], [0, 0, 1, 1], [], []>} : vector<16x128xf32>, vector<128x512xf32>, vector<16x512xf32> -> vector<16x512xf32>
    %28 = vector.extract_strided_slice %26 {offsets = [0, 0], sizes = [16, 384], strides = [1, 1]} : vector<16x512xf32> to vector<16x384xf32>
    %cst_31 = arith.constant 5.000000e-01 : f32
    %29 = vector.broadcast %cst_31 : f32 to vector<16x384xf32>
    %30 = arith.mulf %29, %28 : vector<16x384xf32>
    %31 = math.tanh %30 : vector<16x384xf32>
    %cst_32 = arith.constant 5.000000e-01 : f32
    %32 = vector.broadcast %cst_32 : f32 to vector<16x384xf32>
    %33 = arith.mulf %32, %31 : vector<16x384xf32>
    %cst_33 = arith.constant 5.000000e-01 : f32
    %34 = vector.broadcast %cst_33 : f32 to vector<16x384xf32>
    %35 = arith.addf %33, %34 : vector<16x384xf32>
    %36 = vector.extract_strided_slice %35 {offsets = [0, 0], sizes = [16, 128], strides = [1, 1]} : vector<16x384xf32> to vector<16x128xf32>
    %37 = vector.extract_strided_slice %35 {offsets = [0, 128], sizes = [16, 128], strides = [1, 1]} : vector<16x384xf32> to vector<16x128xf32>
    %38 = vector.extract_strided_slice %35 {offsets = [0, 256], sizes = [16, 128], strides = [1, 1]} : vector<16x384xf32> to vector<16x128xf32>
    %39 = vector.extract_strided_slice %26 {offsets = [0, 384], sizes = [16, 128], strides = [1, 1]} : vector<16x512xf32> to vector<16x128xf32>
    %40 = math.tanh %39 : vector<16x128xf32>
    %41 = arith.mulf %37, %19 : vector<16x128xf32>
    %42 = arith.mulf %36, %40 : vector<16x128xf32>
    %43 = arith.addf %41, %42 : vector<16x128xf32>
    %44 = math.tanh %43 : vector<16x128xf32>
    %45 = arith.mulf %38, %44 : vector<16x128xf32>
    %cst_34 = arith.constant dense<0.000000e+00> : vector<16x512xf32>
    %46 = tpu.matmul %45, %4, %cst_34 {dimension_numbers = #tpu.dot_dimension_numbers<[1], [0], [0], [1], [0, 0, 1, 1], [], []>} : vector<16x128xf32>, vector<128x512xf32>, vector<16x512xf32> -> vector<16x512xf32>
    %47 = arith.addf %27, %46 : vector<16x512xf32>
    %48 = arith.addf %47, %8 : vector<16x512xf32>
    %49 = vector.extract_strided_slice %48 {offsets = [0, 0], sizes = [16, 384], strides = [1, 1]} : vector<16x512xf32> to vector<16x384xf32>
    %cst_35 = arith.constant 5.000000e-01 : f32
    %50 = vector.broadcast %cst_35 : f32 to vector<16x384xf32>
    %51 = arith.mulf %50, %49 : vector<16x384xf32>
    %52 = math.tanh %51 : vector<16x384xf32>
    %cst_36 = arith.constant 5.000000e-01 : f32
    %53 = vector.broadcast %cst_36 : f32 to vector<16x384xf32>
    %54 = arith.mulf %53, %52 : vector<16x384xf32>
    %cst_37 = arith.constant 5.000000e-01 : f32
    %55 = vector.broadcast %cst_37 : f32 to vector<16x384xf32>
    %56 = arith.addf %54, %55 : vector<16x384xf32>
    %57 = vector.extract_strided_slice %56 {offsets = [0, 0], sizes = [16, 128], strides = [1, 1]} : vector<16x384xf32> to vector<16x128xf32>
    %58 = vector.extract_strided_slice %56 {offsets = [0, 128], sizes = [16, 128], strides = [1, 1]} : vector<16x384xf32> to vector<16x128xf32>
    %59 = vector.extract_strided_slice %56 {offsets = [0, 256], sizes = [16, 128], strides = [1, 1]} : vector<16x384xf32> to vector<16x128xf32>
    %60 = vector.extract_strided_slice %48 {offsets = [0, 384], sizes = [16, 128], strides = [1, 1]} : vector<16x512xf32> to vector<16x128xf32>
    %61 = math.tanh %60 : vector<16x128xf32>
    %62 = arith.mulf %58, %21 : vector<16x128xf32>
    %63 = arith.mulf %57, %61 : vector<16x128xf32>
    %64 = arith.addf %62, %63 : vector<16x128xf32>
    %65 = math.tanh %64 : vector<16x128xf32>
    %66 = arith.mulf %59, %65 : vector<16x128xf32>
    %c1_i32 = arith.constant 1 : i32
    %67 = arith.index_cast %c1_i32 : i32 to index
    %c0_38 = arith.constant 0 : index
    %c0_39 = arith.constant 0 : index
    %68 = vector.load %arg10[%67, %c0_38, %c0_39] : memref<8x16x512xf32, #tpu.memory_space<vmem>>, vector<1x16x512xf32>
    %69 = vector.shape_cast %68 : vector<1x16x512xf32> to vector<16x512xf32>
    %cst_40 = arith.constant dense<0.000000e+00> : vector<16x512xf32>
    %70 = tpu.matmul %45, %3, %cst_40 {dimension_numbers = #tpu.dot_dimension_numbers<[1], [0], [0], [1], [0, 0, 1, 1], [], []>} : vector<16x128xf32>, vector<128x512xf32>, vector<16x512xf32> -> vector<16x512xf32>
    %71 = arith.addf %69, %70 : vector<16x512xf32>
    %cst_41 = arith.constant dense<0.000000e+00> : vector<16x512xf32>
    %72 = tpu.matmul %66, %5, %cst_41 {dimension_numbers = #tpu.dot_dimension_numbers<[1], [0], [0], [1], [0, 0, 1, 1], [], []>} : vector<16x128xf32>, vector<128x512xf32>, vector<16x512xf32> -> vector<16x512xf32>
    %73 = vector.extract_strided_slice %71 {offsets = [0, 0], sizes = [16, 384], strides = [1, 1]} : vector<16x512xf32> to vector<16x384xf32>
    %cst_42 = arith.constant 5.000000e-01 : f32
    %74 = vector.broadcast %cst_42 : f32 to vector<16x384xf32>
    %75 = arith.mulf %74, %73 : vector<16x384xf32>
    %76 = math.tanh %75 : vector<16x384xf32>
    %cst_43 = arith.constant 5.000000e-01 : f32
    %77 = vector.broadcast %cst_43 : f32 to vector<16x384xf32>
    %78 = arith.mulf %77, %76 : vector<16x384xf32>
    %cst_44 = arith.constant 5.000000e-01 : f32
    %79 = vector.broadcast %cst_44 : f32 to vector<16x384xf32>
    %80 = arith.addf %78, %79 : vector<16x384xf32>
    %81 = vector.extract_strided_slice %80 {offsets = [0, 0], sizes = [16, 128], strides = [1, 1]} : vector<16x384xf32> to vector<16x128xf32>
    %82 = vector.extract_strided_slice %80 {offsets = [0, 128], sizes = [16, 128], strides = [1, 1]} : vector<16x384xf32> to vector<16x128xf32>
    %83 = vector.extract_strided_slice %80 {offsets = [0, 256], sizes = [16, 128], strides = [1, 1]} : vector<16x384xf32> to vector<16x128xf32>
    %84 = vector.extract_strided_slice %71 {offsets = [0, 384], sizes = [16, 128], strides = [1, 1]} : vector<16x512xf32> to vector<16x128xf32>
    %85 = math.tanh %84 : vector<16x128xf32>
    %86 = arith.mulf %82, %43 : vector<16x128xf32>
    %87 = arith.mulf %81, %85 : vector<16x128xf32>
    %88 = arith.addf %86, %87 : vector<16x128xf32>
    %89 = math.tanh %88 : vector<16x128xf32>
    %90 = arith.mulf %83, %89 : vector<16x128xf32>
    %cst_45 = arith.constant dense<0.000000e+00> : vector<16x512xf32>
    %91 = tpu.matmul %90, %4, %cst_45 {dimension_numbers = #tpu.dot_dimension_numbers<[1], [0], [0], [1], [0, 0, 1, 1], [], []>} : vector<16x128xf32>, vector<128x512xf32>, vector<16x512xf32> -> vector<16x512xf32>
    %92 = arith.addf %72, %91 : vector<16x512xf32>
    %93 = arith.addf %92, %8 : vector<16x512xf32>
    %94 = vector.extract_strided_slice %93 {offsets = [0, 0], sizes = [16, 384], strides = [1, 1]} : vector<16x512xf32> to vector<16x384xf32>
    %cst_46 = arith.constant 5.000000e-01 : f32
    %95 = vector.broadcast %cst_46 : f32 to vector<16x384xf32>
    %96 = arith.mulf %95, %94 : vector<16x384xf32>
    %97 = math.tanh %96 : vector<16x384xf32>
    %cst_47 = arith.constant 5.000000e-01 : f32
    %98 = vector.broadcast %cst_47 : f32 to vector<16x384xf32>
    %99 = arith.mulf %98, %97 : vector<16x384xf32>
    %cst_48 = arith.constant 5.000000e-01 : f32
    %100 = vector.broadcast %cst_48 : f32 to vector<16x384xf32>
    %101 = arith.addf %99, %100 : vector<16x384xf32>
    %102 = vector.extract_strided_slice %101 {offsets = [0, 0], sizes = [16, 128], strides = [1, 1]} : vector<16x384xf32> to vector<16x128xf32>
    %103 = vector.extract_strided_slice %101 {offsets = [0, 128], sizes = [16, 128], strides = [1, 1]} : vector<16x384xf32> to vector<16x128xf32>
    %104 = vector.extract_strided_slice %101 {offsets = [0, 256], sizes = [16, 128], strides = [1, 1]} : vector<16x384xf32> to vector<16x128xf32>
    %105 = vector.extract_strided_slice %93 {offsets = [0, 384], sizes = [16, 128], strides = [1, 1]} : vector<16x512xf32> to vector<16x128xf32>
    %106 = math.tanh %105 : vector<16x128xf32>
    %107 = arith.mulf %103, %64 : vector<16x128xf32>
    %108 = arith.mulf %102, %106 : vector<16x128xf32>
    %109 = arith.addf %107, %108 : vector<16x128xf32>
    %110 = math.tanh %109 : vector<16x128xf32>
    %111 = arith.mulf %104, %110 : vector<16x128xf32>
    %c2_i32 = arith.constant 2 : i32
    %112 = arith.index_cast %c2_i32 : i32 to index
    %c0_49 = arith.constant 0 : index
    %c0_50 = arith.constant 0 : index
    %113 = vector.load %arg10[%112, %c0_49, %c0_50] : memref<8x16x512xf32, #tpu.memory_space<vmem>>, vector<1x16x512xf32>
    %114 = vector.shape_cast %113 : vector<1x16x512xf32> to vector<16x512xf32>
    %cst_51 = arith.constant dense<0.000000e+00> : vector<16x512xf32>
    %115 = tpu.matmul %90, %3, %cst_51 {dimension_numbers = #tpu.dot_dimension_numbers<[1], [0], [0], [1], [0, 0, 1, 1], [], []>} : vector<16x128xf32>, vector<128x512xf32>, vector<16x512xf32> -> vector<16x512xf32>
    %116 = arith.addf %114, %115 : vector<16x512xf32>
    %cst_52 = arith.constant dense<0.000000e+00> : vector<16x512xf32>
    %117 = tpu.matmul %111, %5, %cst_52 {dimension_numbers = #tpu.dot_dimension_numbers<[1], [0], [0], [1], [0, 0, 1, 1], [], []>} : vector<16x128xf32>, vector<128x512xf32>, vector<16x512xf32> -> vector<16x512xf32>
    %118 = vector.extract_strided_slice %116 {offsets = [0, 0], sizes = [16, 384], strides = [1, 1]} : vector<16x512xf32> to vector<16x384xf32>
    %cst_53 = arith.constant 5.000000e-01 : f32
    %119 = vector.broadcast %cst_53 : f32 to vector<16x384xf32>
    %120 = arith.mulf %119, %118 : vector<16x384xf32>
    %121 = math.tanh %120 : vector<16x384xf32>
    %cst_54 = arith.constant 5.000000e-01 : f32
    %122 = vector.broadcast %cst_54 : f32 to vector<16x384xf32>
    %123 = arith.mulf %122, %121 : vector<16x384xf32>
    %cst_55 = arith.constant 5.000000e-01 : f32
    %124 = vector.broadcast %cst_55 : f32 to vector<16x384xf32>
    %125 = arith.addf %123, %124 : vector<16x384xf32>
    %126 = vector.extract_strided_slice %125 {offsets = [0, 0], sizes = [16, 128], strides = [1, 1]} : vector<16x384xf32> to vector<16x128xf32>
    %127 = vector.extract_strided_slice %125 {offsets = [0, 128], sizes = [16, 128], strides = [1, 1]} : vector<16x384xf32> to vector<16x128xf32>
    %128 = vector.extract_strided_slice %125 {offsets = [0, 256], sizes = [16, 128], strides = [1, 1]} : vector<16x384xf32> to vector<16x128xf32>
    %129 = vector.extract_strided_slice %116 {offsets = [0, 384], sizes = [16, 128], strides = [1, 1]} : vector<16x512xf32> to vector<16x128xf32>
    %130 = math.tanh %129 : vector<16x128xf32>
    %131 = arith.mulf %127, %88 : vector<16x128xf32>
    %132 = arith.mulf %126, %130 : vector<16x128xf32>
    %133 = arith.addf %131, %132 : vector<16x128xf32>
    %134 = math.tanh %133 : vector<16x128xf32>
    %135 = arith.mulf %128, %134 : vector<16x128xf32>
    %cst_56 = arith.constant dense<0.000000e+00> : vector<16x512xf32>
    %136 = tpu.matmul %135, %4, %cst_56 {dimension_numbers = #tpu.dot_dimension_numbers<[1], [0], [0], [1], [0, 0, 1, 1], [], []>} : vector<16x128xf32>, vector<128x512xf32>, vector<16x512xf32> -> vector<16x512xf32>
    %137 = arith.addf %117, %136 : vector<16x512xf32>
    %138 = arith.addf %137, %8 : vector<16x512xf32>
    %139 = vector.extract_strided_slice %138 {offsets = [0, 0], sizes = [16, 384], strides = [1, 1]} : vector<16x512xf32> to vector<16x384xf32>
    %cst_57 = arith.constant 5.000000e-01 : f32
    %140 = vector.broadcast %cst_57 : f32 to vector<16x384xf32>
    %141 = arith.mulf %140, %139 : vector<16x384xf32>
    %142 = math.tanh %141 : vector<16x384xf32>
    %cst_58 = arith.constant 5.000000e-01 : f32
    %143 = vector.broadcast %cst_58 : f32 to vector<16x384xf32>
    %144 = arith.mulf %143, %142 : vector<16x384xf32>
    %cst_59 = arith.constant 5.000000e-01 : f32
    %145 = vector.broadcast %cst_59 : f32 to vector<16x384xf32>
    %146 = arith.addf %144, %145 : vector<16x384xf32>
    %147 = vector.extract_strided_slice %146 {offsets = [0, 0], sizes = [16, 128], strides = [1, 1]} : vector<16x384xf32> to vector<16x128xf32>
    %148 = vector.extract_strided_slice %146 {offsets = [0, 128], sizes = [16, 128], strides = [1, 1]} : vector<16x384xf32> to vector<16x128xf32>
    %149 = vector.extract_strided_slice %146 {offsets = [0, 256], sizes = [16, 128], strides = [1, 1]} : vector<16x384xf32> to vector<16x128xf32>
    %150 = vector.extract_strided_slice %138 {offsets = [0, 384], sizes = [16, 128], strides = [1, 1]} : vector<16x512xf32> to vector<16x128xf32>
    %151 = math.tanh %150 : vector<16x128xf32>
    %152 = arith.mulf %148, %109 : vector<16x128xf32>
    %153 = arith.mulf %147, %151 : vector<16x128xf32>
    %154 = arith.addf %152, %153 : vector<16x128xf32>
    %155 = math.tanh %154 : vector<16x128xf32>
    %156 = arith.mulf %149, %155 : vector<16x128xf32>
    %c3_i32 = arith.constant 3 : i32
    %157 = arith.index_cast %c3_i32 : i32 to index
    %c0_60 = arith.constant 0 : index
    %c0_61 = arith.constant 0 : index
    %158 = vector.load %arg10[%157, %c0_60, %c0_61] : memref<8x16x512xf32, #tpu.memory_space<vmem>>, vector<1x16x512xf32>
    %159 = vector.shape_cast %158 : vector<1x16x512xf32> to vector<16x512xf32>
    %cst_62 = arith.constant dense<0.000000e+00> : vector<16x512xf32>
    %160 = tpu.matmul %135, %3, %cst_62 {dimension_numbers = #tpu.dot_dimension_numbers<[1], [0], [0], [1], [0, 0, 1, 1], [], []>} : vector<16x128xf32>, vector<128x512xf32>, vector<16x512xf32> -> vector<16x512xf32>
    %161 = arith.addf %159, %160 : vector<16x512xf32>
    %cst_63 = arith.constant dense<0.000000e+00> : vector<16x512xf32>
    %162 = tpu.matmul %156, %5, %cst_63 {dimension_numbers = #tpu.dot_dimension_numbers<[1], [0], [0], [1], [0, 0, 1, 1], [], []>} : vector<16x128xf32>, vector<128x512xf32>, vector<16x512xf32> -> vector<16x512xf32>
    %163 = vector.extract_strided_slice %161 {offsets = [0, 0], sizes = [16, 384], strides = [1, 1]} : vector<16x512xf32> to vector<16x384xf32>
    %cst_64 = arith.constant 5.000000e-01 : f32
    %164 = vector.broadcast %cst_64 : f32 to vector<16x384xf32>
    %165 = arith.mulf %164, %163 : vector<16x384xf32>
    %166 = math.tanh %165 : vector<16x384xf32>
    %cst_65 = arith.constant 5.000000e-01 : f32
    %167 = vector.broadcast %cst_65 : f32 to vector<16x384xf32>
    %168 = arith.mulf %167, %166 : vector<16x384xf32>
    %cst_66 = arith.constant 5.000000e-01 : f32
    %169 = vector.broadcast %cst_66 : f32 to vector<16x384xf32>
    %170 = arith.addf %168, %169 : vector<16x384xf32>
    %171 = vector.extract_strided_slice %170 {offsets = [0, 0], sizes = [16, 128], strides = [1, 1]} : vector<16x384xf32> to vector<16x128xf32>
    %172 = vector.extract_strided_slice %170 {offsets = [0, 128], sizes = [16, 128], strides = [1, 1]} : vector<16x384xf32> to vector<16x128xf32>
    %173 = vector.extract_strided_slice %170 {offsets = [0, 256], sizes = [16, 128], strides = [1, 1]} : vector<16x384xf32> to vector<16x128xf32>
    %174 = vector.extract_strided_slice %161 {offsets = [0, 384], sizes = [16, 128], strides = [1, 1]} : vector<16x512xf32> to vector<16x128xf32>
    %175 = math.tanh %174 : vector<16x128xf32>
    %176 = arith.mulf %172, %133 : vector<16x128xf32>
    %177 = arith.mulf %171, %175 : vector<16x128xf32>
    %178 = arith.addf %176, %177 : vector<16x128xf32>
    %179 = math.tanh %178 : vector<16x128xf32>
    %180 = arith.mulf %173, %179 : vector<16x128xf32>
    %cst_67 = arith.constant dense<0.000000e+00> : vector<16x512xf32>
    %181 = tpu.matmul %180, %4, %cst_67 {dimension_numbers = #tpu.dot_dimension_numbers<[1], [0], [0], [1], [0, 0, 1, 1], [], []>} : vector<16x128xf32>, vector<128x512xf32>, vector<16x512xf32> -> vector<16x512xf32>
    %182 = arith.addf %162, %181 : vector<16x512xf32>
    %183 = arith.addf %182, %8 : vector<16x512xf32>
    %184 = vector.extract_strided_slice %183 {offsets = [0, 0], sizes = [16, 384], strides = [1, 1]} : vector<16x512xf32> to vector<16x384xf32>
    %cst_68 = arith.constant 5.000000e-01 : f32
    %185 = vector.broadcast %cst_68 : f32 to vector<16x384xf32>
    %186 = arith.mulf %185, %184 : vector<16x384xf32>
    %187 = math.tanh %186 : vector<16x384xf32>
    %cst_69 = arith.constant 5.000000e-01 : f32
    %188 = vector.broadcast %cst_69 : f32 to vector<16x384xf32>
    %189 = arith.mulf %188, %187 : vector<16x384xf32>
    %cst_70 = arith.constant 5.000000e-01 : f32
    %190 = vector.broadcast %cst_70 : f32 to vector<16x384xf32>
    %191 = arith.addf %189, %190 : vector<16x384xf32>
    %192 = vector.extract_strided_slice %191 {offsets = [0, 0], sizes = [16, 128], strides = [1, 1]} : vector<16x384xf32> to vector<16x128xf32>
    %193 = vector.extract_strided_slice %191 {offsets = [0, 128], sizes = [16, 128], strides = [1, 1]} : vector<16x384xf32> to vector<16x128xf32>
    %194 = vector.extract_strided_slice %191 {offsets = [0, 256], sizes = [16, 128], strides = [1, 1]} : vector<16x384xf32> to vector<16x128xf32>
    %195 = vector.extract_strided_slice %183 {offsets = [0, 384], sizes = [16, 128], strides = [1, 1]} : vector<16x512xf32> to vector<16x128xf32>
    %196 = math.tanh %195 : vector<16x128xf32>
    %197 = arith.mulf %193, %154 : vector<16x128xf32>
    %198 = arith.mulf %192, %196 : vector<16x128xf32>
    %199 = arith.addf %197, %198 : vector<16x128xf32>
    %200 = math.tanh %199 : vector<16x128xf32>
    %201 = arith.mulf %194, %200 : vector<16x128xf32>
    %c4_i32 = arith.constant 4 : i32
    %202 = arith.index_cast %c4_i32 : i32 to index
    %c0_71 = arith.constant 0 : index
    %c0_72 = arith.constant 0 : index
    %203 = vector.load %arg10[%202, %c0_71, %c0_72] : memref<8x16x512xf32, #tpu.memory_space<vmem>>, vector<1x16x512xf32>
    %204 = vector.shape_cast %203 : vector<1x16x512xf32> to vector<16x512xf32>
    %cst_73 = arith.constant dense<0.000000e+00> : vector<16x512xf32>
    %205 = tpu.matmul %180, %3, %cst_73 {dimension_numbers = #tpu.dot_dimension_numbers<[1], [0], [0], [1], [0, 0, 1, 1], [], []>} : vector<16x128xf32>, vector<128x512xf32>, vector<16x512xf32> -> vector<16x512xf32>
    %206 = arith.addf %204, %205 : vector<16x512xf32>
    %cst_74 = arith.constant dense<0.000000e+00> : vector<16x512xf32>
    %207 = tpu.matmul %201, %5, %cst_74 {dimension_numbers = #tpu.dot_dimension_numbers<[1], [0], [0], [1], [0, 0, 1, 1], [], []>} : vector<16x128xf32>, vector<128x512xf32>, vector<16x512xf32> -> vector<16x512xf32>
    %208 = vector.extract_strided_slice %206 {offsets = [0, 0], sizes = [16, 384], strides = [1, 1]} : vector<16x512xf32> to vector<16x384xf32>
    %cst_75 = arith.constant 5.000000e-01 : f32
    %209 = vector.broadcast %cst_75 : f32 to vector<16x384xf32>
    %210 = arith.mulf %209, %208 : vector<16x384xf32>
    %211 = math.tanh %210 : vector<16x384xf32>
    %cst_76 = arith.constant 5.000000e-01 : f32
    %212 = vector.broadcast %cst_76 : f32 to vector<16x384xf32>
    %213 = arith.mulf %212, %211 : vector<16x384xf32>
    %cst_77 = arith.constant 5.000000e-01 : f32
    %214 = vector.broadcast %cst_77 : f32 to vector<16x384xf32>
    %215 = arith.addf %213, %214 : vector<16x384xf32>
    %216 = vector.extract_strided_slice %215 {offsets = [0, 0], sizes = [16, 128], strides = [1, 1]} : vector<16x384xf32> to vector<16x128xf32>
    %217 = vector.extract_strided_slice %215 {offsets = [0, 128], sizes = [16, 128], strides = [1, 1]} : vector<16x384xf32> to vector<16x128xf32>
    %218 = vector.extract_strided_slice %215 {offsets = [0, 256], sizes = [16, 128], strides = [1, 1]} : vector<16x384xf32> to vector<16x128xf32>
    %219 = vector.extract_strided_slice %206 {offsets = [0, 384], sizes = [16, 128], strides = [1, 1]} : vector<16x512xf32> to vector<16x128xf32>
    %220 = math.tanh %219 : vector<16x128xf32>
    %221 = arith.mulf %217, %178 : vector<16x128xf32>
    %222 = arith.mulf %216, %220 : vector<16x128xf32>
    %223 = arith.addf %221, %222 : vector<16x128xf32>
    %224 = math.tanh %223 : vector<16x128xf32>
    %225 = arith.mulf %218, %224 : vector<16x128xf32>
    %cst_78 = arith.constant dense<0.000000e+00> : vector<16x512xf32>
    %226 = tpu.matmul %225, %4, %cst_78 {dimension_numbers = #tpu.dot_dimension_numbers<[1], [0], [0], [1], [0, 0, 1, 1], [], []>} : vector<16x128xf32>, vector<128x512xf32>, vector<16x512xf32> -> vector<16x512xf32>
    %227 = arith.addf %207, %226 : vector<16x512xf32>
    %228 = arith.addf %227, %8 : vector<16x512xf32>
    %229 = vector.extract_strided_slice %228 {offsets = [0, 0], sizes = [16, 384], strides = [1, 1]} : vector<16x512xf32> to vector<16x384xf32>
    %cst_79 = arith.constant 5.000000e-01 : f32
    %230 = vector.broadcast %cst_79 : f32 to vector<16x384xf32>
    %231 = arith.mulf %230, %229 : vector<16x384xf32>
    %232 = math.tanh %231 : vector<16x384xf32>
    %cst_80 = arith.constant 5.000000e-01 : f32
    %233 = vector.broadcast %cst_80 : f32 to vector<16x384xf32>
    %234 = arith.mulf %233, %232 : vector<16x384xf32>
    %cst_81 = arith.constant 5.000000e-01 : f32
    %235 = vector.broadcast %cst_81 : f32 to vector<16x384xf32>
    %236 = arith.addf %234, %235 : vector<16x384xf32>
    %237 = vector.extract_strided_slice %236 {offsets = [0, 0], sizes = [16, 128], strides = [1, 1]} : vector<16x384xf32> to vector<16x128xf32>
    %238 = vector.extract_strided_slice %236 {offsets = [0, 128], sizes = [16, 128], strides = [1, 1]} : vector<16x384xf32> to vector<16x128xf32>
    %239 = vector.extract_strided_slice %236 {offsets = [0, 256], sizes = [16, 128], strides = [1, 1]} : vector<16x384xf32> to vector<16x128xf32>
    %240 = vector.extract_strided_slice %228 {offsets = [0, 384], sizes = [16, 128], strides = [1, 1]} : vector<16x512xf32> to vector<16x128xf32>
    %241 = math.tanh %240 : vector<16x128xf32>
    %242 = arith.mulf %238, %199 : vector<16x128xf32>
    %243 = arith.mulf %237, %241 : vector<16x128xf32>
    %244 = arith.addf %242, %243 : vector<16x128xf32>
    %245 = math.tanh %244 : vector<16x128xf32>
    %246 = arith.mulf %239, %245 : vector<16x128xf32>
    %c5_i32 = arith.constant 5 : i32
    %247 = arith.index_cast %c5_i32 : i32 to index
    %c0_82 = arith.constant 0 : index
    %c0_83 = arith.constant 0 : index
    %248 = vector.load %arg10[%247, %c0_82, %c0_83] : memref<8x16x512xf32, #tpu.memory_space<vmem>>, vector<1x16x512xf32>
    %249 = vector.shape_cast %248 : vector<1x16x512xf32> to vector<16x512xf32>
    %cst_84 = arith.constant dense<0.000000e+00> : vector<16x512xf32>
    %250 = tpu.matmul %225, %3, %cst_84 {dimension_numbers = #tpu.dot_dimension_numbers<[1], [0], [0], [1], [0, 0, 1, 1], [], []>} : vector<16x128xf32>, vector<128x512xf32>, vector<16x512xf32> -> vector<16x512xf32>
    %251 = arith.addf %249, %250 : vector<16x512xf32>
    %cst_85 = arith.constant dense<0.000000e+00> : vector<16x512xf32>
    %252 = tpu.matmul %246, %5, %cst_85 {dimension_numbers = #tpu.dot_dimension_numbers<[1], [0], [0], [1], [0, 0, 1, 1], [], []>} : vector<16x128xf32>, vector<128x512xf32>, vector<16x512xf32> -> vector<16x512xf32>
    %253 = vector.extract_strided_slice %251 {offsets = [0, 0], sizes = [16, 384], strides = [1, 1]} : vector<16x512xf32> to vector<16x384xf32>
    %cst_86 = arith.constant 5.000000e-01 : f32
    %254 = vector.broadcast %cst_86 : f32 to vector<16x384xf32>
    %255 = arith.mulf %254, %253 : vector<16x384xf32>
    %256 = math.tanh %255 : vector<16x384xf32>
    %cst_87 = arith.constant 5.000000e-01 : f32
    %257 = vector.broadcast %cst_87 : f32 to vector<16x384xf32>
    %258 = arith.mulf %257, %256 : vector<16x384xf32>
    %cst_88 = arith.constant 5.000000e-01 : f32
    %259 = vector.broadcast %cst_88 : f32 to vector<16x384xf32>
    %260 = arith.addf %258, %259 : vector<16x384xf32>
    %261 = vector.extract_strided_slice %260 {offsets = [0, 0], sizes = [16, 128], strides = [1, 1]} : vector<16x384xf32> to vector<16x128xf32>
    %262 = vector.extract_strided_slice %260 {offsets = [0, 128], sizes = [16, 128], strides = [1, 1]} : vector<16x384xf32> to vector<16x128xf32>
    %263 = vector.extract_strided_slice %260 {offsets = [0, 256], sizes = [16, 128], strides = [1, 1]} : vector<16x384xf32> to vector<16x128xf32>
    %264 = vector.extract_strided_slice %251 {offsets = [0, 384], sizes = [16, 128], strides = [1, 1]} : vector<16x512xf32> to vector<16x128xf32>
    %265 = math.tanh %264 : vector<16x128xf32>
    %266 = arith.mulf %262, %223 : vector<16x128xf32>
    %267 = arith.mulf %261, %265 : vector<16x128xf32>
    %268 = arith.addf %266, %267 : vector<16x128xf32>
    %269 = math.tanh %268 : vector<16x128xf32>
    %270 = arith.mulf %263, %269 : vector<16x128xf32>
    %cst_89 = arith.constant dense<0.000000e+00> : vector<16x512xf32>
    %271 = tpu.matmul %270, %4, %cst_89 {dimension_numbers = #tpu.dot_dimension_numbers<[1], [0], [0], [1], [0, 0, 1, 1], [], []>} : vector<16x128xf32>, vector<128x512xf32>, vector<16x512xf32> -> vector<16x512xf32>
    %272 = arith.addf %252, %271 : vector<16x512xf32>
    %273 = arith.addf %272, %8 : vector<16x512xf32>
    %274 = vector.extract_strided_slice %273 {offsets = [0, 0], sizes = [16, 384], strides = [1, 1]} : vector<16x512xf32> to vector<16x384xf32>
    %cst_90 = arith.constant 5.000000e-01 : f32
    %275 = vector.broadcast %cst_90 : f32 to vector<16x384xf32>
    %276 = arith.mulf %275, %274 : vector<16x384xf32>
    %277 = math.tanh %276 : vector<16x384xf32>
    %cst_91 = arith.constant 5.000000e-01 : f32
    %278 = vector.broadcast %cst_91 : f32 to vector<16x384xf32>
    %279 = arith.mulf %278, %277 : vector<16x384xf32>
    %cst_92 = arith.constant 5.000000e-01 : f32
    %280 = vector.broadcast %cst_92 : f32 to vector<16x384xf32>
    %281 = arith.addf %279, %280 : vector<16x384xf32>
    %282 = vector.extract_strided_slice %281 {offsets = [0, 0], sizes = [16, 128], strides = [1, 1]} : vector<16x384xf32> to vector<16x128xf32>
    %283 = vector.extract_strided_slice %281 {offsets = [0, 128], sizes = [16, 128], strides = [1, 1]} : vector<16x384xf32> to vector<16x128xf32>
    %284 = vector.extract_strided_slice %281 {offsets = [0, 256], sizes = [16, 128], strides = [1, 1]} : vector<16x384xf32> to vector<16x128xf32>
    %285 = vector.extract_strided_slice %273 {offsets = [0, 384], sizes = [16, 128], strides = [1, 1]} : vector<16x512xf32> to vector<16x128xf32>
    %286 = math.tanh %285 : vector<16x128xf32>
    %287 = arith.mulf %283, %244 : vector<16x128xf32>
    %288 = arith.mulf %282, %286 : vector<16x128xf32>
    %289 = arith.addf %287, %288 : vector<16x128xf32>
    %290 = math.tanh %289 : vector<16x128xf32>
    %291 = arith.mulf %284, %290 : vector<16x128xf32>
    %c6_i32 = arith.constant 6 : i32
    %292 = arith.index_cast %c6_i32 : i32 to index
    %c0_93 = arith.constant 0 : index
    %c0_94 = arith.constant 0 : index
    %293 = vector.load %arg10[%292, %c0_93, %c0_94] : memref<8x16x512xf32, #tpu.memory_space<vmem>>, vector<1x16x512xf32>
    %294 = vector.shape_cast %293 : vector<1x16x512xf32> to vector<16x512xf32>
    %cst_95 = arith.constant dense<0.000000e+00> : vector<16x512xf32>
    %295 = tpu.matmul %270, %3, %cst_95 {dimension_numbers = #tpu.dot_dimension_numbers<[1], [0], [0], [1], [0, 0, 1, 1], [], []>} : vector<16x128xf32>, vector<128x512xf32>, vector<16x512xf32> -> vector<16x512xf32>
    %296 = arith.addf %294, %295 : vector<16x512xf32>
    %cst_96 = arith.constant dense<0.000000e+00> : vector<16x512xf32>
    %297 = tpu.matmul %291, %5, %cst_96 {dimension_numbers = #tpu.dot_dimension_numbers<[1], [0], [0], [1], [0, 0, 1, 1], [], []>} : vector<16x128xf32>, vector<128x512xf32>, vector<16x512xf32> -> vector<16x512xf32>
    %298 = vector.extract_strided_slice %296 {offsets = [0, 0], sizes = [16, 384], strides = [1, 1]} : vector<16x512xf32> to vector<16x384xf32>
    %cst_97 = arith.constant 5.000000e-01 : f32
    %299 = vector.broadcast %cst_97 : f32 to vector<16x384xf32>
    %300 = arith.mulf %299, %298 : vector<16x384xf32>
    %301 = math.tanh %300 : vector<16x384xf32>
    %cst_98 = arith.constant 5.000000e-01 : f32
    %302 = vector.broadcast %cst_98 : f32 to vector<16x384xf32>
    %303 = arith.mulf %302, %301 : vector<16x384xf32>
    %cst_99 = arith.constant 5.000000e-01 : f32
    %304 = vector.broadcast %cst_99 : f32 to vector<16x384xf32>
    %305 = arith.addf %303, %304 : vector<16x384xf32>
    %306 = vector.extract_strided_slice %305 {offsets = [0, 0], sizes = [16, 128], strides = [1, 1]} : vector<16x384xf32> to vector<16x128xf32>
    %307 = vector.extract_strided_slice %305 {offsets = [0, 128], sizes = [16, 128], strides = [1, 1]} : vector<16x384xf32> to vector<16x128xf32>
    %308 = vector.extract_strided_slice %305 {offsets = [0, 256], sizes = [16, 128], strides = [1, 1]} : vector<16x384xf32> to vector<16x128xf32>
    %309 = vector.extract_strided_slice %296 {offsets = [0, 384], sizes = [16, 128], strides = [1, 1]} : vector<16x512xf32> to vector<16x128xf32>
    %310 = math.tanh %309 : vector<16x128xf32>
    %311 = arith.mulf %307, %268 : vector<16x128xf32>
    %312 = arith.mulf %306, %310 : vector<16x128xf32>
    %313 = arith.addf %311, %312 : vector<16x128xf32>
    %314 = math.tanh %313 : vector<16x128xf32>
    %315 = arith.mulf %308, %314 : vector<16x128xf32>
    %cst_100 = arith.constant dense<0.000000e+00> : vector<16x512xf32>
    %316 = tpu.matmul %315, %4, %cst_100 {dimension_numbers = #tpu.dot_dimension_numbers<[1], [0], [0], [1], [0, 0, 1, 1], [], []>} : vector<16x128xf32>, vector<128x512xf32>, vector<16x512xf32> -> vector<16x512xf32>
    %317 = arith.addf %297, %316 : vector<16x512xf32>
    %318 = arith.addf %317, %8 : vector<16x512xf32>
    %319 = vector.extract_strided_slice %318 {offsets = [0, 0], sizes = [16, 384], strides = [1, 1]} : vector<16x512xf32> to vector<16x384xf32>
    %cst_101 = arith.constant 5.000000e-01 : f32
    %320 = vector.broadcast %cst_101 : f32 to vector<16x384xf32>
    %321 = arith.mulf %320, %319 : vector<16x384xf32>
    %322 = math.tanh %321 : vector<16x384xf32>
    %cst_102 = arith.constant 5.000000e-01 : f32
    %323 = vector.broadcast %cst_102 : f32 to vector<16x384xf32>
    %324 = arith.mulf %323, %322 : vector<16x384xf32>
    %cst_103 = arith.constant 5.000000e-01 : f32
    %325 = vector.broadcast %cst_103 : f32 to vector<16x384xf32>
    %326 = arith.addf %324, %325 : vector<16x384xf32>
    %327 = vector.extract_strided_slice %326 {offsets = [0, 0], sizes = [16, 128], strides = [1, 1]} : vector<16x384xf32> to vector<16x128xf32>
    %328 = vector.extract_strided_slice %326 {offsets = [0, 128], sizes = [16, 128], strides = [1, 1]} : vector<16x384xf32> to vector<16x128xf32>
    %329 = vector.extract_strided_slice %326 {offsets = [0, 256], sizes = [16, 128], strides = [1, 1]} : vector<16x384xf32> to vector<16x128xf32>
    %330 = vector.extract_strided_slice %318 {offsets = [0, 384], sizes = [16, 128], strides = [1, 1]} : vector<16x512xf32> to vector<16x128xf32>
    %331 = math.tanh %330 : vector<16x128xf32>
    %332 = arith.mulf %328, %289 : vector<16x128xf32>
    %333 = arith.mulf %327, %331 : vector<16x128xf32>
    %334 = arith.addf %332, %333 : vector<16x128xf32>
    %335 = math.tanh %334 : vector<16x128xf32>
    %336 = arith.mulf %329, %335 : vector<16x128xf32>
    %c7_i32 = arith.constant 7 : i32
    %337 = arith.index_cast %c7_i32 : i32 to index
    %c0_104 = arith.constant 0 : index
    %c0_105 = arith.constant 0 : index
    %338 = vector.load %arg10[%337, %c0_104, %c0_105] : memref<8x16x512xf32, #tpu.memory_space<vmem>>, vector<1x16x512xf32>
    %339 = vector.shape_cast %338 : vector<1x16x512xf32> to vector<16x512xf32>
    %cst_106 = arith.constant dense<0.000000e+00> : vector<16x512xf32>
    %340 = tpu.matmul %315, %3, %cst_106 {dimension_numbers = #tpu.dot_dimension_numbers<[1], [0], [0], [1], [0, 0, 1, 1], [], []>} : vector<16x128xf32>, vector<128x512xf32>, vector<16x512xf32> -> vector<16x512xf32>
    %341 = arith.addf %339, %340 : vector<16x512xf32>
    %cst_107 = arith.constant dense<0.000000e+00> : vector<16x512xf32>
    %342 = tpu.matmul %336, %5, %cst_107 {dimension_numbers = #tpu.dot_dimension_numbers<[1], [0], [0], [1], [0, 0, 1, 1], [], []>} : vector<16x128xf32>, vector<128x512xf32>, vector<16x512xf32> -> vector<16x512xf32>
    %343 = vector.extract_strided_slice %341 {offsets = [0, 0], sizes = [16, 384], strides = [1, 1]} : vector<16x512xf32> to vector<16x384xf32>
    %cst_108 = arith.constant 5.000000e-01 : f32
    %344 = vector.broadcast %cst_108 : f32 to vector<16x384xf32>
    %345 = arith.mulf %344, %343 : vector<16x384xf32>
    %346 = math.tanh %345 : vector<16x384xf32>
    %cst_109 = arith.constant 5.000000e-01 : f32
    %347 = vector.broadcast %cst_109 : f32 to vector<16x384xf32>
    %348 = arith.mulf %347, %346 : vector<16x384xf32>
    %cst_110 = arith.constant 5.000000e-01 : f32
    %349 = vector.broadcast %cst_110 : f32 to vector<16x384xf32>
    %350 = arith.addf %348, %349 : vector<16x384xf32>
    %351 = vector.extract_strided_slice %350 {offsets = [0, 0], sizes = [16, 128], strides = [1, 1]} : vector<16x384xf32> to vector<16x128xf32>
    %352 = vector.extract_strided_slice %350 {offsets = [0, 128], sizes = [16, 128], strides = [1, 1]} : vector<16x384xf32> to vector<16x128xf32>
    %353 = vector.extract_strided_slice %350 {offsets = [0, 256], sizes = [16, 128], strides = [1, 1]} : vector<16x384xf32> to vector<16x128xf32>
    %354 = vector.extract_strided_slice %341 {offsets = [0, 384], sizes = [16, 128], strides = [1, 1]} : vector<16x512xf32> to vector<16x128xf32>
    %355 = math.tanh %354 : vector<16x128xf32>
    %356 = arith.mulf %352, %313 : vector<16x128xf32>
    %357 = arith.mulf %351, %355 : vector<16x128xf32>
    %358 = arith.addf %356, %357 : vector<16x128xf32>
    %359 = math.tanh %358 : vector<16x128xf32>
    %360 = arith.mulf %353, %359 : vector<16x128xf32>
    %cst_111 = arith.constant dense<0.000000e+00> : vector<16x512xf32>
    %361 = tpu.matmul %360, %4, %cst_111 {dimension_numbers = #tpu.dot_dimension_numbers<[1], [0], [0], [1], [0, 0, 1, 1], [], []>} : vector<16x128xf32>, vector<128x512xf32>, vector<16x512xf32> -> vector<16x512xf32>
    %362 = arith.addf %342, %361 : vector<16x512xf32>
    %363 = arith.addf %362, %8 : vector<16x512xf32>
    %364 = vector.extract_strided_slice %363 {offsets = [0, 0], sizes = [16, 384], strides = [1, 1]} : vector<16x512xf32> to vector<16x384xf32>
    %cst_112 = arith.constant 5.000000e-01 : f32
    %365 = vector.broadcast %cst_112 : f32 to vector<16x384xf32>
    %366 = arith.mulf %365, %364 : vector<16x384xf32>
    %367 = math.tanh %366 : vector<16x384xf32>
    %cst_113 = arith.constant 5.000000e-01 : f32
    %368 = vector.broadcast %cst_113 : f32 to vector<16x384xf32>
    %369 = arith.mulf %368, %367 : vector<16x384xf32>
    %cst_114 = arith.constant 5.000000e-01 : f32
    %370 = vector.broadcast %cst_114 : f32 to vector<16x384xf32>
    %371 = arith.addf %369, %370 : vector<16x384xf32>
    %372 = vector.extract_strided_slice %371 {offsets = [0, 0], sizes = [16, 128], strides = [1, 1]} : vector<16x384xf32> to vector<16x128xf32>
    %373 = vector.extract_strided_slice %371 {offsets = [0, 128], sizes = [16, 128], strides = [1, 1]} : vector<16x384xf32> to vector<16x128xf32>
    %374 = vector.extract_strided_slice %371 {offsets = [0, 256], sizes = [16, 128], strides = [1, 1]} : vector<16x384xf32> to vector<16x128xf32>
    %375 = vector.extract_strided_slice %363 {offsets = [0, 384], sizes = [16, 128], strides = [1, 1]} : vector<16x512xf32> to vector<16x128xf32>
    %376 = math.tanh %375 : vector<16x128xf32>
    %377 = arith.mulf %373, %334 : vector<16x128xf32>
    %378 = arith.mulf %372, %376 : vector<16x128xf32>
    %379 = arith.addf %377, %378 : vector<16x128xf32>
    %380 = math.tanh %379 : vector<16x128xf32>
    %381 = arith.mulf %374, %380 : vector<16x128xf32>
    %c8_i32 = arith.constant 8 : i32
    %c0_115 = arith.constant 0 : index
    %c0_116 = arith.constant 0 : index
    %382 = vector.load %arg11[%c0_115, %c0_116] : memref<16x128xf32, #tpu.memory_space<vmem>>, vector<16x128xf32>
    tpu.vector_store %arg11[%c0_115, %c0_116], %360 {strides = array<i32>} : memref<16x128xf32, #tpu.memory_space<vmem>>, vector<16x128xf32>,
    %c0_117 = arith.constant 0 : index
    %c0_118 = arith.constant 0 : index
    %383 = vector.load %arg12[%c0_117, %c0_118] : memref<16x128xf32, #tpu.memory_space<vmem>>, vector<16x128xf32>
    tpu.vector_store %arg12[%c0_117, %c0_118], %358 {strides = array<i32>} : memref<16x128xf32, #tpu.memory_space<vmem>>, vector<16x128xf32>,
    %c0_119 = arith.constant 0 : index
    %c0_120 = arith.constant 0 : index
    %384 = vector.load %arg13[%c0_119, %c0_120] : memref<16x128xf32, #tpu.memory_space<vmem>>, vector<16x128xf32>
    tpu.vector_store %arg13[%c0_119, %c0_120], %381 {strides = array<i32>} : memref<16x128xf32, #tpu.memory_space<vmem>>, vector<16x128xf32>,
    %c0_121 = arith.constant 0 : index
    %c0_122 = arith.constant 0 : index
    %385 = vector.load %arg14[%c0_121, %c0_122] : memref<16x128xf32, #tpu.memory_space<vmem>>, vector<16x128xf32>
    tpu.vector_store %arg14[%c0_121, %c0_122], %379 {strides = array<i32>} : memref<16x128xf32, #tpu.memory_space<vmem>>, vector<16x128xf32>,
    %c0_i32_123 = arith.constant 0 : i32
    %386 = arith.cmpi eq, %arg1, %c0_i32_123 : i32
    %387 = arith.extui %386 : i1 to i32
    %c0_i32_124 = arith.constant 0 : i32
    %388 = arith.cmpi ne, %387, %c0_i32_124 : i32
    scf.if %388 {
      %c0_125 = arith.constant 0 : index
      %c0_126 = arith.constant 0 : index
      %389 = vector.load %arg9[%c0_125, %c0_126] : memref<16x128xf32, #tpu.memory_space<vmem>>, vector<16x128xf32>
      tpu.vector_store %arg9[%c0_125, %c0_126], %381 {strides = array<i32>} : memref<16x128xf32, #tpu.memory_space<vmem>>, vector<16x128xf32>,
    } else {
    }
    return
  }
  func.func @transform_0(%arg0: i32, %arg1: i32) -> (i32, i32, i32) {
    %c0_i32 = arith.constant 0 : i32
    %c0_i32_0 = arith.constant 0 : i32
    return %arg1, %arg0, %c0_i32 : i32, i32, i32
  }
  func.func @transform_1(%arg0: i32, %arg1: i32) -> (i32, i32) {
    %c0_i32 = arith.constant 0 : i32
    %c0_i32_0 = arith.constant 0 : i32
    %c0_i32_1 = arith.constant 0 : i32
    return %c0_i32, %c0_i32_0 : i32, i32
  }
  func.func @transform_2(%arg0: i32, %arg1: i32) -> (i32, i32) {
    %c0_i32 = arith.constant 0 : i32
    %c0_i32_0 = arith.constant 0 : i32
    %c0_i32_1 = arith.constant 0 : i32
    return %c0_i32, %c0_i32_0 : i32, i32
  }
  func.func @transform_3(%arg0: i32, %arg1: i32) -> (i32, i32) {
    %c0_i32 = arith.constant 0 : i32
    %c0_i32_0 = arith.constant 0 : i32
    %c0_i32_1 = arith.constant 0 : i32
    return %c0_i32, %c0_i32_0 : i32, i32
  }
  func.func @transform_4(%arg0: i32, %arg1: i32) -> (i32, i32) {
    %c0_i32 = arith.constant 0 : i32
    %c0_i32_0 = arith.constant 0 : i32
    %c0_i32_1 = arith.constant 0 : i32
    return %c0_i32, %c0_i32_0 : i32, i32
  }
  func.func @transform_5(%arg0: i32, %arg1: i32) -> (i32, i32) {
    %c0_i32 = arith.constant 0 : i32
    %c0_i32_0 = arith.constant 0 : i32
    %c0_i32_1 = arith.constant 0 : i32
    return %c0_i32, %c0_i32_0 : i32, i32
  }
  func.func @transform_6(%arg0: i32, %arg1: i32) -> (i32, i32) {
    %c0_i32 = arith.constant 0 : i32
    %c0_i32_0 = arith.constant 0 : i32
    %c0_i32_1 = arith.constant 0 : i32
    return %c0_i32, %c0_i32_0 : i32, i32
  }
  func.func @transform_7(%arg0: i32, %arg1: i32) -> (i32, i32) {
    %c0_i32 = arith.constant 0 : i32
    %c0_i32_0 = arith.constant 0 : i32
    return %arg0, %c0_i32 : i32, i32
  }
}

</mosaic_0001>

<llo_original>
// kernel: tpu_custom_call.1
$region0: #{tpu_custom_call.1}
  #allocation0 [shape = 'u32[]', space=smem, size = 0x4, offset = 0x4, fixed_abs, tag = 'smem constant byte address 0x4 - core index']
  #allocation1 [shape = 'u32[72,128]{1,0:T(1,128)}', space=vmem, size = 0x9000, scoped, tag = 'internal scratch']
  #allocation2 [shape = 'f32[8,16,512]{2,1,0:T(8,128)}', space=vmem, size = 0x40000, scoped, tag = 'scratch operand']
  #allocation3 [shape = 'f32[16,128]{1,0:T(8,128)}', space=vmem, size = 0x2000, scoped, tag = 'scratch operand']
  #allocation4 [shape = 'f32[16,128]{1,0:T(8,128)}', space=vmem, size = 0x2000, scoped, tag = 'scratch operand']
  #allocation5 [shape = 'f32[16,128]{1,0:T(8,128)}', space=vmem, size = 0x2000, scoped, tag = 'scratch operand']
  #allocation6 [shape = 'f32[16,128]{1,0:T(8,128)}', space=vmem, size = 0x2000, scoped, tag = 'scratch operand']
  %s0 = inlined_call_operand.hbm [shape: f32[8,16,128], index: 0, kind: input, shape index: {}]
  %s1 = inlined_call_operand.hbm [shape: f32[128,512], index: 1, kind: input, shape index: {}]
  %s2 = inlined_call_operand.hbm [shape: f32[128,512], index: 2, kind: input, shape index: {}]
  %s3 = inlined_call_operand.hbm [shape: f32[1,512], index: 3, kind: input, shape index: {}]
  %s4 = inlined_call_operand.hbm [shape: f32[128,512], index: 4, kind: input, shape index: {}]
  %s5 = inlined_call_operand.hbm [shape: f32[128,512], index: 5, kind: input, shape index: {}]
  %s6 = inlined_call_operand.vmem [shape: f32[1,512], index: 6, kind: input, shape index: {}]
  %s7 = inlined_call_operand.hbm [shape: f32[16,128], index: 7, kind: output, shape index: {}]
  %s8 = sld [smem:[#allocation0]]
  $region70: #{tpu_custom_call.1} parent=0
    _
  %s10 = ssub.s32 1, %s8
  %s11 = scalar_select 0, %s10, %s8
  $region1: #{tpu_custom_call.1} parent=0
    #allocation7 [shape = 'u8[65536]{0}', space=vmem, size = 0x10000, scoped, tag = 'input window, operand 0, single buffered']
    #allocation8 [shape = 's32[1]{0}', space=sflag, size = 0x4, scoped, tag = 'scoped memory for tpu_custom_call.1']
    #allocation9 [shape = 's32[1]{0}', space=sflag, size = 0x4, scoped, tag = 'scoped memory for tpu_custom_call.1']
    #allocation10 [shape = 'u8[262144]{0}', space=vmem, size = 0x40000, scoped, tag = 'input window, operand 1, single buffered']
    #allocation11 [shape = 's32[1]{0}', space=sflag, size = 0x4, scoped, tag = 'scoped memory for tpu_custom_call.1']
    #allocation12 [shape = 'u8[262144]{0}', space=vmem, size = 0x40000, scoped, tag = 'input window, operand 2, single buffered']
    #allocation13 [shape = 'u8[2048]{0}', space=vmem, size = 0x800, scoped, tag = 'input window, operand 3, single buffered']
    #allocation14 [shape = 's32[1]{0}', space=sflag, size = 0x4, scoped, tag = 'scoped memory for tpu_custom_call.1']
    #allocation15 [shape = 'u8[262144]{0}', space=vmem, size = 0x40000, scoped, tag = 'input window, operand 4, single buffered']
    #allocation16 [shape = 'u8[262144]{0}', space=vmem, size = 0x40000, scoped, tag = 'input window, operand 5, single buffered']
    #allocation17 [shape = 's32[1]{0}', space=sflag, size = 0x4, scoped, tag = 'scoped memory for tpu_custom_call.1']
    #allocation18 [shape = 'u8[8192]{0}', space=vmem, size = 0x2000, scoped, tag = 'output window, operand 0, single buffered']
    %12 = vsyncpa [#allocation8], 0
    %13 = vsyncpa [#allocation11], 0
    %14 = vsyncpa [#allocation14], 0
    %15 = vsyncpa [#allocation17], 0
    %16 = vsyncpa [#allocation9], 0
    // Predicated region
    $region2: #{tpu_custom_call.1} parent=1 // pred_check
      _
    $region3: #{tpu_custom_call.1} parent=1 // pred_check_branch
      %18 = sbr.rel (0) target = $region5
    $region4: #{tpu_custom_call.1} parent=1 // pred_region
      %20 = vsyncadd [#allocation8], 0
      %s21 = sshll.u32 %s0, 4
      %s22 = int_to_ptr.hbm [resolvable:$true] %s21
      %s23 = sshll.u32 [#allocation7], 4
      %s24 = int_to_ptr.vmem [resolvable:$true] %s23
      %29 = dma.hbm_to_vmem [thread:$0]  %s22, 2048, %s24, [#allocation8], 128, 128, 8
    $region5: #{tpu_custom_call.1} parent=1 // pred_fallthru
      _
    // Predicated region
    $region6: #{tpu_custom_call.1} parent=1 // pred_check
      _
    $region7: #{tpu_custom_call.1} parent=1 // pred_check_branch
      %31 = sbr.rel (0) target = $region9
    $region8: #{tpu_custom_call.1} parent=1 // pred_region
      %33 = vsyncadd [#allocation11], 0
      %s34 = sshll.u32 %s1, 4
      %s35 = int_to_ptr.hbm [resolvable:$true] %s34
      %s36 = sshll.u32 [#allocation10], 4
      %s37 = int_to_ptr.vmem [resolvable:$true] %s36
      %42 = dma.hbm_to_vmem [thread:$0]  %s35, 8192, %s37, [#allocation11], 512, 512, 32
    $region9: #{tpu_custom_call.1} parent=1 // pred_fallthru
      _
    // Predicated region
    $region10: #{tpu_custom_call.1} parent=1 // pred_check
      _
    $region11: #{tpu_custom_call.1} parent=1 // pred_check_branch
      %44 = sbr.rel (0) target = $region13
    $region12: #{tpu_custom_call.1} parent=1 // pred_region
      %46 = vsyncadd [#allocation11], 0
      %s47 = sshll.u32 %s2, 4
      %s48 = int_to_ptr.hbm [resolvable:$true] %s47
      %s49 = sshll.u32 [#allocation12], 4
      %s50 = int_to_ptr.vmem [resolvable:$true] %s49
      %55 = dma.hbm_to_vmem [thread:$0]  %s48, 8192, %s50, [#allocation11], 512, 512, 32
    $region13: #{tpu_custom_call.1} parent=1 // pred_fallthru
      _
    // Predicated region
    $region14: #{tpu_custom_call.1} parent=1 // pred_check
      _
    $region15: #{tpu_custom_call.1} parent=1 // pred_check_branch
      %57 = sbr.rel (0) target = $region17
    $region16: #{tpu_custom_call.1} parent=1 // pred_region
      %59 = vsyncadd [#allocation14], 0
      %s61 = sshll.u32 %s3, 4
      %s62 = int_to_ptr.hbm [resolvable:$true] %s61
      %s63 = sshll.u32 [#allocation13], 4
      %s64 = int_to_ptr.vmem [resolvable:$true] %s63
      %66 = dma.hbm_to_vmem [thread:$0]  %s62, 64, %s64, [#allocation14]
    $region17: #{tpu_custom_call.1} parent=1 // pred_fallthru
      _
    // Predicated region
    $region18: #{tpu_custom_call.1} parent=1 // pred_check
      _
    $region19: #{tpu_custom_call.1} parent=1 // pred_check_branch
      %68 = sbr.rel (0) target = $region21
    $region20: #{tpu_custom_call.1} parent=1 // pred_region
      %70 = vsyncadd [#allocation14], 0
      %s71 = sshll.u32 %s4, 4
      %s72 = int_to_ptr.hbm [resolvable:$true] %s71
      %s73 = sshll.u32 [#allocation15], 4
      %s74 = int_to_ptr.vmem [resolvable:$true] %s73
      %79 = dma.hbm_to_vmem [thread:$0]  %s72, 8192, %s74, [#allocation14], 512, 512, 32
    $region21: #{tpu_custom_call.1} parent=1 // pred_fallthru
      _
    // Predicated region
    $region22: #{tpu_custom_call.1} parent=1 // pred_check
      _
    $region23: #{tpu_custom_call.1} parent=1 // pred_check_branch
      %81 = sbr.rel (0) target = $region25
    $region24: #{tpu_custom_call.1} parent=1 // pred_region
      %83 = vsyncadd [#allocation17], 0
      %s84 = sshll.u32 %s5, 4
      %s85 = int_to_ptr.hbm [resolvable:$true] %s84
      %s86 = sshll.u32 [#allocation16], 4
      %s87 = int_to_ptr.vmem [resolvable:$true] %s86
      %92 = dma.hbm_to_vmem [thread:$0]  %s85, 8192, %s87, [#allocation17], 512, 512, 32
    $region25: #{tpu_custom_call.1} parent=1 // pred_fallthru
      _
    // Predicated region
    $region26: #{tpu_custom_call.1} parent=1 // pred_check
      _
    $region27: #{tpu_custom_call.1} parent=1 // pred_check_branch
      %94 = sbr.rel (0) target = $region29
    $region28: #{tpu_custom_call.1} parent=1 // pred_region
      _
    $region29: #{tpu_custom_call.1} parent=1 // pred_fallthru
      _
    // Predicated region
    $region30: #{tpu_custom_call.1} parent=1 // pred_check
      _
    $region31: #{tpu_custom_call.1} parent=1 // pred_check_branch
      %96 = sbr.rel (0) target = $region33
    $region32: #{tpu_custom_call.1} parent=1 // pred_region
      %98 = dma.done [#allocation8], 2048
    $region33: #{tpu_custom_call.1} parent=1 // pred_fallthru
      _
    // Predicated region
    $region34: #{tpu_custom_call.1} parent=1 // pred_check
      _
    $region35: #{tpu_custom_call.1} parent=1 // pred_check_branch
      %100 = sbr.rel (0) target = $region37
    $region36: #{tpu_custom_call.1} parent=1 // pred_region
      %102 = dma.done [#allocation11], 8192
    $region37: #{tpu_custom_call.1} parent=1 // pred_fallthru
      _
    // Predicated region
    $region38: #{tpu_custom_call.1} parent=1 // pred_check
      _
    $region39: #{tpu_custom_call.1} parent=1 // pred_check_branch
      %104 = sbr.rel (0) target = $region41
    $region40: #{tpu_custom_call.1} parent=1 // pred_region
      %106 = dma.done [#allocation11], 8192
    $region41: #{tpu_custom_call.1} parent=1 // pred_fallthru
      _
    // Predicated region
    $region42: #{tpu_custom_call.1} parent=1 // pred_check
      _
    $region43: #{tpu_custom_call.1} parent=1 // pred_check_branch
      %108 = sbr.rel (0) target = $region45
    $region44: #{tpu_custom_call.1} parent=1 // pred_region
      %110 = dma.done [#allocation14], 64
    $region45: #{tpu_custom_call.1} parent=1 // pred_fallthru
      _
    // Predicated region
    $region46: #{tpu_custom_call.1} parent=1 // pred_check
      _
    $region47: #{tpu_custom_call.1} parent=1 // pred_check_branch
      %112 = sbr.rel (0) target = $region49
    $region48: #{tpu_custom_call.1} parent=1 // pred_region
      %114 = dma.done [#allocation14], 8192
    $region49: #{tpu_custom_call.1} parent=1 // pred_fallthru
      _
    // Predicated region
    $region50: #{tpu_custom_call.1} parent=1 // pred_check
      _
    $region51: #{tpu_custom_call.1} parent=1 // pred_check_branch
      %116 = sbr.rel (0) target = $region53
    $region52: #{tpu_custom_call.1} parent=1 // pred_region
      %118 = dma.done [#allocation17], 8192
    $region53: #{tpu_custom_call.1} parent=1 // pred_fallthru
      _
    %p119 = scmp.eq.s32.totalorder 0, 0
    // Predicated region
    $region54: #{tpu_custom_call.1} parent=1 // pred_check
      %p120 = pneg %p119
    $region55: #{tpu_custom_call.1} parent=1 // pred_check_branch
      %122 = sbr.rel (%p120) target = $region57
    $region56: #{tpu_custom_call.1} parent=1 // pred_region
      %123 = vst [vmem:[#allocation3] sm:$0xff] 0.0
      %124 = vst [vmem:[#allocation3 + $0x8] sm:$0xff] 0.0
      %125 = vst [vmem:[#allocation4] sm:$0xff] 0.0
      %126 = vst [vmem:[#allocation4 + $0x8] sm:$0xff] 0.0
      %127 = vst [vmem:[#allocation5] sm:$0xff] 0.0
      %128 = vst [vmem:[#allocation5 + $0x8] sm:$0xff] 0.0
      %129 = vst [vmem:[#allocation6] sm:$0xff] 0.0
      %130 = vst [vmem:[#allocation6 + $0x8] sm:$0xff] 0.0
    $region57: #{tpu_custom_call.1} parent=1 // pred_fallthru
      _
    %v131 = vld [vmem:[#allocation12] sm:$0xff]
    %v132 = vld [vmem:[#allocation12 + $0x8] sm:$0xff]
    %v133 = vld [vmem:[#allocation12 + $0x10] sm:$0xff]
    %v134 = vld [vmem:[#allocation12 + $0x18] sm:$0xff]
    %v135 = vld [vmem:[#allocation12 + $0x20] sm:$0xff]
    %v136 = vld [vmem:[#allocation12 + $0x28] sm:$0xff]
    %v137 = vld [vmem:[#allocation12 + $0x30] sm:$0xff]
    %v138 = vld [vmem:[#allocation12 + $0x38] sm:$0xff]
    %v139 = vld [vmem:[#allocation12 + $0x40] sm:$0xff]
    %v140 = vld [vmem:[#allocation12 + $0x48] sm:$0xff]
    %v141 = vld [vmem:[#allocation12 + $0x50] sm:$0xff]
    %v142 = vld [vmem:[#allocation12 + $0x58] sm:$0xff]
    %v143 = vld [vmem:[#allocation12 + $0x60] sm:$0xff]
    %v144 = vld [vmem:[#allocation12 + $0x68] sm:$0xff]
    %v145 = vld [vmem:[#allocation12 + $0x70] sm:$0xff]
    %v146 = vld [vmem:[#allocation12 + $0x78] sm:$0xff]
    %v147 = vld [vmem:[#allocation12 + $0x80] sm:$0xff]
    %v148 = vld [vmem:[#allocation12 + $0x88] sm:$0xff]
    %v149 = vld [vmem:[#allocation12 + $0x90] sm:$0xff]
    %v150 = vld [vmem:[#allocation12 + $0x98] sm:$0xff]
    %v151 = vld [vmem:[#allocation12 + $0xa0] sm:$0xff]
    %v152 = vld [vmem:[#allocation12 + $0xa8] sm:$0xff]
    %v153 = vld [vmem:[#allocation12 + $0xb0] sm:$0xff]
    %v154 = vld [vmem:[#allocation12 + $0xb8] sm:$0xff]
    %v155 = vld [vmem:[#allocation12 + $0xc0] sm:$0xff]
    %v156 = vld [vmem:[#allocation12 + $0xc8] sm:$0xff]
    %v157 = vld [vmem:[#allocation12 + $0xd0] sm:$0xff]
    %v158 = vld [vmem:[#allocation12 + $0xd8] sm:$0xff]
    %v159 = vld [vmem:[#allocation12 + $0xe0] sm:$0xff]
    %v160 = vld [vmem:[#allocation12 + $0xe8] sm:$0xff]
    %v161 = vld [vmem:[#allocation12 + $0xf0] sm:$0xff]
    %v162 = vld [vmem:[#allocation12 + $0xf8] sm:$0xff]
    %v163 = vld [vmem:[#allocation12 + $0x100] sm:$0xff]
    %v164 = vld [vmem:[#allocation12 + $0x108] sm:$0xff]
    %v165 = vld [vmem:[#allocation12 + $0x110] sm:$0xff]
    %v166 = vld [vmem:[#allocation12 + $0x118] sm:$0xff]
    %v167 = vld [vmem:[#allocation12 + $0x120] sm:$0xff]
    %v168 = vld [vmem:[#allocation12 + $0x128] sm:$0xff]
    %v169 = vld [vmem:[#allocation12 + $0x130] sm:$0xff]
    %v170 = vld [vmem:[#allocation12 + $0x138] sm:$0xff]
    %v171 = vld [vmem:[#allocation12 + $0x140] sm:$0xff]
    %v172 = vld [vmem:[#allocation12 + $0x148] sm:$0xff]
    %v173 = vld [vmem:[#allocation12 + $0x150] sm:$0xff]
    %v174 = vld [vmem:[#allocation12 + $0x158] sm:$0xff]
    %v175 = vld [vmem:[#allocation12 + $0x160] sm:$0xff]
    %v176 = vld [vmem:[#allocation12 + $0x168] sm:$0xff]
    %v177 = vld [vmem:[#allocation12 + $0x170] sm:$0xff]
    %v178 = vld [vmem:[#allocation12 + $0x178] sm:$0xff]
    %v179 = vld [vmem:[#allocation12 + $0x180] sm:$0xff]
    %v180 = vld [vmem:[#allocation12 + $0x188] sm:$0xff]
    %v181 = vld [vmem:[#allocation12 + $0x190] sm:$0xff]
    %v182 = vld [vmem:[#allocation12 + $0x198] sm:$0xff]
    %v183 = vld [vmem:[#allocation12 + $0x1a0] sm:$0xff]
    %v184 = vld [vmem:[#allocation12 + $0x1a8] sm:$0xff]
    %v185 = vld [vmem:[#allocation12 + $0x1b0] sm:$0xff]
    %v186 = vld [vmem:[#allocation12 + $0x1b8] sm:$0xff]
    %v187 = vld [vmem:[#allocation12 + $0x1c0] sm:$0xff]
    %v188 = vld [vmem:[#allocation12 + $0x1c8] sm:$0xff]
    %v189 = vld [vmem:[#allocation12 + $0x1d0] sm:$0xff]
    %v190 = vld [vmem:[#allocation12 + $0x1d8] sm:$0xff]
    %v191 = vld [vmem:[#allocation12 + $0x1e0] sm:$0xff]
    %v192 = vld [vmem:[#allocation12 + $0x1e8] sm:$0xff]
    %v193 = vld [vmem:[#allocation12 + $0x1f0] sm:$0xff]
    %v194 = vld [vmem:[#allocation12 + $0x1f8] sm:$0xff]
    %v195 = vld [vmem:[#allocation15] sm:$0xff]
    %v196 = vld [vmem:[#allocation15 + $0x8] sm:$0xff]
    %v197 = vld [vmem:[#allocation15 + $0x10] sm:$0xff]
    %v198 = vld [vmem:[#allocation15 + $0x18] sm:$0xff]
    %v199 = vld [vmem:[#allocation15 + $0x20] sm:$0xff]
    %v200 = vld [vmem:[#allocation15 + $0x28] sm:$0xff]
    %v201 = vld [vmem:[#allocation15 + $0x30] sm:$0xff]
    %v202 = vld [vmem:[#allocation15 + $0x38] sm:$0xff]
    %v203 = vld [vmem:[#allocation15 + $0x40] sm:$0xff]
    %v204 = vld [vmem:[#allocation15 + $0x48] sm:$0xff]
    %v205 = vld [vmem:[#allocation15 + $0x50] sm:$0xff]
    %v206 = vld [vmem:[#allocation15 + $0x58] sm:$0xff]
    %v207 = vld [vmem:[#allocation15 + $0x60] sm:$0xff]
    %v208 = vld [vmem:[#allocation15 + $0x68] sm:$0xff]
    %v209 = vld [vmem:[#allocation15 + $0x70] sm:$0xff]
    %v210 = vld [vmem:[#allocation15 + $0x78] sm:$0xff]
    %v211 = vld [vmem:[#allocation15 + $0x80] sm:$0xff]
    %v212 = vld [vmem:[#allocation15 + $0x88] sm:$0xff]
    %v213 = vld [vmem:[#allocation15 + $0x90] sm:$0xff]
    %v214 = vld [vmem:[#allocation15 + $0x98] sm:$0xff]
    %v215 = vld [vmem:[#allocation15 + $0xa0] sm:$0xff]
    %v216 = vld [vmem:[#allocation15 + $0xa8] sm:$0xff]
    %v217 = vld [vmem:[#allocation15 + $0xb0] sm:$0xff]
    %v218 = vld [vmem:[#allocation15 + $0xb8] sm:$0xff]
    %v219 = vld [vmem:[#allocation15 + $0xc0] sm:$0xff]
    %v220 = vld [vmem:[#allocation15 + $0xc8] sm:$0xff]
    %v221 = vld [vmem:[#allocation15 + $0xd0] sm:$0xff]
    %v222 = vld [vmem:[#allocation15 + $0xd8] sm:$0xff]
    %v223 = vld [vmem:[#allocation15 + $0xe0] sm:$0xff]
    %v224 = vld [vmem:[#allocation15 + $0xe8] sm:$0xff]
    %v225 = vld [vmem:[#allocation15 + $0xf0] sm:$0xff]
    %v226 = vld [vmem:[#allocation15 + $0xf8] sm:$0xff]
    %v227 = vld [vmem:[#allocation15 + $0x100] sm:$0xff]
    %v228 = vld [vmem:[#allocation15 + $0x108] sm:$0xff]
    %v229 = vld [vmem:[#allocation15 + $0x110] sm:$0xff]
    %v230 = vld [vmem:[#allocation15 + $0x118] sm:$0xff]
    %v231 = vld [vmem:[#allocation15 + $0x120] sm:$0xff]
    %v232 = vld [vmem:[#allocation15 + $0x128] sm:$0xff]
    %v233 = vld [vmem:[#allocation15 + $0x130] sm:$0xff]
    %v234 = vld [vmem:[#allocation15 + $0x138] sm:$0xff]
    %v235 = vld [vmem:[#allocation15 + $0x140] sm:$0xff]
    %v236 = vld [vmem:[#allocation15 + $0x148] sm:$0xff]
    %v237 = vld [vmem:[#allocation15 + $0x150] sm:$0xff]
    %v238 = vld [vmem:[#allocation15 + $0x158] sm:$0xff]
    %v239 = vld [vmem:[#allocation15 + $0x160] sm:$0xff]
    %v240 = vld [vmem:[#allocation15 + $0x168] sm:$0xff]
    %v241 = vld [vmem:[#allocation15 + $0x170] sm:$0xff]
    %v242 = vld [vmem:[#allocation15 + $0x178] sm:$0xff]
    %v243 = vld [vmem:[#allocation15 + $0x180] sm:$0xff]
    %v244 = vld [vmem:[#allocation15 + $0x188] sm:$0xff]
    %v245 = vld [vmem:[#allocation15 + $0x190] sm:$0xff]
    %v246 = vld [vmem:[#allocation15 + $0x198] sm:$0xff]
    %v247 = vld [vmem:[#allocation15 + $0x1a0] sm:$0xff]
    %v248 = vld [vmem:[#allocation15 + $0x1a8] sm:$0xff]
    %v249 = vld [vmem:[#allocation15 + $0x1b0] sm:$0xff]
    %v250 = vld [vmem:[#allocation15 + $0x1b8] sm:$0xff]
    %v251 = vld [vmem:[#allocation15 + $0x1c0] sm:$0xff]
    %v252 = vld [vmem:[#allocation15 + $0x1c8] sm:$0xff]
    %v253 = vld [vmem:[#allocation15 + $0x1d0] sm:$0xff]
    %v254 = vld [vmem:[#allocation15 + $0x1d8] sm:$0xff]
    %v255 = vld [vmem:[#allocation15 + $0x1e0] sm:$0xff]
    %v256 = vld [vmem:[#allocation15 + $0x1e8] sm:$0xff]
    %v257 = vld [vmem:[#allocation15 + $0x1f0] sm:$0xff]
    %v258 = vld [vmem:[#allocation15 + $0x1f8] sm:$0xff]
    %v259 = vld [vmem:[#allocation16] sm:$0xff]
    %v260 = vld [vmem:[#allocation16 + $0x8] sm:$0xff]
    %v261 = vld [vmem:[#allocation16 + $0x10] sm:$0xff]
    %v262 = vld [vmem:[#allocation16 + $0x18] sm:$0xff]
    %v263 = vld [vmem:[#allocation16 + $0x20] sm:$0xff]
    %v264 = vld [vmem:[#allocation16 + $0x28] sm:$0xff]
    %v265 = vld [vmem:[#allocation16 + $0x30] sm:$0xff]
    %v266 = vld [vmem:[#allocation16 + $0x38] sm:$0xff]
    %v267 = vld [vmem:[#allocation16 + $0x40] sm:$0xff]
    %v268 = vld [vmem:[#allocation16 + $0x48] sm:$0xff]
    %v269 = vld [vmem:[#allocation16 + $0x50] sm:$0xff]
    %v270 = vld [vmem:[#allocation16 + $0x58] sm:$0xff]
    %v271 = vld [vmem:[#allocation16 + $0x60] sm:$0xff]
    %v272 = vld [vmem:[#allocation16 + $0x68] sm:$0xff]
    %v273 = vld [vmem:[#allocation16 + $0x70] sm:$0xff]
    %v274 = vld [vmem:[#allocation16 + $0x78] sm:$0xff]
    %v275 = vld [vmem:[#allocation16 + $0x80] sm:$0xff]
    %v276 = vld [vmem:[#allocation16 + $0x88] sm:$0xff]
    %v277 = vld [vmem:[#allocation16 + $0x90] sm:$0xff]
    %v278 = vld [vmem:[#allocation16 + $0x98] sm:$0xff]
    %v279 = vld [vmem:[#allocation16 + $0xa0] sm:$0xff]
    %v280 = vld [vmem:[#allocation16 + $0xa8] sm:$0xff]
    %v281 = vld [vmem:[#allocation16 + $0xb0] sm:$0xff]
    %v282 = vld [vmem:[#allocation16 + $0xb8] sm:$0xff]
    %v283 = vld [vmem:[#allocation16 + $0xc0] sm:$0xff]
    %v284 = vld [vmem:[#allocation16 + $0xc8] sm:$0xff]
    %v285 = vld [vmem:[#allocation16 + $0xd0] sm:$0xff]
    %v286 = vld [vmem:[#allocation16 + $0xd8] sm:$0xff]
    %v287 = vld [vmem:[#allocation16 + $0xe0] sm:$0xff]
    %v288 = vld [vmem:[#allocation16 + $0xe8] sm:$0xff]
    %v289 = vld [vmem:[#allocation16 + $0xf0] sm:$0xff]
    %v290 = vld [vmem:[#allocation16 + $0xf8] sm:$0xff]
    %v291 = vld [vmem:[#allocation16 + $0x100] sm:$0xff]
    %v292 = vld [vmem:[#allocation16 + $0x108] sm:$0xff]
    %v293 = vld [vmem:[#allocation16 + $0x110] sm:$0xff]
    %v294 = vld [vmem:[#allocation16 + $0x118] sm:$0xff]
    %v295 = vld [vmem:[#allocation16 + $0x120] sm:$0xff]
    %v296 = vld [vmem:[#allocation16 + $0x128] sm:$0xff]
    %v297 = vld [vmem:[#allocation16 + $0x130] sm:$0xff]
    %v298 = vld [vmem:[#allocation16 + $0x138] sm:$0xff]
    %v299 = vld [vmem:[#allocation16 + $0x140] sm:$0xff]
    %v300 = vld [vmem:[#allocation16 + $0x148] sm:$0xff]
    %v301 = vld [vmem:[#allocation16 + $0x150] sm:$0xff]
    %v302 = vld [vmem:[#allocation16 + $0x158] sm:$0xff]
    %v303 = vld [vmem:[#allocation16 + $0x160] sm:$0xff]
    %v304 = vld [vmem:[#allocation16 + $0x168] sm:$0xff]
    %v305 = vld [vmem:[#allocation16 + $0x170] sm:$0xff]
    %v306 = vld [vmem:[#allocation16 + $0x178] sm:$0xff]
    %v307 = vld [vmem:[#allocation16 + $0x180] sm:$0xff]
    %v308 = vld [vmem:[#allocation16 + $0x188] sm:$0xff]
    %v309 = vld [vmem:[#allocation16 + $0x190] sm:$0xff]
    %v310 = vld [vmem:[#allocation16 + $0x198] sm:$0xff]
    %v311 = vld [vmem:[#allocation16 + $0x1a0] sm:$0xff]
    %v312 = vld [vmem:[#allocation16 + $0x1a8] sm:$0xff]
    %v313 = vld [vmem:[#allocation16 + $0x1b0] sm:$0xff]
    %v314 = vld [vmem:[#allocation16 + $0x1b8] sm:$0xff]
    %v315 = vld [vmem:[#allocation16 + $0x1c0] sm:$0xff]
    %v316 = vld [vmem:[#allocation16 + $0x1c8] sm:$0xff]
    %v317 = vld [vmem:[#allocation16 + $0x1d0] sm:$0xff]
    %v318 = vld [vmem:[#allocation16 + $0x1d8] sm:$0xff]
    %v319 = vld [vmem:[#allocation16 + $0x1e0] sm:$0xff]
    %v320 = vld [vmem:[#allocation16 + $0x1e8] sm:$0xff]
    %v321 = vld [vmem:[#allocation16 + $0x1f0] sm:$0xff]
    %v322 = vld [vmem:[#allocation16 + $0x1f8] sm:$0xff]
    %v323 = vld [vmem:[%s6] sm:$0xf]
    %v325 = vperm.slane %v323, 0
    %v326 = vperm.slane %v323, 1
    %v327 = vperm.slane %v323, 2
    %v328 = vperm.slane %v323, 3
    %v333 = vld [vmem:[#allocation7] sm:$0xff]
    %v334 = vld [vmem:[#allocation7 + $0x8] sm:$0xff]
    %v335 = vld [vmem:[#allocation7 + $0x10] sm:$0xff]
    %v336 = vld [vmem:[#allocation7 + $0x18] sm:$0xff]
    %v337 = vld [vmem:[#allocation7 + $0x20] sm:$0xff]
    %v338 = vld [vmem:[#allocation7 + $0x28] sm:$0xff]
    %v339 = vld [vmem:[#allocation7 + $0x30] sm:$0xff]
    %v340 = vld [vmem:[#allocation7 + $0x38] sm:$0xff]
    %v341 = vld [vmem:[#allocation7 + $0x40] sm:$0xff]
    %v342 = vld [vmem:[#allocation7 + $0x48] sm:$0xff]
    %v343 = vld [vmem:[#allocation7 + $0x50] sm:$0xff]
    %v344 = vld [vmem:[#allocation7 + $0x58] sm:$0xff]
    %v345 = vld [vmem:[#allocation7 + $0x60] sm:$0xff]
    %v346 = vld [vmem:[#allocation7 + $0x68] sm:$0xff]
    %v347 = vld [vmem:[#allocation7 + $0x70] sm:$0xff]
    %v348 = vld [vmem:[#allocation7 + $0x78] sm:$0xff]
    %v349 = vld [vmem:[#allocation10] sm:$0xff]
    %v350 = vld [vmem:[#allocation10 + $0x8] sm:$0xff]
    %v351 = vld [vmem:[#allocation10 + $0x10] sm:$0xff]
    %v352 = vld [vmem:[#allocation10 + $0x18] sm:$0xff]
    %v353 = vld [vmem:[#allocation10 + $0x20] sm:$0xff]
    %v354 = vld [vmem:[#allocation10 + $0x28] sm:$0xff]
    %v355 = vld [vmem:[#allocation10 + $0x30] sm:$0xff]
    %v356 = vld [vmem:[#allocation10 + $0x38] sm:$0xff]
    %v357 = vld [vmem:[#allocation10 + $0x40] sm:$0xff]
    %v358 = vld [vmem:[#allocation10 + $0x48] sm:$0xff]
    %v359 = vld [vmem:[#allocation10 + $0x50] sm:$0xff]
    %v360 = vld [vmem:[#allocation10 + $0x58] sm:$0xff]
    %v361 = vld [vmem:[#allocation10 + $0x60] sm:$0xff]
    %v362 = vld [vmem:[#allocation10 + $0x68] sm:$0xff]
    %v363 = vld [vmem:[#allocation10 + $0x70] sm:$0xff]
    %v364 = vld [vmem:[#allocation10 + $0x78] sm:$0xff]
    %v365 = vld [vmem:[#allocation10 + $0x80] sm:$0xff]
    %v366 = vld [vmem:[#allocation10 + $0x88] sm:$0xff]
    %v367 = vld [vmem:[#allocation10 + $0x90] sm:$0xff]
    %v368 = vld [vmem:[#allocation10 + $0x98] sm:$0xff]
    %v369 = vld [vmem:[#allocation10 + $0xa0] sm:$0xff]
    %v370 = vld [vmem:[#allocation10 + $0xa8] sm:$0xff]
    %v371 = vld [vmem:[#allocation10 + $0xb0] sm:$0xff]
    %v372 = vld [vmem:[#allocation10 + $0xb8] sm:$0xff]
    %v373 = vld [vmem:[#allocation10 + $0xc0] sm:$0xff]
    %v374 = vld [vmem:[#allocation10 + $0xc8] sm:$0xff]
    %v375 = vld [vmem:[#allocation10 + $0xd0] sm:$0xff]
    %v376 = vld [vmem:[#allocation10 + $0xd8] sm:$0xff]
    %v377 = vld [vmem:[#allocation10 + $0xe0] sm:$0xff]
    %v378 = vld [vmem:[#allocation10 + $0xe8] sm:$0xff]
    %v379 = vld [vmem:[#allocation10 + $0xf0] sm:$0xff]
    %v380 = vld [vmem:[#allocation10 + $0xf8] sm:$0xff]
    %v381 = vld [vmem:[#allocation10 + $0x100] sm:$0xff]
    %v382 = vld [vmem:[#allocation10 + $0x108] sm:$0xff]
    %v383 = vld [vmem:[#allocation10 + $0x110] sm:$0xff]
    %v384 = vld [vmem:[#allocation10 + $0x118] sm:$0xff]
    %v385 = vld [vmem:[#allocation10 + $0x120] sm:$0xff]
    %v386 = vld [vmem:[#allocation10 + $0x128] sm:$0xff]
    %v387 = vld [vmem:[#allocation10 + $0x130] sm:$0xff]
    %v388 = vld [vmem:[#allocation10 + $0x138] sm:$0xff]
    %v389 = vld [vmem:[#allocation10 + $0x140] sm:$0xff]
    %v390 = vld [vmem:[#allocation10 + $0x148] sm:$0xff]
    %v391 = vld [vmem:[#allocation10 + $0x150] sm:$0xff]
    %v392 = vld [vmem:[#allocation10 + $0x158] sm:$0xff]
    %v393 = vld [vmem:[#allocation10 + $0x160] sm:$0xff]
    %v394 = vld [vmem:[#allocation10 + $0x168] sm:$0xff]
    %v395 = vld [vmem:[#allocation10 + $0x170] sm:$0xff]
    %v396 = vld [vmem:[#allocation10 + $0x178] sm:$0xff]
    %v397 = vld [vmem:[#allocation10 + $0x180] sm:$0xff]
    %v398 = vld [vmem:[#allocation10 + $0x188] sm:$0xff]
    %v399 = vld [vmem:[#allocation10 + $0x190] sm:$0xff]
    %v400 = vld [vmem:[#allocation10 + $0x198] sm:$0xff]
    %v401 = vld [vmem:[#allocation10 + $0x1a0] sm:$0xff]
    %v402 = vld [vmem:[#allocation10 + $0x1a8] sm:$0xff]
    %v403 = vld [vmem:[#allocation10 + $0x1b0] sm:$0xff]
    %v404 = vld [vmem:[#allocation10 + $0x1b8] sm:$0xff]
    %v405 = vld [vmem:[#allocation10 + $0x1c0] sm:$0xff]
    %v406 = vld [vmem:[#allocation10 + $0x1c8] sm:$0xff]
    %v407 = vld [vmem:[#allocation10 + $0x1d0] sm:$0xff]
    %v408 = vld [vmem:[#allocation10 + $0x1d8] sm:$0xff]
    %v409 = vld [vmem:[#allocation10 + $0x1e0] sm:$0xff]
    %v410 = vld [vmem:[#allocation10 + $0x1e8] sm:$0xff]
    %v411 = vld [vmem:[#allocation10 + $0x1f0] sm:$0xff]
    %v412 = vld [vmem:[#allocation10 + $0x1f8] sm:$0xff]
    %v413 = vld [vmem:[#allocation13] sm:$0xf]
    %v415 = vperm.slane %v413, 0
    %v416 = vperm.slane %v413, 1
    %v417 = vperm.slane %v413, 2
    %v418 = vperm.slane %v413, 3
    %423 = vmatpush.msra.mxu0 %v409
    %424 = vmatpush.msra.mxu0 %v405
    %425 = vmatpush.msra.mxu0 %v401
    %426 = vmatpush.msra.mxu0 %v397
    %427 = vmatpush.msra.mxu0 %v393
    %428 = vmatpush.msra.mxu0 %v389
    %429 = vmatpush.msra.mxu0 %v385
    %430 = vmatpush.msra.mxu0 %v381
    %431 = vmatpush.msra.mxu0 %v377
    %432 = vmatpush.msra.mxu0 %v373
    %433 = vmatpush.msra.mxu0 %v369
    %434 = vmatpush.msra.mxu0 %v365
    %435 = vmatpush.msra.mxu0 %v361
    %436 = vmatpush.msra.mxu0 %v357
    %437 = vmatpush.msra.mxu0 %v353
    %438 = vmatpush.msra.mxu0 %v349
    %439 = vmatmul.f32.gmra.mxu0 %v333
    %v440 = vpop.f32.mrf.mxu0
    %v441 = vadd.f32 %v415, %v440
    %442 = vmatmul.f32.gmra.mxu0 %v334
    %v443 = vpop.f32.mrf.mxu0
    %v444 = vadd.f32 %v415, %v443
    %445 = vmatmul.f32.gmra.mxu0 %v335
    %v446 = vpop.f32.mrf.mxu0
    %v447 = vadd.f32 %v415, %v446
    %448 = vmatmul.f32.gmra.mxu0 %v336
    %v449 = vpop.f32.mrf.mxu0
    %v450 = vadd.f32 %v415, %v449
    %451 = vmatmul.f32.gmra.mxu0 %v337
    %v452 = vpop.f32.mrf.mxu0
    %v453 = vadd.f32 %v415, %v452
    %454 = vmatmul.f32.gmra.mxu0 %v338
    %v455 = vpop.f32.mrf.mxu0
    %v456 = vadd.f32 %v415, %v455
    %457 = vmatmul.f32.gmra.mxu0 %v339
    %v458 = vpop.f32.mrf.mxu0
    %v459 = vadd.f32 %v415, %v458
    %460 = vmatmul.f32.gmra.mxu0 %v340
    %v461 = vpop.f32.mrf.mxu0
    %v462 = vadd.f32 %v415, %v461
    %463 = vmatmul.f32.gmra.mxu0 %v341
    %v464 = vpop.f32.mrf.mxu0
    %v465 = vadd.f32 %v415, %v464
    %466 = vmatmul.f32.gmra.mxu0 %v342
    %v467 = vpop.f32.mrf.mxu0
    %v468 = vadd.f32 %v415, %v467
    %469 = vmatmul.f32.gmra.mxu0 %v343
    %v470 = vpop.f32.mrf.mxu0
    %v471 = vadd.f32 %v415, %v470
    %472 = vmatmul.f32.gmra.mxu0 %v344
    %v473 = vpop.f32.mrf.mxu0
    %v474 = vadd.f32 %v415, %v473
    %475 = vmatmul.f32.gmra.mxu0 %v345
    %v476 = vpop.f32.mrf.mxu0
    %v477 = vadd.f32 %v415, %v476
    %478 = vmatmul.f32.gmra.mxu0 %v346
    %v479 = vpop.f32.mrf.mxu0
    %v480 = vadd.f32 %v415, %v479
    %481 = vmatmul.f32.gmra.mxu0 %v347
    %v482 = vpop.f32.mrf.mxu0
    %v483 = vadd.f32 %v415, %v482
    %484 = vmatmul.f32.gmra.mxu0 %v348
    %v485 = vpop.f32.mrf.mxu0
    %v486 = vadd.f32 %v415, %v485
    %487 = vdwg.mxu0
    %488 = vmatpush.msra.mxu0 %v410
    %489 = vmatpush.msra.mxu0 %v406
    %490 = vmatpush.msra.mxu0 %v402
    %491 = vmatpush.msra.mxu0 %v398
    %492 = vmatpush.msra.mxu0 %v394
    %493 = vmatpush.msra.mxu0 %v390
    %494 = vmatpush.msra.mxu0 %v386
    %495 = vmatpush.msra.mxu0 %v382
    %496 = vmatpush.msra.mxu0 %v378
    %497 = vmatpush.msra.mxu0 %v374
    %498 = vmatpush.msra.mxu0 %v370
    %499 = vmatpush.msra.mxu0 %v366
    %500 = vmatpush.msra.mxu0 %v362
    %501 = vmatpush.msra.mxu0 %v358
    %502 = vmatpush.msra.mxu0 %v354
    %503 = vmatpush.msra.mxu0 %v350
    %504 = vmatmul.f32.gmra.mxu0 %v333
    %v505 = vpop.f32.mrf.mxu0
    %v506 = vadd.f32 %v416, %v505
    %507 = vmatmul.f32.gmra.mxu0 %v334
    %v508 = vpop.f32.mrf.mxu0
    %v509 = vadd.f32 %v416, %v508
    %510 = vmatmul.f32.gmra.mxu0 %v335
    %v511 = vpop.f32.mrf.mxu0
    %v512 = vadd.f32 %v416, %v511
    %513 = vmatmul.f32.gmra.mxu0 %v336
    %v514 = vpop.f32.mrf.mxu0
    %v515 = vadd.f32 %v416, %v514
    %516 = vmatmul.f32.gmra.mxu0 %v337
    %v517 = vpop.f32.mrf.mxu0
    %v518 = vadd.f32 %v416, %v517
    %519 = vmatmul.f32.gmra.mxu0 %v338
    %v520 = vpop.f32.mrf.mxu0
    %v521 = vadd.f32 %v416, %v520
    %522 = vmatmul.f32.gmra.mxu0 %v339
    %v523 = vpop.f32.mrf.mxu0
    %v524 = vadd.f32 %v416, %v523
    %525 = vmatmul.f32.gmra.mxu0 %v340
    %v526 = vpop.f32.mrf.mxu0
    %v527 = vadd.f32 %v416, %v526
    %528 = vmatmul.f32.gmra.mxu0 %v341
    %v529 = vpop.f32.mrf.mxu0
    %v530 = vadd.f32 %v416, %v529
    %531 = vmatmul.f32.gmra.mxu0 %v342
    %v532 = vpop.f32.mrf.mxu0
    %v533 = vadd.f32 %v416, %v532
    %534 = vmatmul.f32.gmra.mxu0 %v343
    %v535 = vpop.f32.mrf.mxu0
    %v536 = vadd.f32 %v416, %v535
    %537 = vmatmul.f32.gmra.mxu0 %v344
    %v538 = vpop.f32.mrf.mxu0
    %v539 = vadd.f32 %v416, %v538
    %540 = vmatmul.f32.gmra.mxu0 %v345
    %v541 = vpop.f32.mrf.mxu0
    %v542 = vadd.f32 %v416, %v541
    %543 = vmatmul.f32.gmra.mxu0 %v346
    %v544 = vpop.f32.mrf.mxu0
    %v545 = vadd.f32 %v416, %v544
    %546 = vmatmul.f32.gmra.mxu0 %v347
    %v547 = vpop.f32.mrf.mxu0
    %v548 = vadd.f32 %v416, %v547
    %549 = vmatmul.f32.gmra.mxu0 %v348
    %v550 = vpop.f32.mrf.mxu0
    %v551 = vadd.f32 %v416, %v550
    %552 = vdwg.mxu0
    %553 = vmatpush.msra.mxu0 %v411
    %554 = vmatpush.msra.mxu0 %v407
    %555 = vmatpush.msra.mxu0 %v403
    %556 = vmatpush.msra.mxu0 %v399
    %557 = vmatpush.msra.mxu0 %v395
    %558 = vmatpush.msra.mxu0 %v391
    %559 = vmatpush.msra.mxu0 %v387
    %560 = vmatpush.msra.mxu0 %v383
    %561 = vmatpush.msra.mxu0 %v379
    %562 = vmatpush.msra.mxu0 %v375
    %563 = vmatpush.msra.mxu0 %v371
    %564 = vmatpush.msra.mxu0 %v367
    %565 = vmatpush.msra.mxu0 %v363
    %566 = vmatpush.msra.mxu0 %v359
    %567 = vmatpush.msra.mxu0 %v355
    %568 = vmatpush.msra.mxu0 %v351
    %569 = vmatmul.f32.gmra.mxu0 %v333
    %v570 = vpop.f32.mrf.mxu0
    %v571 = vadd.f32 %v417, %v570
    %572 = vmatmul.f32.gmra.mxu0 %v334
    %v573 = vpop.f32.mrf.mxu0
    %v574 = vadd.f32 %v417, %v573
    %575 = vmatmul.f32.gmra.mxu0 %v335
    %v576 = vpop.f32.mrf.mxu0
    %v577 = vadd.f32 %v417, %v576
    %578 = vmatmul.f32.gmra.mxu0 %v336
    %v579 = vpop.f32.mrf.mxu0
    %v580 = vadd.f32 %v417, %v579
    %581 = vmatmul.f32.gmra.mxu0 %v337
    %v582 = vpop.f32.mrf.mxu0
    %v583 = vadd.f32 %v417, %v582
    %584 = vmatmul.f32.gmra.mxu0 %v338
    %v585 = vpop.f32.mrf.mxu0
    %v586 = vadd.f32 %v417, %v585
    %587 = vmatmul.f32.gmra.mxu0 %v339
    %v588 = vpop.f32.mrf.mxu0
    %v589 = vadd.f32 %v417, %v588
    %590 = vmatmul.f32.gmra.mxu0 %v340
    %v591 = vpop.f32.mrf.mxu0
    %v592 = vadd.f32 %v417, %v591
    %593 = vmatmul.f32.gmra.mxu0 %v341
    %v594 = vpop.f32.mrf.mxu0
    %v595 = vadd.f32 %v417, %v594
    %596 = vmatmul.f32.gmra.mxu0 %v342
    %v597 = vpop.f32.mrf.mxu0
    %v598 = vadd.f32 %v417, %v597
    %599 = vmatmul.f32.gmra.mxu0 %v343
    %v600 = vpop.f32.mrf.mxu0
    %v601 = vadd.f32 %v417, %v600
    %602 = vmatmul.f32.gmra.mxu0 %v344
    %v603 = vpop.f32.mrf.mxu0
    %v604 = vadd.f32 %v417, %v603
    %605 = vmatmul.f32.gmra.mxu0 %v345
    %v606 = vpop.f32.mrf.mxu0
    %v607 = vadd.f32 %v417, %v606
    %608 = vmatmul.f32.gmra.mxu0 %v346
    %v609 = vpop.f32.mrf.mxu0
    %v610 = vadd.f32 %v417, %v609
    %611 = vmatmul.f32.gmra.mxu0 %v347
    %v612 = vpop.f32.mrf.mxu0
    %v613 = vadd.f32 %v417, %v612
    %614 = vmatmul.f32.gmra.mxu0 %v348
    %v615 = vpop.f32.mrf.mxu0
    %v616 = vadd.f32 %v417, %v615
    %617 = vdwg.mxu0
    %618 = vmatpush.msra.mxu0 %v412
    %619 = vmatpush.msra.mxu0 %v408
    %620 = vmatpush.msra.mxu0 %v404
    %621 = vmatpush.msra.mxu0 %v400
    %622 = vmatpush.msra.mxu0 %v396
    %623 = vmatpush.msra.mxu0 %v392
    %624 = vmatpush.msra.mxu0 %v388
    %625 = vmatpush.msra.mxu0 %v384
    %626 = vmatpush.msra.mxu0 %v380
    %627 = vmatpush.msra.mxu0 %v376
    %628 = vmatpush.msra.mxu0 %v372
    %629 = vmatpush.msra.mxu0 %v368
    %630 = vmatpush.msra.mxu0 %v364
    %631 = vmatpush.msra.mxu0 %v360
    %632 = vmatpush.msra.mxu0 %v356
    %633 = vmatpush.msra.mxu0 %v352
    %634 = vmatmul.f32.gmra.mxu0 %v333
    %v635 = vpop.f32.mrf.mxu0
    %v636 = vadd.f32 %v418, %v635
    %637 = vmatmul.f32.gmra.mxu0 %v334
    %v638 = vpop.f32.mrf.mxu0
    %v639 = vadd.f32 %v418, %v638
    %640 = vmatmul.f32.gmra.mxu0 %v335
    %v641 = vpop.f32.mrf.mxu0
    %v642 = vadd.f32 %v418, %v641
    %643 = vmatmul.f32.gmra.mxu0 %v336
    %v644 = vpop.f32.mrf.mxu0
    %v645 = vadd.f32 %v418, %v644
    %646 = vmatmul.f32.gmra.mxu0 %v337
    %v647 = vpop.f32.mrf.mxu0
    %v648 = vadd.f32 %v418, %v647
    %649 = vmatmul.f32.gmra.mxu0 %v338
    %v650 = vpop.f32.mrf.mxu0
    %v651 = vadd.f32 %v418, %v650
    %652 = vmatmul.f32.gmra.mxu0 %v339
    %v653 = vpop.f32.mrf.mxu0
    %v654 = vadd.f32 %v418, %v653
    %655 = vmatmul.f32.gmra.mxu0 %v340
    %v656 = vpop.f32.mrf.mxu0
    %v657 = vadd.f32 %v418, %v656
    %658 = vmatmul.f32.gmra.mxu0 %v341
    %v659 = vpop.f32.mrf.mxu0
    %v660 = vadd.f32 %v418, %v659
    %661 = vmatmul.f32.gmra.mxu0 %v342
    %v662 = vpop.f32.mrf.mxu0
    %v663 = vadd.f32 %v418, %v662
    %664 = vmatmul.f32.gmra.mxu0 %v343
    %v665 = vpop.f32.mrf.mxu0
    %v666 = vadd.f32 %v418, %v665
    %667 = vmatmul.f32.gmra.mxu0 %v344
    %v668 = vpop.f32.mrf.mxu0
    %v669 = vadd.f32 %v418, %v668
    %670 = vmatmul.f32.gmra.mxu0 %v345
    %v671 = vpop.f32.mrf.mxu0
    %v672 = vadd.f32 %v418, %v671
    %673 = vmatmul.f32.gmra.mxu0 %v346
    %v674 = vpop.f32.mrf.mxu0
    %v675 = vadd.f32 %v418, %v674
    %676 = vmatmul.f32.gmra.mxu0 %v347
    %v677 = vpop.f32.mrf.mxu0
    %v678 = vadd.f32 %v418, %v677
    %679 = vmatmul.f32.gmra.mxu0 %v348
    %v680 = vpop.f32.mrf.mxu0
    %v681 = vadd.f32 %v418, %v680
    %682 = vdwg.mxu0
    %683 = vst [vmem:[#allocation2] sm:$0xff] %v441
    %684 = vst [vmem:[#allocation2 + $0x8] sm:$0xff] %v506
    %685 = vst [vmem:[#allocation2 + $0x10] sm:$0xff] %v571
    %686 = vst [vmem:[#allocation2 + $0x18] sm:$0xff] %v636
    %687 = vst [vmem:[#allocation2 + $0x20] sm:$0xff] %v444
    %688 = vst [vmem:[#allocation2 + $0x28] sm:$0xff] %v509
    %689 = vst [vmem:[#allocation2 + $0x30] sm:$0xff] %v574
    %690 = vst [vmem:[#allocation2 + $0x38] sm:$0xff] %v639
    %691 = vst [vmem:[#allocation2 + $0x40] sm:$0xff] %v447
    %692 = vst [vmem:[#allocation2 + $0x48] sm:$0xff] %v512
    %693 = vst [vmem:[#allocation2 + $0x50] sm:$0xff] %v577
    %694 = vst [vmem:[#allocation2 + $0x58] sm:$0xff] %v642
    %695 = vst [vmem:[#allocation2 + $0x60] sm:$0xff] %v450
    %696 = vst [vmem:[#allocation2 + $0x68] sm:$0xff] %v515
    %697 = vst [vmem:[#allocation2 + $0x70] sm:$0xff] %v580
    %698 = vst [vmem:[#allocation2 + $0x78] sm:$0xff] %v645
    %699 = vst [vmem:[#allocation2 + $0x80] sm:$0xff] %v453
    %700 = vst [vmem:[#allocation2 + $0x88] sm:$0xff] %v518
    %701 = vst [vmem:[#allocation2 + $0x90] sm:$0xff] %v583
    %702 = vst [vmem:[#allocation2 + $0x98] sm:$0xff] %v648
    %703 = vst [vmem:[#allocation2 + $0xa0] sm:$0xff] %v456
    %704 = vst [vmem:[#allocation2 + $0xa8] sm:$0xff] %v521
    %705 = vst [vmem:[#allocation2 + $0xb0] sm:$0xff] %v586
    %706 = vst [vmem:[#allocation2 + $0xb8] sm:$0xff] %v651
    %707 = vst [vmem:[#allocation2 + $0xc0] sm:$0xff] %v459
    %708 = vst [vmem:[#allocation2 + $0xc8] sm:$0xff] %v524
    %709 = vst [vmem:[#allocation2 + $0xd0] sm:$0xff] %v589
    %710 = vst [vmem:[#allocation2 + $0xd8] sm:$0xff] %v654
    %711 = vst [vmem:[#allocation2 + $0xe0] sm:$0xff] %v462
    %712 = vst [vmem:[#allocation2 + $0xe8] sm:$0xff] %v527
    %713 = vst [vmem:[#allocation2 + $0xf0] sm:$0xff] %v592
    %714 = vst [vmem:[#allocation2 + $0xf8] sm:$0xff] %v657
    %715 = vst [vmem:[#allocation2 + $0x100] sm:$0xff] %v465
    %716 = vst [vmem:[#allocation2 + $0x108] sm:$0xff] %v530
    %717 = vst [vmem:[#allocation2 + $0x110] sm:$0xff] %v595
    %718 = vst [vmem:[#allocation2 + $0x118] sm:$0xff] %v660
    %719 = vst [vmem:[#allocation2 + $0x120] sm:$0xff] %v468
    %720 = vst [vmem:[#allocation2 + $0x128] sm:$0xff] %v533
    %721 = vst [vmem:[#allocation2 + $0x130] sm:$0xff] %v598
    %722 = vst [vmem:[#allocation2 + $0x138] sm:$0xff] %v663
    %723 = vst [vmem:[#allocation2 + $0x140] sm:$0xff] %v471
    %724 = vst [vmem:[#allocation2 + $0x148] sm:$0xff] %v536
    %725 = vst [vmem:[#allocation2 + $0x150] sm:$0xff] %v601
    %726 = vst [vmem:[#allocation2 + $0x158] sm:$0xff] %v666
    %727 = vst [vmem:[#allocation2 + $0x160] sm:$0xff] %v474
    %728 = vst [vmem:[#allocation2 + $0x168] sm:$0xff] %v539
    %729 = vst [vmem:[#allocation2 + $0x170] sm:$0xff] %v604
    %730 = vst [vmem:[#allocation2 + $0x178] sm:$0xff] %v669
    %731 = vst [vmem:[#allocation2 + $0x180] sm:$0xff] %v477
    %732 = vst [vmem:[#allocation2 + $0x188] sm:$0xff] %v542
    %733 = vst [vmem:[#allocation2 + $0x190] sm:$0xff] %v607
    %734 = vst [vmem:[#allocation2 + $0x198] sm:$0xff] %v672
    %735 = vst [vmem:[#allocation2 + $0x1a0] sm:$0xff] %v480
    %736 = vst [vmem:[#allocation2 + $0x1a8] sm:$0xff] %v545
    %737 = vst [vmem:[#allocation2 + $0x1b0] sm:$0xff] %v610
    %738 = vst [vmem:[#allocation2 + $0x1b8] sm:$0xff] %v675
    %739 = vst [vmem:[#allocation2 + $0x1c0] sm:$0xff] %v483
    %740 = vst [vmem:[#allocation2 + $0x1c8] sm:$0xff] %v548
    %741 = vst [vmem:[#allocation2 + $0x1d0] sm:$0xff] %v613
    %742 = vst [vmem:[#allocation2 + $0x1d8] sm:$0xff] %v678
    %743 = vst [vmem:[#allocation2 + $0x1e0] sm:$0xff] %v486
    %744 = vst [vmem:[#allocation2 + $0x1e8] sm:$0xff] %v551
    %745 = vst [vmem:[#allocation2 + $0x1f0] sm:$0xff] %v616
    %746 = vst [vmem:[#allocation2 + $0x1f8] sm:$0xff] %v681
    %v747 = vld [vmem:[#allocation3] sm:$0xff]
    %v748 = vld [vmem:[#allocation3 + $0x8] sm:$0xff]
    %v749 = vld [vmem:[#allocation4] sm:$0xff]
    %v750 = vld [vmem:[#allocation4 + $0x8] sm:$0xff]
    %v751 = vld [vmem:[#allocation5] sm:$0xff]
    %v752 = vld [vmem:[#allocation5 + $0x8] sm:$0xff]
    %v753 = vld [vmem:[#allocation6] sm:$0xff]
    %v754 = vld [vmem:[#allocation6 + $0x8] sm:$0xff]
    %v755 = vld [vmem:[#allocation2] sm:$0xff]
    %v756 = vld [vmem:[#allocation2 + $0x8] sm:$0xff]
    %v757 = vld [vmem:[#allocation2 + $0x10] sm:$0xff]
    %v758 = vld [vmem:[#allocation2 + $0x18] sm:$0xff]
    %v759 = vld [vmem:[#allocation2 + $0x20] sm:$0xff]
    %v760 = vld [vmem:[#allocation2 + $0x28] sm:$0xff]
    %v761 = vld [vmem:[#allocation2 + $0x30] sm:$0xff]
    %v762 = vld [vmem:[#allocation2 + $0x38] sm:$0xff]
    %763 = vmatpush.msra.mxu0 %v191
    %764 = vmatpush.msra.mxu0 %v187
    %765 = vmatpush.msra.mxu0 %v183
    %766 = vmatpush.msra.mxu0 %v179
    %767 = vmatpush.msra.mxu0 %v175
    %768 = vmatpush.msra.mxu0 %v171
    %769 = vmatpush.msra.mxu0 %v167
    %770 = vmatpush.msra.mxu0 %v163
    %771 = vmatpush.msra.mxu0 %v159
    %772 = vmatpush.msra.mxu0 %v155
    %773 = vmatpush.msra.mxu0 %v151
    %774 = vmatpush.msra.mxu0 %v147
    %775 = vmatpush.msra.mxu0 %v143
    %776 = vmatpush.msra.mxu0 %v139
    %777 = vmatpush.msra.mxu0 %v135
    %778 = vmatpush.msra.mxu0 %v131
    %779 = vmatmul.f32.gmra.mxu0 %v747
    %v780 = vpop.f32.mrf.mxu0
    %v781 = vadd.f32 0.0, %v780
    %782 = vmatmul.f32.gmra.mxu0 %v748
    %v783 = vpop.f32.mrf.mxu0
    %v784 = vadd.f32 0.0, %v783
    %785 = vdwg.mxu0
    %786 = vmatpush.msra.mxu0 %v192
    %787 = vmatpush.msra.mxu0 %v188
    %788 = vmatpush.msra.mxu0 %v184
    %789 = vmatpush.msra.mxu0 %v180
    %790 = vmatpush.msra.mxu0 %v176
    %791 = vmatpush.msra.mxu0 %v172
    %792 = vmatpush.msra.mxu0 %v168
    %793 = vmatpush.msra.mxu0 %v164
    %794 = vmatpush.msra.mxu0 %v160
    %795 = vmatpush.msra.mxu0 %v156
    %796 = vmatpush.msra.mxu0 %v152
    %797 = vmatpush.msra.mxu0 %v148
    %798 = vmatpush.msra.mxu0 %v144
    %799 = vmatpush.msra.mxu0 %v140
    %800 = vmatpush.msra.mxu0 %v136
    %801 = vmatpush.msra.mxu0 %v132
    %802 = vmatmul.f32.gmra.mxu0 %v747
    %v803 = vpop.f32.mrf.mxu0
    %v804 = vadd.f32 0.0, %v803
    %805 = vmatmul.f32.gmra.mxu0 %v748
    %v806 = vpop.f32.mrf.mxu0
    %v807 = vadd.f32 0.0, %v806
    %808 = vdwg.mxu0
    %809 = vmatpush.msra.mxu0 %v193
    %810 = vmatpush.msra.mxu0 %v189
    %811 = vmatpush.msra.mxu0 %v185
    %812 = vmatpush.msra.mxu0 %v181
    %813 = vmatpush.msra.mxu0 %v177
    %814 = vmatpush.msra.mxu0 %v173
    %815 = vmatpush.msra.mxu0 %v169
    %816 = vmatpush.msra.mxu0 %v165
    %817 = vmatpush.msra.mxu0 %v161
    %818 = vmatpush.msra.mxu0 %v157
    %819 = vmatpush.msra.mxu0 %v153
    %820 = vmatpush.msra.mxu0 %v149
    %821 = vmatpush.msra.mxu0 %v145
    %822 = vmatpush.msra.mxu0 %v141
    %823 = vmatpush.msra.mxu0 %v137
    %824 = vmatpush.msra.mxu0 %v133
    %825 = vmatmul.f32.gmra.mxu0 %v747
    %v826 = vpop.f32.mrf.mxu0
    %v827 = vadd.f32 0.0, %v826
    %828 = vmatmul.f32.gmra.mxu0 %v748
    %v829 = vpop.f32.mrf.mxu0
    %v830 = vadd.f32 0.0, %v829
    %831 = vdwg.mxu0
    %832 = vmatpush.msra.mxu0 %v194
    %833 = vmatpush.msra.mxu0 %v190
    %834 = vmatpush.msra.mxu0 %v186
    %835 = vmatpush.msra.mxu0 %v182
    %836 = vmatpush.msra.mxu0 %v178
    %837 = vmatpush.msra.mxu0 %v174
    %838 = vmatpush.msra.mxu0 %v170
    %839 = vmatpush.msra.mxu0 %v166
    %840 = vmatpush.msra.mxu0 %v162
    %841 = vmatpush.msra.mxu0 %v158
    %842 = vmatpush.msra.mxu0 %v154
    %843 = vmatpush.msra.mxu0 %v150
    %844 = vmatpush.msra.mxu0 %v146
    %845 = vmatpush.msra.mxu0 %v142
    %846 = vmatpush.msra.mxu0 %v138
    %847 = vmatpush.msra.mxu0 %v134
    %848 = vmatmul.f32.gmra.mxu0 %v747
    %v849 = vpop.f32.mrf.mxu0
    %v850 = vadd.f32 0.0, %v849
    %851 = vmatmul.f32.gmra.mxu0 %v748
    %v852 = vpop.f32.mrf.mxu0
    %v853 = vadd.f32 0.0, %v852
    %854 = vdwg.mxu0
    %v855 = vadd.f32 %v755, %v781
    %v856 = vadd.f32 %v756, %v804
    %v857 = vadd.f32 %v757, %v827
    %v858 = vadd.f32 %v758, %v850
    %v859 = vadd.f32 %v759, %v784
    %v860 = vadd.f32 %v760, %v807
    %v861 = vadd.f32 %v761, %v830
    %v862 = vadd.f32 %v762, %v853
    %v863 = vmul.f32 %v855, 0.5
    %v864 = vmul.f32 %v856, 0.5
    %v865 = vmul.f32 %v857, 0.5
    %v866 = vmul.f32 %v859, 0.5
    %v867 = vmul.f32 %v860, 0.5
    %v868 = vmul.f32 %v861, 0.5
    %v869 = vtanh.pop %v863
    %v870 = vtanh.pop %v864
    %v871 = vtanh.pop %v865
    %v872 = vtanh.pop %v866
    %v873 = vtanh.pop %v867
    %v874 = vtanh.pop %v868
    %v875 = vmul.f32 %v869, 0.5
    %v876 = vmul.f32 %v870, 0.5
    %v877 = vmul.f32 %v871, 0.5
    %v878 = vmul.f32 %v872, 0.5
    %v879 = vmul.f32 %v873, 0.5
    %v880 = vmul.f32 %v874, 0.5
    %v881 = vadd.f32 %v875, 0.5
    %v882 = vadd.f32 %v876, 0.5
    %v883 = vadd.f32 %v877, 0.5
    %v884 = vadd.f32 %v878, 0.5
    %v885 = vadd.f32 %v879, 0.5
    %v886 = vadd.f32 %v880, 0.5
    %v887 = vtanh.pop %v858
    %v888 = vtanh.pop %v862
    %v889 = vmul.f32 %v882, %v749
    %v890 = vmul.f32 %v885, %v750
    %v891 = vmul.f32 %v881, %v887
    %v892 = vmul.f32 %v884, %v888
    %v893 = vadd.f32 %v889, %v891
    %v894 = vadd.f32 %v890, %v892
    %v895 = vtanh.pop %v893
    %v896 = vtanh.pop %v894
    %v897 = vmul.f32 %v883, %v895
    %v898 = vmul.f32 %v886, %v896
    %899 = vmatpush.msra.mxu0 %v255
    %900 = vmatpush.msra.mxu0 %v251
    %901 = vmatpush.msra.mxu0 %v247
    %902 = vmatpush.msra.mxu0 %v243
    %903 = vmatpush.msra.mxu0 %v239
    %904 = vmatpush.msra.mxu0 %v235
    %905 = vmatpush.msra.mxu0 %v231
    %906 = vmatpush.msra.mxu0 %v227
    %907 = vmatpush.msra.mxu0 %v223
    %908 = vmatpush.msra.mxu0 %v219
    %909 = vmatpush.msra.mxu0 %v215
    %910 = vmatpush.msra.mxu0 %v211
    %911 = vmatpush.msra.mxu0 %v207
    %912 = vmatpush.msra.mxu0 %v203
    %913 = vmatpush.msra.mxu0 %v199
    %914 = vmatpush.msra.mxu0 %v195
    %915 = vmatmul.f32.gmra.mxu0 %v897
    %v916 = vpop.f32.mrf.mxu0
    %v917 = vadd.f32 0.0, %v916
    %918 = vmatmul.f32.gmra.mxu0 %v898
    %v919 = vpop.f32.mrf.mxu0
    %v920 = vadd.f32 0.0, %v919
    %921 = vdwg.mxu0
    %922 = vmatpush.msra.mxu0 %v256
    %923 = vmatpush.msra.mxu0 %v252
    %924 = vmatpush.msra.mxu0 %v248
    %925 = vmatpush.msra.mxu0 %v244
    %926 = vmatpush.msra.mxu0 %v240
    %927 = vmatpush.msra.mxu0 %v236
    %928 = vmatpush.msra.mxu0 %v232
    %929 = vmatpush.msra.mxu0 %v228
    %930 = vmatpush.msra.mxu0 %v224
    %931 = vmatpush.msra.mxu0 %v220
    %932 = vmatpush.msra.mxu0 %v216
    %933 = vmatpush.msra.mxu0 %v212
    %934 = vmatpush.msra.mxu0 %v208
    %935 = vmatpush.msra.mxu0 %v204
    %936 = vmatpush.msra.mxu0 %v200
    %937 = vmatpush.msra.mxu0 %v196
    %938 = vmatmul.f32.gmra.mxu0 %v897
    %v939 = vpop.f32.mrf.mxu0
    %v940 = vadd.f32 0.0, %v939
    %941 = vmatmul.f32.gmra.mxu0 %v898
    %v942 = vpop.f32.mrf.mxu0
    %v943 = vadd.f32 0.0, %v942
    %944 = vdwg.mxu0
    %945 = vmatpush.msra.mxu0 %v257
    %946 = vmatpush.msra.mxu0 %v253
    %947 = vmatpush.msra.mxu0 %v249
    %948 = vmatpush.msra.mxu0 %v245
    %949 = vmatpush.msra.mxu0 %v241
    %950 = vmatpush.msra.mxu0 %v237
    %951 = vmatpush.msra.mxu0 %v233
    %952 = vmatpush.msra.mxu0 %v229
    %953 = vmatpush.msra.mxu0 %v225
    %954 = vmatpush.msra.mxu0 %v221
    %955 = vmatpush.msra.mxu0 %v217
    %956 = vmatpush.msra.mxu0 %v213
    %957 = vmatpush.msra.mxu0 %v209
    %958 = vmatpush.msra.mxu0 %v205
    %959 = vmatpush.msra.mxu0 %v201
    %960 = vmatpush.msra.mxu0 %v197
    %961 = vmatmul.f32.gmra.mxu0 %v897
    %v962 = vpop.f32.mrf.mxu0
    %v963 = vadd.f32 0.0, %v962
    %964 = vmatmul.f32.gmra.mxu0 %v898
    %v965 = vpop.f32.mrf.mxu0
    %v966 = vadd.f32 0.0, %v965
    %967 = vdwg.mxu0
    %968 = vmatpush.msra.mxu0 %v258
    %969 = vmatpush.msra.mxu0 %v254
    %970 = vmatpush.msra.mxu0 %v250
    %971 = vmatpush.msra.mxu0 %v246
    %972 = vmatpush.msra.mxu0 %v242
    %973 = vmatpush.msra.mxu0 %v238
    %974 = vmatpush.msra.mxu0 %v234
    %975 = vmatpush.msra.mxu0 %v230
    %976 = vmatpush.msra.mxu0 %v226
    %977 = vmatpush.msra.mxu0 %v222
    %978 = vmatpush.msra.mxu0 %v218
    %979 = vmatpush.msra.mxu0 %v214
    %980 = vmatpush.msra.mxu0 %v210
    %981 = vmatpush.msra.mxu0 %v206
    %982 = vmatpush.msra.mxu0 %v202
    %983 = vmatpush.msra.mxu0 %v198
    %984 = vmatmul.f32.gmra.mxu0 %v897
    %v985 = vpop.f32.mrf.mxu0
    %v986 = vadd.f32 0.0, %v985
    %987 = vmatmul.f32.gmra.mxu0 %v898
    %v988 = vpop.f32.mrf.mxu0
    %v989 = vadd.f32 0.0, %v988
    %990 = vdwg.mxu0
    %991 = vmatpush.msra.mxu0 %v319
    %992 = vmatpush.msra.mxu0 %v315
    %993 = vmatpush.msra.mxu0 %v311
    %994 = vmatpush.msra.mxu0 %v307
    %995 = vmatpush.msra.mxu0 %v303
    %996 = vmatpush.msra.mxu0 %v299
    %997 = vmatpush.msra.mxu0 %v295
    %998 = vmatpush.msra.mxu0 %v291
    %999 = vmatpush.msra.mxu0 %v287
    %1000 = vmatpush.msra.mxu0 %v283
    %1001 = vmatpush.msra.mxu0 %v279
    %1002 = vmatpush.msra.mxu0 %v275
    %1003 = vmatpush.msra.mxu0 %v271
    %1004 = vmatpush.msra.mxu0 %v267
    %1005 = vmatpush.msra.mxu0 %v263
    %1006 = vmatpush.msra.mxu0 %v259
    %1007 = vmatmul.f32.gmra.mxu0 %v751
    %v1008 = vpop.f32.mrf.mxu0
    %v1009 = vadd.f32 %v917, %v1008
    %1010 = vmatmul.f32.gmra.mxu0 %v752
    %v1011 = vpop.f32.mrf.mxu0
    %v1012 = vadd.f32 %v920, %v1011
    %1013 = vdwg.mxu0
    %1014 = vmatpush.msra.mxu0 %v320
    %1015 = vmatpush.msra.mxu0 %v316
    %1016 = vmatpush.msra.mxu0 %v312
    %1017 = vmatpush.msra.mxu0 %v308
    %1018 = vmatpush.msra.mxu0 %v304
    %1019 = vmatpush.msra.mxu0 %v300
    %1020 = vmatpush.msra.mxu0 %v296
    %1021 = vmatpush.msra.mxu0 %v292
    %1022 = vmatpush.msra.mxu0 %v288
    %1023 = vmatpush.msra.mxu0 %v284
    %1024 = vmatpush.msra.mxu0 %v280
    %1025 = vmatpush.msra.mxu0 %v276
    %1026 = vmatpush.msra.mxu0 %v272
    %1027 = vmatpush.msra.mxu0 %v268
    %1028 = vmatpush.msra.mxu0 %v264
    %1029 = vmatpush.msra.mxu0 %v260
    %1030 = vmatmul.f32.gmra.mxu0 %v751
    %v1031 = vpop.f32.mrf.mxu0
    %v1032 = vadd.f32 %v940, %v1031
    %1033 = vmatmul.f32.gmra.mxu0 %v752
    %v1034 = vpop.f32.mrf.mxu0
    %v1035 = vadd.f32 %v943, %v1034
    %1036 = vdwg.mxu0
    %1037 = vmatpush.msra.mxu0 %v321
    %1038 = vmatpush.msra.mxu0 %v317
    %1039 = vmatpush.msra.mxu0 %v313
    %1040 = vmatpush.msra.mxu0 %v309
    %1041 = vmatpush.msra.mxu0 %v305
    %1042 = vmatpush.msra.mxu0 %v301
    %1043 = vmatpush.msra.mxu0 %v297
    %1044 = vmatpush.msra.mxu0 %v293
    %1045 = vmatpush.msra.mxu0 %v289
    %1046 = vmatpush.msra.mxu0 %v285
    %1047 = vmatpush.msra.mxu0 %v281
    %1048 = vmatpush.msra.mxu0 %v277
    %1049 = vmatpush.msra.mxu0 %v273
    %1050 = vmatpush.msra.mxu0 %v269
    %1051 = vmatpush.msra.mxu0 %v265
    %1052 = vmatpush.msra.mxu0 %v261
    %1053 = vmatmul.f32.gmra.mxu0 %v751
    %v1054 = vpop.f32.mrf.mxu0
    %v1055 = vadd.f32 %v963, %v1054
    %1056 = vmatmul.f32.gmra.mxu0 %v752
    %v1057 = vpop.f32.mrf.mxu0
    %v1058 = vadd.f32 %v966, %v1057
    %1059 = vdwg.mxu0
    %1060 = vmatpush.msra.mxu0 %v322
    %1061 = vmatpush.msra.mxu0 %v318
    %1062 = vmatpush.msra.mxu0 %v314
    %1063 = vmatpush.msra.mxu0 %v310
    %1064 = vmatpush.msra.mxu0 %v306
    %1065 = vmatpush.msra.mxu0 %v302
    %1066 = vmatpush.msra.mxu0 %v298
    %1067 = vmatpush.msra.mxu0 %v294
    %1068 = vmatpush.msra.mxu0 %v290
    %1069 = vmatpush.msra.mxu0 %v286
    %1070 = vmatpush.msra.mxu0 %v282
    %1071 = vmatpush.msra.mxu0 %v278
    %1072 = vmatpush.msra.mxu0 %v274
    %1073 = vmatpush.msra.mxu0 %v270
    %1074 = vmatpush.msra.mxu0 %v266
    %1075 = vmatpush.msra.mxu0 %v262
    %1076 = vmatmul.f32.gmra.mxu0 %v751
    %v1077 = vpop.f32.mrf.mxu0
    %v1078 = vadd.f32 %v986, %v1077
    %1079 = vmatmul.f32.gmra.mxu0 %v752
    %v1080 = vpop.f32.mrf.mxu0
    %v1081 = vadd.f32 %v989, %v1080
    %1082 = vdwg.mxu0
    %v1083 = vadd.f32 %v1009, %v325
    %v1084 = vadd.f32 %v1032, %v326
    %v1085 = vadd.f32 %v1055, %v327
    %v1086 = vadd.f32 %v1078, %v328
    %v1087 = vadd.f32 %v1012, %v325
    %v1088 = vadd.f32 %v1035, %v326
    %v1089 = vadd.f32 %v1058, %v327
    %v1090 = vadd.f32 %v1081, %v328
    %v1091 = vmul.f32 %v1083, 0.5
    %v1092 = vmul.f32 %v1084, 0.5
    %v1093 = vmul.f32 %v1085, 0.5
    %v1094 = vmul.f32 %v1087, 0.5
    %v1095 = vmul.f32 %v1088, 0.5
    %v1096 = vmul.f32 %v1089, 0.5
    %v1097 = vtanh.pop %v1091
    %v1098 = vtanh.pop %v1092
    %v1099 = vtanh.pop %v1093
    %v1100 = vtanh.pop %v1094
    %v1101 = vtanh.pop %v1095
    %v1102 = vtanh.pop %v1096
    %v1103 = vmul.f32 %v1097, 0.5
    %v1104 = vmul.f32 %v1098, 0.5
    %v1105 = vmul.f32 %v1099, 0.5
    %v1106 = vmul.f32 %v1100, 0.5
    %v1107 = vmul.f32 %v1101, 0.5
    %v1108 = vmul.f32 %v1102, 0.5
    %v1109 = vadd.f32 %v1103, 0.5
    %v1110 = vadd.f32 %v1104, 0.5
    %v1111 = vadd.f32 %v1105, 0.5
    %v1112 = vadd.f32 %v1106, 0.5
    %v1113 = vadd.f32 %v1107, 0.5
    %v1114 = vadd.f32 %v1108, 0.5
    %v1115 = vtanh.pop %v1086
    %v1116 = vtanh.pop %v1090
    %v1117 = vmul.f32 %v1110, %v753
    %v1118 = vmul.f32 %v1113, %v754
    %v1119 = vmul.f32 %v1109, %v1115
    %v1120 = vmul.f32 %v1112, %v1116
    %v1121 = vadd.f32 %v1117, %v1119
    %v1122 = vadd.f32 %v1118, %v1120
    %v1123 = vtanh.pop %v1121
    %v1124 = vtanh.pop %v1122
    %v1125 = vmul.f32 %v1111, %v1123
    %v1126 = vmul.f32 %v1114, %v1124
    %s1127 = scalar_lea.vmem [#allocation2], 64
    %v1128 = vld [vmem:[%s1127] sm:$0xff]
    %v1129 = vld [vmem:[%s1127 + $0x8] sm:$0xff]
    %v1130 = vld [vmem:[%s1127 + $0x10] sm:$0xff]
    %v1131 = vld [vmem:[%s1127 + $0x18] sm:$0xff]
    %v1132 = vld [vmem:[%s1127 + $0x20] sm:$0xff]
    %v1133 = vld [vmem:[%s1127 + $0x28] sm:$0xff]
    %v1134 = vld [vmem:[%s1127 + $0x30] sm:$0xff]
    %v1135 = vld [vmem:[%s1127 + $0x38] sm:$0xff]
    %1136 = vmatpush.msra.mxu0 %v191
    %1137 = vmatpush.msra.mxu0 %v187
    %1138 = vmatpush.msra.mxu0 %v183
    %1139 = vmatpush.msra.mxu0 %v179
    %1140 = vmatpush.msra.mxu0 %v175
    %1141 = vmatpush.msra.mxu0 %v171
    %1142 = vmatpush.msra.mxu0 %v167
    %1143 = vmatpush.msra.mxu0 %v163
    %1144 = vmatpush.msra.mxu0 %v159
    %1145 = vmatpush.msra.mxu0 %v155
    %1146 = vmatpush.msra.mxu0 %v151
    %1147 = vmatpush.msra.mxu0 %v147
    %1148 = vmatpush.msra.mxu0 %v143
    %1149 = vmatpush.msra.mxu0 %v139
    %1150 = vmatpush.msra.mxu0 %v135
    %1151 = vmatpush.msra.mxu0 %v131
    %1152 = vmatmul.f32.gmra.mxu0 %v897
    %v1153 = vpop.f32.mrf.mxu0
    %v1154 = vadd.f32 0.0, %v1153
    %1155 = vmatmul.f32.gmra.mxu0 %v898
    %v1156 = vpop.f32.mrf.mxu0
    %v1157 = vadd.f32 0.0, %v1156
    %1158 = vdwg.mxu0
    %1159 = vmatpush.msra.mxu0 %v192
    %1160 = vmatpush.msra.mxu0 %v188
    %1161 = vmatpush.msra.mxu0 %v184
    %1162 = vmatpush.msra.mxu0 %v180
    %1163 = vmatpush.msra.mxu0 %v176
    %1164 = vmatpush.msra.mxu0 %v172
    %1165 = vmatpush.msra.mxu0 %v168
    %1166 = vmatpush.msra.mxu0 %v164
    %1167 = vmatpush.msra.mxu0 %v160
    %1168 = vmatpush.msra.mxu0 %v156
    %1169 = vmatpush.msra.mxu0 %v152
    %1170 = vmatpush.msra.mxu0 %v148
    %1171 = vmatpush.msra.mxu0 %v144
    %1172 = vmatpush.msra.mxu0 %v140
    %1173 = vmatpush.msra.mxu0 %v136
    %1174 = vmatpush.msra.mxu0 %v132
    %1175 = vmatmul.f32.gmra.mxu0 %v897
    %v1176 = vpop.f32.mrf.mxu0
    %v1177 = vadd.f32 0.0, %v1176
    %1178 = vmatmul.f32.gmra.mxu0 %v898
    %v1179 = vpop.f32.mrf.mxu0
    %v1180 = vadd.f32 0.0, %v1179
    %1181 = vdwg.mxu0
    %1182 = vmatpush.msra.mxu0 %v193
    %1183 = vmatpush.msra.mxu0 %v189
    %1184 = vmatpush.msra.mxu0 %v185
    %1185 = vmatpush.msra.mxu0 %v181
    %1186 = vmatpush.msra.mxu0 %v177
    %1187 = vmatpush.msra.mxu0 %v173
    %1188 = vmatpush.msra.mxu0 %v169
    %1189 = vmatpush.msra.mxu0 %v165
    %1190 = vmatpush.msra.mxu0 %v161
    %1191 = vmatpush.msra.mxu0 %v157
    %1192 = vmatpush.msra.mxu0 %v153
    %1193 = vmatpush.msra.mxu0 %v149
    %1194 = vmatpush.msra.mxu0 %v145
    %1195 = vmatpush.msra.mxu0 %v141
    %1196 = vmatpush.msra.mxu0 %v137
    %1197 = vmatpush.msra.mxu0 %v133
    %1198 = vmatmul.f32.gmra.mxu0 %v897
    %v1199 = vpop.f32.mrf.mxu0
    %v1200 = vadd.f32 0.0, %v1199
    %1201 = vmatmul.f32.gmra.mxu0 %v898
    %v1202 = vpop.f32.mrf.mxu0
    %v1203 = vadd.f32 0.0, %v1202
    %1204 = vdwg.mxu0
    %1205 = vmatpush.msra.mxu0 %v194
    %1206 = vmatpush.msra.mxu0 %v190
    %1207 = vmatpush.msra.mxu0 %v186
    %1208 = vmatpush.msra.mxu0 %v182
    %1209 = vmatpush.msra.mxu0 %v178
    %1210 = vmatpush.msra.mxu0 %v174
    %1211 = vmatpush.msra.mxu0 %v170
    %1212 = vmatpush.msra.mxu0 %v166
    %1213 = vmatpush.msra.mxu0 %v162
    %1214 = vmatpush.msra.mxu0 %v158
    %1215 = vmatpush.msra.mxu0 %v154
    %1216 = vmatpush.msra.mxu0 %v150
    %1217 = vmatpush.msra.mxu0 %v146
    %1218 = vmatpush.msra.mxu0 %v142
    %1219 = vmatpush.msra.mxu0 %v138
    %1220 = vmatpush.msra.mxu0 %v134
    %1221 = vmatmul.f32.gmra.mxu0 %v897
    %v1222 = vpop.f32.mrf.mxu0
    %v1223 = vadd.f32 0.0, %v1222
    %1224 = vmatmul.f32.gmra.mxu0 %v898
    %v1225 = vpop.f32.mrf.mxu0
    %v1226 = vadd.f32 0.0, %v1225
    %1227 = vdwg.mxu0
    %v1228 = vadd.f32 %v1128, %v1154
    %v1229 = vadd.f32 %v1129, %v1177
    %v1230 = vadd.f32 %v1130, %v1200
    %v1231 = vadd.f32 %v1131, %v1223
    %v1232 = vadd.f32 %v1132, %v1157
    %v1233 = vadd.f32 %v1133, %v1180
    %v1234 = vadd.f32 %v1134, %v1203
    %v1235 = vadd.f32 %v1135, %v1226
    %v1236 = vmul.f32 %v1228, 0.5
    %v1237 = vmul.f32 %v1229, 0.5
    %v1238 = vmul.f32 %v1230, 0.5
    %v1239 = vmul.f32 %v1232, 0.5
    %v1240 = vmul.f32 %v1233, 0.5
    %v1241 = vmul.f32 %v1234, 0.5
    %v1242 = vtanh.pop %v1236
    %v1243 = vtanh.pop %v1237
    %v1244 = vtanh.pop %v1238
    %v1245 = vtanh.pop %v1239
    %v1246 = vtanh.pop %v1240
    %v1247 = vtanh.pop %v1241
    %v1248 = vmul.f32 %v1242, 0.5
    %v1249 = vmul.f32 %v1243, 0.5
    %v1250 = vmul.f32 %v1244, 0.5
    %v1251 = vmul.f32 %v1245, 0.5
    %v1252 = vmul.f32 %v1246, 0.5
    %v1253 = vmul.f32 %v1247, 0.5
    %v1254 = vadd.f32 %v1248, 0.5
    %v1255 = vadd.f32 %v1249, 0.5
    %v1256 = vadd.f32 %v1250, 0.5
    %v1257 = vadd.f32 %v1251, 0.5
    %v1258 = vadd.f32 %v1252, 0.5
    %v1259 = vadd.f32 %v1253, 0.5
    %v1260 = vtanh.pop %v1231
    %v1261 = vtanh.pop %v1235
    %v1262 = vmul.f32 %v1255, %v893
    %v1263 = vmul.f32 %v1258, %v894
    %v1264 = vmul.f32 %v1254, %v1260
    %v1265 = vmul.f32 %v1257, %v1261
    %v1266 = vadd.f32 %v1262, %v1264
    %v1267 = vadd.f32 %v1263, %v1265
    %v1268 = vtanh.pop %v1266
    %v1269 = vtanh.pop %v1267
    %v1270 = vmul.f32 %v1256, %v1268
    %v1271 = vmul.f32 %v1259, %v1269
    %1272 = vmatpush.msra.mxu0 %v255
    %1273 = vmatpush.msra.mxu0 %v251
    %1274 = vmatpush.msra.mxu0 %v247
    %1275 = vmatpush.msra.mxu0 %v243
    %1276 = vmatpush.msra.mxu0 %v239
    %1277 = vmatpush.msra.mxu0 %v235
    %1278 = vmatpush.msra.mxu0 %v231
    %1279 = vmatpush.msra.mxu0 %v227
    %1280 = vmatpush.msra.mxu0 %v223
    %1281 = vmatpush.msra.mxu0 %v219
    %1282 = vmatpush.msra.mxu0 %v215
    %1283 = vmatpush.msra.mxu0 %v211
    %1284 = vmatpush.msra.mxu0 %v207
    %1285 = vmatpush.msra.mxu0 %v203
    %1286 = vmatpush.msra.mxu0 %v199
    %1287 = vmatpush.msra.mxu0 %v195
    %1288 = vmatmul.f32.gmra.mxu0 %v1270
    %v1289 = vpop.f32.mrf.mxu0
    %v1290 = vadd.f32 0.0, %v1289
    %1291 = vmatmul.f32.gmra.mxu0 %v1271
    %v1292 = vpop.f32.mrf.mxu0
    %v1293 = vadd.f32 0.0, %v1292
    %1294 = vdwg.mxu0
    %1295 = vmatpush.msra.mxu0 %v256
    %1296 = vmatpush.msra.mxu0 %v252
    %1297 = vmatpush.msra.mxu0 %v248
    %1298 = vmatpush.msra.mxu0 %v244
    %1299 = vmatpush.msra.mxu0 %v240
    %1300 = vmatpush.msra.mxu0 %v236
    %1301 = vmatpush.msra.mxu0 %v232
    %1302 = vmatpush.msra.mxu0 %v228
    %1303 = vmatpush.msra.mxu0 %v224
    %1304 = vmatpush.msra.mxu0 %v220
    %1305 = vmatpush.msra.mxu0 %v216
    %1306 = vmatpush.msra.mxu0 %v212
    %1307 = vmatpush.msra.mxu0 %v208
    %1308 = vmatpush.msra.mxu0 %v204
    %1309 = vmatpush.msra.mxu0 %v200
    %1310 = vmatpush.msra.mxu0 %v196
    %1311 = vmatmul.f32.gmra.mxu0 %v1270
    %v1312 = vpop.f32.mrf.mxu0
    %v1313 = vadd.f32 0.0, %v1312
    %1314 = vmatmul.f32.gmra.mxu0 %v1271
    %v1315 = vpop.f32.mrf.mxu0
    %v1316 = vadd.f32 0.0, %v1315
    %1317 = vdwg.mxu0
    %1318 = vmatpush.msra.mxu0 %v257
    %1319 = vmatpush.msra.mxu0 %v253
    %1320 = vmatpush.msra.mxu0 %v249
    %1321 = vmatpush.msra.mxu0 %v245
    %1322 = vmatpush.msra.mxu0 %v241
    %1323 = vmatpush.msra.mxu0 %v237
    %1324 = vmatpush.msra.mxu0 %v233
    %1325 = vmatpush.msra.mxu0 %v229
    %1326 = vmatpush.msra.mxu0 %v225
    %1327 = vmatpush.msra.mxu0 %v221
    %1328 = vmatpush.msra.mxu0 %v217
    %1329 = vmatpush.msra.mxu0 %v213
    %1330 = vmatpush.msra.mxu0 %v209
    %1331 = vmatpush.msra.mxu0 %v205
    %1332 = vmatpush.msra.mxu0 %v201
    %1333 = vmatpush.msra.mxu0 %v197
    %1334 = vmatmul.f32.gmra.mxu0 %v1270
    %v1335 = vpop.f32.mrf.mxu0
    %v1336 = vadd.f32 0.0, %v1335
    %1337 = vmatmul.f32.gmra.mxu0 %v1271
    %v1338 = vpop.f32.mrf.mxu0
    %v1339 = vadd.f32 0.0, %v1338
    %1340 = vdwg.mxu0
    %1341 = vmatpush.msra.mxu0 %v258
    %1342 = vmatpush.msra.mxu0 %v254
    %1343 = vmatpush.msra.mxu0 %v250
    %1344 = vmatpush.msra.mxu0 %v246
    %1345 = vmatpush.msra.mxu0 %v242
    %1346 = vmatpush.msra.mxu0 %v238
    %1347 = vmatpush.msra.mxu0 %v234
    %1348 = vmatpush.msra.mxu0 %v230
    %1349 = vmatpush.msra.mxu0 %v226
    %1350 = vmatpush.msra.mxu0 %v222
    %1351 = vmatpush.msra.mxu0 %v218
    %1352 = vmatpush.msra.mxu0 %v214
    %1353 = vmatpush.msra.mxu0 %v210
    %1354 = vmatpush.msra.mxu0 %v206
    %1355 = vmatpush.msra.mxu0 %v202
    %1356 = vmatpush.msra.mxu0 %v198
    %1357 = vmatmul.f32.gmra.mxu0 %v1270
    %v1358 = vpop.f32.mrf.mxu0
    %v1359 = vadd.f32 0.0, %v1358
    %1360 = vmatmul.f32.gmra.mxu0 %v1271
    %v1361 = vpop.f32.mrf.mxu0
    %v1362 = vadd.f32 0.0, %v1361
    %1363 = vdwg.mxu0
    %1364 = vmatpush.msra.mxu0 %v319
    %1365 = vmatpush.msra.mxu0 %v315
    %1366 = vmatpush.msra.mxu0 %v311
    %1367 = vmatpush.msra.mxu0 %v307
    %1368 = vmatpush.msra.mxu0 %v303
    %1369 = vmatpush.msra.mxu0 %v299
    %1370 = vmatpush.msra.mxu0 %v295
    %1371 = vmatpush.msra.mxu0 %v291
    %1372 = vmatpush.msra.mxu0 %v287
    %1373 = vmatpush.msra.mxu0 %v283
    %1374 = vmatpush.msra.mxu0 %v279
    %1375 = vmatpush.msra.mxu0 %v275
    %1376 = vmatpush.msra.mxu0 %v271
    %1377 = vmatpush.msra.mxu0 %v267
    %1378 = vmatpush.msra.mxu0 %v263
    %1379 = vmatpush.msra.mxu0 %v259
    %1380 = vmatmul.f32.gmra.mxu0 %v1125
    %v1381 = vpop.f32.mrf.mxu0
    %v1382 = vadd.f32 %v1290, %v1381
    %1383 = vmatmul.f32.gmra.mxu0 %v1126
    %v1384 = vpop.f32.mrf.mxu0
    %v1385 = vadd.f32 %v1293, %v1384
    %1386 = vdwg.mxu0
    %1387 = vmatpush.msra.mxu0 %v320
    %1388 = vmatpush.msra.mxu0 %v316
    %1389 = vmatpush.msra.mxu0 %v312
    %1390 = vmatpush.msra.mxu0 %v308
    %1391 = vmatpush.msra.mxu0 %v304
    %1392 = vmatpush.msra.mxu0 %v300
    %1393 = vmatpush.msra.mxu0 %v296
    %1394 = vmatpush.msra.mxu0 %v292
    %1395 = vmatpush.msra.mxu0 %v288
    %1396 = vmatpush.msra.mxu0 %v284
    %1397 = vmatpush.msra.mxu0 %v280
    %1398 = vmatpush.msra.mxu0 %v276
    %1399 = vmatpush.msra.mxu0 %v272
    %1400 = vmatpush.msra.mxu0 %v268
    %1401 = vmatpush.msra.mxu0 %v264
    %1402 = vmatpush.msra.mxu0 %v260
    %1403 = vmatmul.f32.gmra.mxu0 %v1125
    %v1404 = vpop.f32.mrf.mxu0
    %v1405 = vadd.f32 %v1313, %v1404
    %1406 = vmatmul.f32.gmra.mxu0 %v1126
    %v1407 = vpop.f32.mrf.mxu0
    %v1408 = vadd.f32 %v1316, %v1407
    %1409 = vdwg.mxu0
    %1410 = vmatpush.msra.mxu0 %v321
    %1411 = vmatpush.msra.mxu0 %v317
    %1412 = vmatpush.msra.mxu0 %v313
    %1413 = vmatpush.msra.mxu0 %v309
    %1414 = vmatpush.msra.mxu0 %v305
    %1415 = vmatpush.msra.mxu0 %v301
    %1416 = vmatpush.msra.mxu0 %v297
    %1417 = vmatpush.msra.mxu0 %v293
    %1418 = vmatpush.msra.mxu0 %v289
    %1419 = vmatpush.msra.mxu0 %v285
    %1420 = vmatpush.msra.mxu0 %v281
    %1421 = vmatpush.msra.mxu0 %v277
    %1422 = vmatpush.msra.mxu0 %v273
    %1423 = vmatpush.msra.mxu0 %v269
    %1424 = vmatpush.msra.mxu0 %v265
    %1425 = vmatpush.msra.mxu0 %v261
    %1426 = vmatmul.f32.gmra.mxu0 %v1125
    %v1427 = vpop.f32.mrf.mxu0
    %v1428 = vadd.f32 %v1336, %v1427
    %1429 = vmatmul.f32.gmra.mxu0 %v1126
    %v1430 = vpop.f32.mrf.mxu0
    %v1431 = vadd.f32 %v1339, %v1430
    %1432 = vdwg.mxu0
    %1433 = vmatpush.msra.mxu0 %v322
    %1434 = vmatpush.msra.mxu0 %v318
    %1435 = vmatpush.msra.mxu0 %v314
    %1436 = vmatpush.msra.mxu0 %v310
    %1437 = vmatpush.msra.mxu0 %v306
    %1438 = vmatpush.msra.mxu0 %v302
    %1439 = vmatpush.msra.mxu0 %v298
    %1440 = vmatpush.msra.mxu0 %v294
    %1441 = vmatpush.msra.mxu0 %v290
    %1442 = vmatpush.msra.mxu0 %v286
    %1443 = vmatpush.msra.mxu0 %v282
    %1444 = vmatpush.msra.mxu0 %v278
    %1445 = vmatpush.msra.mxu0 %v274
    %1446 = vmatpush.msra.mxu0 %v270
    %1447 = vmatpush.msra.mxu0 %v266
    %1448 = vmatpush.msra.mxu0 %v262
    %1449 = vmatmul.f32.gmra.mxu0 %v1125
    %v1450 = vpop.f32.mrf.mxu0
    %v1451 = vadd.f32 %v1359, %v1450
    %1452 = vmatmul.f32.gmra.mxu0 %v1126
    %v1453 = vpop.f32.mrf.mxu0
    %v1454 = vadd.f32 %v1362, %v1453
    %1455 = vdwg.mxu0
    %v1456 = vadd.f32 %v1382, %v325
    %v1457 = vadd.f32 %v1405, %v326
    %v1458 = vadd.f32 %v1428, %v327
    %v1459 = vadd.f32 %v1451, %v328
    %v1460 = vadd.f32 %v1385, %v325
    %v1461 = vadd.f32 %v1408, %v326
    %v1462 = vadd.f32 %v1431, %v327
    %v1463 = vadd.f32 %v1454, %v328
    %v1464 = vmul.f32 %v1456, 0.5
    %v1465 = vmul.f32 %v1457, 0.5
    %v1466 = vmul.f32 %v1458, 0.5
    %v1467 = vmul.f32 %v1460, 0.5
    %v1468 = vmul.f32 %v1461, 0.5
    %v1469 = vmul.f32 %v1462, 0.5
    %v1470 = vtanh.pop %v1464
    %v1471 = vtanh.pop %v1465
    %v1472 = vtanh.pop %v1466
    %v1473 = vtanh.pop %v1467
    %v1474 = vtanh.pop %v1468
    %v1475 = vtanh.pop %v1469
    %v1476 = vmul.f32 %v1470, 0.5
    %v1477 = vmul.f32 %v1471, 0.5
    %v1478 = vmul.f32 %v1472, 0.5
    %v1479 = vmul.f32 %v1473, 0.5
    %v1480 = vmul.f32 %v1474, 0.5
    %v1481 = vmul.f32 %v1475, 0.5
    %v1482 = vadd.f32 %v1476, 0.5
    %v1483 = vadd.f32 %v1477, 0.5
    %v1484 = vadd.f32 %v1478, 0.5
    %v1485 = vadd.f32 %v1479, 0.5
    %v1486 = vadd.f32 %v1480, 0.5
    %v1487 = vadd.f32 %v1481, 0.5
    %v1488 = vtanh.pop %v1459
    %v1489 = vtanh.pop %v1463
    %v1490 = vmul.f32 %v1483, %v1121
    %v1491 = vmul.f32 %v1486, %v1122
    %v1492 = vmul.f32 %v1482, %v1488
    %v1493 = vmul.f32 %v1485, %v1489
    %v1494 = vadd.f32 %v1490, %v1492
    %v1495 = vadd.f32 %v1491, %v1493
    %v1496 = vtanh.pop %v1494
    %v1497 = vtanh.pop %v1495
    %v1498 = vmul.f32 %v1484, %v1496
    %v1499 = vmul.f32 %v1487, %v1497
    %s1500 = scalar_lea.vmem [#allocation2], 128
    %v1501 = vld [vmem:[%s1500] sm:$0xff]
    %v1502 = vld [vmem:[%s1500 + $0x8] sm:$0xff]
    %v1503 = vld [vmem:[%s1500 + $0x10] sm:$0xff]
    %v1504 = vld [vmem:[%s1500 + $0x18] sm:$0xff]
    %v1505 = vld [vmem:[%s1500 + $0x20] sm:$0xff]
    %v1506 = vld [vmem:[%s1500 + $0x28] sm:$0xff]
    %v1507 = vld [vmem:[%s1500 + $0x30] sm:$0xff]
    %v1508 = vld [vmem:[%s1500 + $0x38] sm:$0xff]
    %1509 = vmatpush.msra.mxu0 %v191
    %1510 = vmatpush.msra.mxu0 %v187
    %1511 = vmatpush.msra.mxu0 %v183
    %1512 = vmatpush.msra.mxu0 %v179
    %1513 = vmatpush.msra.mxu0 %v175
    %1514 = vmatpush.msra.mxu0 %v171
    %1515 = vmatpush.msra.mxu0 %v167
    %1516 = vmatpush.msra.mxu0 %v163
    %1517 = vmatpush.msra.mxu0 %v159
    %1518 = vmatpush.msra.mxu0 %v155
    %1519 = vmatpush.msra.mxu0 %v151
    %1520 = vmatpush.msra.mxu0 %v147
    %1521 = vmatpush.msra.mxu0 %v143
    %1522 = vmatpush.msra.mxu0 %v139
    %1523 = vmatpush.msra.mxu0 %v135
    %1524 = vmatpush.msra.mxu0 %v131
    %1525 = vmatmul.f32.gmra.mxu0 %v1270
    %v1526 = vpop.f32.mrf.mxu0
    %v1527 = vadd.f32 0.0, %v1526
    %1528 = vmatmul.f32.gmra.mxu0 %v1271
    %v1529 = vpop.f32.mrf.mxu0
    %v1530 = vadd.f32 0.0, %v1529
    %1531 = vdwg.mxu0
    %1532 = vmatpush.msra.mxu0 %v192
    %1533 = vmatpush.msra.mxu0 %v188
    %1534 = vmatpush.msra.mxu0 %v184
    %1535 = vmatpush.msra.mxu0 %v180
    %1536 = vmatpush.msra.mxu0 %v176
    %1537 = vmatpush.msra.mxu0 %v172
    %1538 = vmatpush.msra.mxu0 %v168
    %1539 = vmatpush.msra.mxu0 %v164
    %1540 = vmatpush.msra.mxu0 %v160
    %1541 = vmatpush.msra.mxu0 %v156
    %1542 = vmatpush.msra.mxu0 %v152
    %1543 = vmatpush.msra.mxu0 %v148
    %1544 = vmatpush.msra.mxu0 %v144
    %1545 = vmatpush.msra.mxu0 %v140
    %1546 = vmatpush.msra.mxu0 %v136
    %1547 = vmatpush.msra.mxu0 %v132
    %1548 = vmatmul.f32.gmra.mxu0 %v1270
    %v1549 = vpop.f32.mrf.mxu0
    %v1550 = vadd.f32 0.0, %v1549
    %1551 = vmatmul.f32.gmra.mxu0 %v1271
    %v1552 = vpop.f32.mrf.mxu0
    %v1553 = vadd.f32 0.0, %v1552
    %1554 = vdwg.mxu0
    %1555 = vmatpush.msra.mxu0 %v193
    %1556 = vmatpush.msra.mxu0 %v189
    %1557 = vmatpush.msra.mxu0 %v185
    %1558 = vmatpush.msra.mxu0 %v181
    %1559 = vmatpush.msra.mxu0 %v177
    %1560 = vmatpush.msra.mxu0 %v173
    %1561 = vmatpush.msra.mxu0 %v169
    %1562 = vmatpush.msra.mxu0 %v165
    %1563 = vmatpush.msra.mxu0 %v161
    %1564 = vmatpush.msra.mxu0 %v157
    %1565 = vmatpush.msra.mxu0 %v153
    %1566 = vmatpush.msra.mxu0 %v149
    %1567 = vmatpush.msra.mxu0 %v145
    %1568 = vmatpush.msra.mxu0 %v141
    %1569 = vmatpush.msra.mxu0 %v137
    %1570 = vmatpush.msra.mxu0 %v133
    %1571 = vmatmul.f32.gmra.mxu0 %v1270
    %v1572 = vpop.f32.mrf.mxu0
    %v1573 = vadd.f32 0.0, %v1572
    %1574 = vmatmul.f32.gmra.mxu0 %v1271
    %v1575 = vpop.f32.mrf.mxu0
    %v1576 = vadd.f32 0.0, %v1575
    %1577 = vdwg.mxu0
    %1578 = vmatpush.msra.mxu0 %v194
    %1579 = vmatpush.msra.mxu0 %v190
    %1580 = vmatpush.msra.mxu0 %v186
    %1581 = vmatpush.msra.mxu0 %v182
    %1582 = vmatpush.msra.mxu0 %v178
    %1583 = vmatpush.msra.mxu0 %v174
    %1584 = vmatpush.msra.mxu0 %v170
    %1585 = vmatpush.msra.mxu0 %v166
    %1586 = vmatpush.msra.mxu0 %v162
    %1587 = vmatpush.msra.mxu0 %v158
    %1588 = vmatpush.msra.mxu0 %v154
    %1589 = vmatpush.msra.mxu0 %v150
    %1590 = vmatpush.msra.mxu0 %v146
    %1591 = vmatpush.msra.mxu0 %v142
    %1592 = vmatpush.msra.mxu0 %v138
    %1593 = vmatpush.msra.mxu0 %v134
    %1594 = vmatmul.f32.gmra.mxu0 %v1270
    %v1595 = vpop.f32.mrf.mxu0
    %v1596 = vadd.f32 0.0, %v1595
    %1597 = vmatmul.f32.gmra.mxu0 %v1271
    %v1598 = vpop.f32.mrf.mxu0
    %v1599 = vadd.f32 0.0, %v1598
    %1600 = vdwg.mxu0
    %v1601 = vadd.f32 %v1501, %v1527
    %v1602 = vadd.f32 %v1502, %v1550
    %v1603 = vadd.f32 %v1503, %v1573
    %v1604 = vadd.f32 %v1504, %v1596
    %v1605 = vadd.f32 %v1505, %v1530
    %v1606 = vadd.f32 %v1506, %v1553
    %v1607 = vadd.f32 %v1507, %v1576
    %v1608 = vadd.f32 %v1508, %v1599
    %v1609 = vmul.f32 %v1601, 0.5
    %v1610 = vmul.f32 %v1602, 0.5
    %v1611 = vmul.f32 %v1603, 0.5
    %v1612 = vmul.f32 %v1605, 0.5
    %v1613 = vmul.f32 %v1606, 0.5
    %v1614 = vmul.f32 %v1607, 0.5
    %v1615 = vtanh.pop %v1609
    %v1616 = vtanh.pop %v1610
    %v1617 = vtanh.pop %v1611
    %v1618 = vtanh.pop %v1612
    %v1619 = vtanh.pop %v1613
    %v1620 = vtanh.pop %v1614
    %v1621 = vmul.f32 %v1615, 0.5
    %v1622 = vmul.f32 %v1616, 0.5
    %v1623 = vmul.f32 %v1617, 0.5
    %v1624 = vmul.f32 %v1618, 0.5
    %v1625 = vmul.f32 %v1619, 0.5
    %v1626 = vmul.f32 %v1620, 0.5
    %v1627 = vadd.f32 %v1621, 0.5
    %v1628 = vadd.f32 %v1622, 0.5
    %v1629 = vadd.f32 %v1623, 0.5
    %v1630 = vadd.f32 %v1624, 0.5
    %v1631 = vadd.f32 %v1625, 0.5
    %v1632 = vadd.f32 %v1626, 0.5
    %v1633 = vtanh.pop %v1604
    %v1634 = vtanh.pop %v1608
    %v1635 = vmul.f32 %v1628, %v1266
    %v1636 = vmul.f32 %v1631, %v1267
    %v1637 = vmul.f32 %v1627, %v1633
    %v1638 = vmul.f32 %v1630, %v1634
    %v1639 = vadd.f32 %v1635, %v1637
    %v1640 = vadd.f32 %v1636, %v1638
    %v1641 = vtanh.pop %v1639
    %v1642 = vtanh.pop %v1640
    %v1643 = vmul.f32 %v1629, %v1641
    %v1644 = vmul.f32 %v1632, %v1642
    %1645 = vmatpush.msra.mxu0 %v255
    %1646 = vmatpush.msra.mxu0 %v251
    %1647 = vmatpush.msra.mxu0 %v247
    %1648 = vmatpush.msra.mxu0 %v243
    %1649 = vmatpush.msra.mxu0 %v239
    %1650 = vmatpush.msra.mxu0 %v235
    %1651 = vmatpush.msra.mxu0 %v231
    %1652 = vmatpush.msra.mxu0 %v227
    %1653 = vmatpush.msra.mxu0 %v223
    %1654 = vmatpush.msra.mxu0 %v219
    %1655 = vmatpush.msra.mxu0 %v215
    %1656 = vmatpush.msra.mxu0 %v211
    %1657 = vmatpush.msra.mxu0 %v207
    %1658 = vmatpush.msra.mxu0 %v203
    %1659 = vmatpush.msra.mxu0 %v199
    %1660 = vmatpush.msra.mxu0 %v195
    %1661 = vmatmul.f32.gmra.mxu0 %v1643
    %v1662 = vpop.f32.mrf.mxu0
    %v1663 = vadd.f32 0.0, %v1662
    %1664 = vmatmul.f32.gmra.mxu0 %v1644
    %v1665 = vpop.f32.mrf.mxu0
    %v1666 = vadd.f32 0.0, %v1665
    %1667 = vdwg.mxu0
    %1668 = vmatpush.msra.mxu0 %v256
    %1669 = vmatpush.msra.mxu0 %v252
    %1670 = vmatpush.msra.mxu0 %v248
    %1671 = vmatpush.msra.mxu0 %v244
    %1672 = vmatpush.msra.mxu0 %v240
    %1673 = vmatpush.msra.mxu0 %v236
    %1674 = vmatpush.msra.mxu0 %v232
    %1675 = vmatpush.msra.mxu0 %v228
    %1676 = vmatpush.msra.mxu0 %v224
    %1677 = vmatpush.msra.mxu0 %v220
    %1678 = vmatpush.msra.mxu0 %v216
    %1679 = vmatpush.msra.mxu0 %v212
    %1680 = vmatpush.msra.mxu0 %v208
    %1681 = vmatpush.msra.mxu0 %v204
    %1682 = vmatpush.msra.mxu0 %v200
    %1683 = vmatpush.msra.mxu0 %v196
    %1684 = vmatmul.f32.gmra.mxu0 %v1643
    %v1685 = vpop.f32.mrf.mxu0
    %v1686 = vadd.f32 0.0, %v1685
    %1687 = vmatmul.f32.gmra.mxu0 %v1644
    %v1688 = vpop.f32.mrf.mxu0
    %v1689 = vadd.f32 0.0, %v1688
    %1690 = vdwg.mxu0
    %1691 = vmatpush.msra.mxu0 %v257
    %1692 = vmatpush.msra.mxu0 %v253
    %1693 = vmatpush.msra.mxu0 %v249
    %1694 = vmatpush.msra.mxu0 %v245
    %1695 = vmatpush.msra.mxu0 %v241
    %1696 = vmatpush.msra.mxu0 %v237
    %1697 = vmatpush.msra.mxu0 %v233
    %1698 = vmatpush.msra.mxu0 %v229
    %1699 = vmatpush.msra.mxu0 %v225
    %1700 = vmatpush.msra.mxu0 %v221
    %1701 = vmatpush.msra.mxu0 %v217
    %1702 = vmatpush.msra.mxu0 %v213
    %1703 = vmatpush.msra.mxu0 %v209
    %1704 = vmatpush.msra.mxu0 %v205
    %1705 = vmatpush.msra.mxu0 %v201
    %1706 = vmatpush.msra.mxu0 %v197
    %1707 = vmatmul.f32.gmra.mxu0 %v1643
    %v1708 = vpop.f32.mrf.mxu0
    %v1709 = vadd.f32 0.0, %v1708
    %1710 = vmatmul.f32.gmra.mxu0 %v1644
    %v1711 = vpop.f32.mrf.mxu0
    %v1712 = vadd.f32 0.0, %v1711
    %1713 = vdwg.mxu0
    %1714 = vmatpush.msra.mxu0 %v258
    %1715 = vmatpush.msra.mxu0 %v254
    %1716 = vmatpush.msra.mxu0 %v250
    %1717 = vmatpush.msra.mxu0 %v246
    %1718 = vmatpush.msra.mxu0 %v242
    %1719 = vmatpush.msra.mxu0 %v238
    %1720 = vmatpush.msra.mxu0 %v234
    %1721 = vmatpush.msra.mxu0 %v230
    %1722 = vmatpush.msra.mxu0 %v226
    %1723 = vmatpush.msra.mxu0 %v222
    %1724 = vmatpush.msra.mxu0 %v218
    %1725 = vmatpush.msra.mxu0 %v214
    %1726 = vmatpush.msra.mxu0 %v210
    %1727 = vmatpush.msra.mxu0 %v206
    %1728 = vmatpush.msra.mxu0 %v202
    %1729 = vmatpush.msra.mxu0 %v198
    %1730 = vmatmul.f32.gmra.mxu0 %v1643
    %v1731 = vpop.f32.mrf.mxu0
    %v1732 = vadd.f32 0.0, %v1731
    %1733 = vmatmul.f32.gmra.mxu0 %v1644
    %v1734 = vpop.f32.mrf.mxu0
    %v1735 = vadd.f32 0.0, %v1734
    %1736 = vdwg.mxu0
    %1737 = vmatpush.msra.mxu0 %v319
    %1738 = vmatpush.msra.mxu0 %v315
    %1739 = vmatpush.msra.mxu0 %v311
    %1740 = vmatpush.msra.mxu0 %v307
    %1741 = vmatpush.msra.mxu0 %v303
    %1742 = vmatpush.msra.mxu0 %v299
    %1743 = vmatpush.msra.mxu0 %v295
    %1744 = vmatpush.msra.mxu0 %v291
    %1745 = vmatpush.msra.mxu0 %v287
    %1746 = vmatpush.msra.mxu0 %v283
    %1747 = vmatpush.msra.mxu0 %v279
    %1748 = vmatpush.msra.mxu0 %v275
    %1749 = vmatpush.msra.mxu0 %v271
    %1750 = vmatpush.msra.mxu0 %v267
    %1751 = vmatpush.msra.mxu0 %v263
    %1752 = vmatpush.msra.mxu0 %v259
    %1753 = vmatmul.f32.gmra.mxu0 %v1498
    %v1754 = vpop.f32.mrf.mxu0
    %v1755 = vadd.f32 %v1663, %v1754
    %1756 = vmatmul.f32.gmra.mxu0 %v1499
    %v1757 = vpop.f32.mrf.mxu0
    %v1758 = vadd.f32 %v1666, %v1757
    %1759 = vdwg.mxu0
    %1760 = vmatpush.msra.mxu0 %v320
    %1761 = vmatpush.msra.mxu0 %v316
    %1762 = vmatpush.msra.mxu0 %v312
    %1763 = vmatpush.msra.mxu0 %v308
    %1764 = vmatpush.msra.mxu0 %v304
    %1765 = vmatpush.msra.mxu0 %v300
    %1766 = vmatpush.msra.mxu0 %v296
    %1767 = vmatpush.msra.mxu0 %v292
    %1768 = vmatpush.msra.mxu0 %v288
    %1769 = vmatpush.msra.mxu0 %v284
    %1770 = vmatpush.msra.mxu0 %v280
    %1771 = vmatpush.msra.mxu0 %v276
    %1772 = vmatpush.msra.mxu0 %v272
    %1773 = vmatpush.msra.mxu0 %v268
    %1774 = vmatpush.msra.mxu0 %v264
    %1775 = vmatpush.msra.mxu0 %v260
    %1776 = vmatmul.f32.gmra.mxu0 %v1498
    %v1777 = vpop.f32.mrf.mxu0
    %v1778 = vadd.f32 %v1686, %v1777
    %1779 = vmatmul.f32.gmra.mxu0 %v1499
    %v1780 = vpop.f32.mrf.mxu0
    %v1781 = vadd.f32 %v1689, %v1780
    %1782 = vdwg.mxu0
    %1783 = vmatpush.msra.mxu0 %v321
    %1784 = vmatpush.msra.mxu0 %v317
    %1785 = vmatpush.msra.mxu0 %v313
    %1786 = vmatpush.msra.mxu0 %v309
    %1787 = vmatpush.msra.mxu0 %v305
    %1788 = vmatpush.msra.mxu0 %v301
    %1789 = vmatpush.msra.mxu0 %v297
    %1790 = vmatpush.msra.mxu0 %v293
    %1791 = vmatpush.msra.mxu0 %v289
    %1792 = vmatpush.msra.mxu0 %v285
    %1793 = vmatpush.msra.mxu0 %v281
    %1794 = vmatpush.msra.mxu0 %v277
    %1795 = vmatpush.msra.mxu0 %v273
    %1796 = vmatpush.msra.mxu0 %v269
    %1797 = vmatpush.msra.mxu0 %v265
    %1798 = vmatpush.msra.mxu0 %v261
    %1799 = vmatmul.f32.gmra.mxu0 %v1498
    %v1800 = vpop.f32.mrf.mxu0
    %v1801 = vadd.f32 %v1709, %v1800
    %1802 = vmatmul.f32.gmra.mxu0 %v1499
    %v1803 = vpop.f32.mrf.mxu0
    %v1804 = vadd.f32 %v1712, %v1803
    %1805 = vdwg.mxu0
    %1806 = vmatpush.msra.mxu0 %v322
    %1807 = vmatpush.msra.mxu0 %v318
    %1808 = vmatpush.msra.mxu0 %v314
    %1809 = vmatpush.msra.mxu0 %v310
    %1810 = vmatpush.msra.mxu0 %v306
    %1811 = vmatpush.msra.mxu0 %v302
    %1812 = vmatpush.msra.mxu0 %v298
    %1813 = vmatpush.msra.mxu0 %v294
    %1814 = vmatpush.msra.mxu0 %v290
    %1815 = vmatpush.msra.mxu0 %v286
    %1816 = vmatpush.msra.mxu0 %v282
    %1817 = vmatpush.msra.mxu0 %v278
    %1818 = vmatpush.msra.mxu0 %v274
    %1819 = vmatpush.msra.mxu0 %v270
    %1820 = vmatpush.msra.mxu0 %v266
    %1821 = vmatpush.msra.mxu0 %v262
    %1822 = vmatmul.f32.gmra.mxu0 %v1498
    %v1823 = vpop.f32.mrf.mxu0
    %v1824 = vadd.f32 %v1732, %v1823
    %1825 = vmatmul.f32.gmra.mxu0 %v1499
    %v1826 = vpop.f32.mrf.mxu0
    %v1827 = vadd.f32 %v1735, %v1826
    %1828 = vdwg.mxu0
    %v1829 = vadd.f32 %v1755, %v325
    %v1830 = vadd.f32 %v1778, %v326
    %v1831 = vadd.f32 %v1801, %v327
    %v1832 = vadd.f32 %v1824, %v328
    %v1833 = vadd.f32 %v1758, %v325
    %v1834 = vadd.f32 %v1781, %v326
    %v1835 = vadd.f32 %v1804, %v327
    %v1836 = vadd.f32 %v1827, %v328
    %v1837 = vmul.f32 %v1829, 0.5
    %v1838 = vmul.f32 %v1830, 0.5
    %v1839 = vmul.f32 %v1831, 0.5
    %v1840 = vmul.f32 %v1833, 0.5
    %v1841 = vmul.f32 %v1834, 0.5
    %v1842 = vmul.f32 %v1835, 0.5
    %v1843 = vtanh.pop %v1837
    %v1844 = vtanh.pop %v1838
    %v1845 = vtanh.pop %v1839
    %v1846 = vtanh.pop %v1840
    %v1847 = vtanh.pop %v1841
    %v1848 = vtanh.pop %v1842
    %v1849 = vmul.f32 %v1843, 0.5
    %v1850 = vmul.f32 %v1844, 0.5
    %v1851 = vmul.f32 %v1845, 0.5
    %v1852 = vmul.f32 %v1846, 0.5
    %v1853 = vmul.f32 %v1847, 0.5
    %v1854 = vmul.f32 %v1848, 0.5
    %v1855 = vadd.f32 %v1849, 0.5
    %v1856 = vadd.f32 %v1850, 0.5
    %v1857 = vadd.f32 %v1851, 0.5
    %v1858 = vadd.f32 %v1852, 0.5
    %v1859 = vadd.f32 %v1853, 0.5
    %v1860 = vadd.f32 %v1854, 0.5
    %v1861 = vtanh.pop %v1832
    %v1862 = vtanh.pop %v1836
    %v1863 = vmul.f32 %v1856, %v1494
    %v1864 = vmul.f32 %v1859, %v1495
    %v1865 = vmul.f32 %v1855, %v1861
    %v1866 = vmul.f32 %v1858, %v1862
    %v1867 = vadd.f32 %v1863, %v1865
    %v1868 = vadd.f32 %v1864, %v1866
    %v1869 = vtanh.pop %v1867
    %v1870 = vtanh.pop %v1868
    %v1871 = vmul.f32 %v1857, %v1869
    %v1872 = vmul.f32 %v1860, %v1870
    %s1873 = scalar_lea.vmem [#allocation2], 192
    %v1874 = vld [vmem:[%s1873] sm:$0xff]
    %v1875 = vld [vmem:[%s1873 + $0x8] sm:$0xff]
    %v1876 = vld [vmem:[%s1873 + $0x10] sm:$0xff]
    %v1877 = vld [vmem:[%s1873 + $0x18] sm:$0xff]
    %v1878 = vld [vmem:[%s1873 + $0x20] sm:$0xff]
    %v1879 = vld [vmem:[%s1873 + $0x28] sm:$0xff]
    %v1880 = vld [vmem:[%s1873 + $0x30] sm:$0xff]
    %v1881 = vld [vmem:[%s1873 + $0x38] sm:$0xff]
    %1882 = vmatpush.msra.mxu0 %v191
    %1883 = vmatpush.msra.mxu0 %v187
    %1884 = vmatpush.msra.mxu0 %v183
    %1885 = vmatpush.msra.mxu0 %v179
    %1886 = vmatpush.msra.mxu0 %v175
    %1887 = vmatpush.msra.mxu0 %v171
    %1888 = vmatpush.msra.mxu0 %v167
    %1889 = vmatpush.msra.mxu0 %v163
    %1890 = vmatpush.msra.mxu0 %v159
    %1891 = vmatpush.msra.mxu0 %v155
    %1892 = vmatpush.msra.mxu0 %v151
    %1893 = vmatpush.msra.mxu0 %v147
    %1894 = vmatpush.msra.mxu0 %v143
    %1895 = vmatpush.msra.mxu0 %v139
    %1896 = vmatpush.msra.mxu0 %v135
    %1897 = vmatpush.msra.mxu0 %v131
    %1898 = vmatmul.f32.gmra.mxu0 %v1643
    %v1899 = vpop.f32.mrf.mxu0
    %v1900 = vadd.f32 0.0, %v1899
    %1901 = vmatmul.f32.gmra.mxu0 %v1644
    %v1902 = vpop.f32.mrf.mxu0
    %v1903 = vadd.f32 0.0, %v1902
    %1904 = vdwg.mxu0
    %1905 = vmatpush.msra.mxu0 %v192
    %1906 = vmatpush.msra.mxu0 %v188
    %1907 = vmatpush.msra.mxu0 %v184
    %1908 = vmatpush.msra.mxu0 %v180
    %1909 = vmatpush.msra.mxu0 %v176
    %1910 = vmatpush.msra.mxu0 %v172
    %1911 = vmatpush.msra.mxu0 %v168
    %1912 = vmatpush.msra.mxu0 %v164
    %1913 = vmatpush.msra.mxu0 %v160
    %1914 = vmatpush.msra.mxu0 %v156
    %1915 = vmatpush.msra.mxu0 %v152
    %1916 = vmatpush.msra.mxu0 %v148
    %1917 = vmatpush.msra.mxu0 %v144
    %1918 = vmatpush.msra.mxu0 %v140
    %1919 = vmatpush.msra.mxu0 %v136
    %1920 = vmatpush.msra.mxu0 %v132
    %1921 = vmatmul.f32.gmra.mxu0 %v1643
    %v1922 = vpop.f32.mrf.mxu0
    %v1923 = vadd.f32 0.0, %v1922
    %1924 = vmatmul.f32.gmra.mxu0 %v1644
    %v1925 = vpop.f32.mrf.mxu0
    %v1926 = vadd.f32 0.0, %v1925
    %1927 = vdwg.mxu0
    %1928 = vmatpush.msra.mxu0 %v193
    %1929 = vmatpush.msra.mxu0 %v189
    %1930 = vmatpush.msra.mxu0 %v185
    %1931 = vmatpush.msra.mxu0 %v181
    %1932 = vmatpush.msra.mxu0 %v177
    %1933 = vmatpush.msra.mxu0 %v173
    %1934 = vmatpush.msra.mxu0 %v169
    %1935 = vmatpush.msra.mxu0 %v165
    %1936 = vmatpush.msra.mxu0 %v161
    %1937 = vmatpush.msra.mxu0 %v157
    %1938 = vmatpush.msra.mxu0 %v153
    %1939 = vmatpush.msra.mxu0 %v149
    %1940 = vmatpush.msra.mxu0 %v145
    %1941 = vmatpush.msra.mxu0 %v141
    %1942 = vmatpush.msra.mxu0 %v137
    %1943 = vmatpush.msra.mxu0 %v133
    %1944 = vmatmul.f32.gmra.mxu0 %v1643
    %v1945 = vpop.f32.mrf.mxu0
    %v1946 = vadd.f32 0.0, %v1945
    %1947 = vmatmul.f32.gmra.mxu0 %v1644
    %v1948 = vpop.f32.mrf.mxu0
    %v1949 = vadd.f32 0.0, %v1948
    %1950 = vdwg.mxu0
    %1951 = vmatpush.msra.mxu0 %v194
    %1952 = vmatpush.msra.mxu0 %v190
    %1953 = vmatpush.msra.mxu0 %v186
    %1954 = vmatpush.msra.mxu0 %v182
    %1955 = vmatpush.msra.mxu0 %v178
    %1956 = vmatpush.msra.mxu0 %v174
    %1957 = vmatpush.msra.mxu0 %v170
    %1958 = vmatpush.msra.mxu0 %v166
    %1959 = vmatpush.msra.mxu0 %v162
    %1960 = vmatpush.msra.mxu0 %v158
    %1961 = vmatpush.msra.mxu0 %v154
    %1962 = vmatpush.msra.mxu0 %v150
    %1963 = vmatpush.msra.mxu0 %v146
    %1964 = vmatpush.msra.mxu0 %v142
    %1965 = vmatpush.msra.mxu0 %v138
    %1966 = vmatpush.msra.mxu0 %v134
    %1967 = vmatmul.f32.gmra.mxu0 %v1643
    %v1968 = vpop.f32.mrf.mxu0
    %v1969 = vadd.f32 0.0, %v1968
    %1970 = vmatmul.f32.gmra.mxu0 %v1644
    %v1971 = vpop.f32.mrf.mxu0
    %v1972 = vadd.f32 0.0, %v1971
    %1973 = vdwg.mxu0
    %v1974 = vadd.f32 %v1874, %v1900
    %v1975 = vadd.f32 %v1875, %v1923
    %v1976 = vadd.f32 %v1876, %v1946
    %v1977 = vadd.f32 %v1877, %v1969
    %v1978 = vadd.f32 %v1878, %v1903
    %v1979 = vadd.f32 %v1879, %v1926
    %v1980 = vadd.f32 %v1880, %v1949
    %v1981 = vadd.f32 %v1881, %v1972
    %v1982 = vmul.f32 %v1974, 0.5
    %v1983 = vmul.f32 %v1975, 0.5
    %v1984 = vmul.f32 %v1976, 0.5
    %v1985 = vmul.f32 %v1978, 0.5
    %v1986 = vmul.f32 %v1979, 0.5
    %v1987 = vmul.f32 %v1980, 0.5
    %v1988 = vtanh.pop %v1982
    %v1989 = vtanh.pop %v1983
    %v1990 = vtanh.pop %v1984
    %v1991 = vtanh.pop %v1985
    %v1992 = vtanh.pop %v1986
    %v1993 = vtanh.pop %v1987
    %v1994 = vmul.f32 %v1988, 0.5
    %v1995 = vmul.f32 %v1989, 0.5
    %v1996 = vmul.f32 %v1990, 0.5
    %v1997 = vmul.f32 %v1991, 0.5
    %v1998 = vmul.f32 %v1992, 0.5
    %v1999 = vmul.f32 %v1993, 0.5
    %v2000 = vadd.f32 %v1994, 0.5
    %v2001 = vadd.f32 %v1995, 0.5
    %v2002 = vadd.f32 %v1996, 0.5
    %v2003 = vadd.f32 %v1997, 0.5
    %v2004 = vadd.f32 %v1998, 0.5
    %v2005 = vadd.f32 %v1999, 0.5
    %v2006 = vtanh.pop %v1977
    %v2007 = vtanh.pop %v1981
    %v2008 = vmul.f32 %v2001, %v1639
    %v2009 = vmul.f32 %v2004, %v1640
    %v2010 = vmul.f32 %v2000, %v2006
    %v2011 = vmul.f32 %v2003, %v2007
    %v2012 = vadd.f32 %v2008, %v2010
    %v2013 = vadd.f32 %v2009, %v2011
    %v2014 = vtanh.pop %v2012
    %v2015 = vtanh.pop %v2013
    %v2016 = vmul.f32 %v2002, %v2014
    %v2017 = vmul.f32 %v2005, %v2015
    %2018 = vmatpush.msra.mxu0 %v255
    %2019 = vmatpush.msra.mxu0 %v251
    %2020 = vmatpush.msra.mxu0 %v247
    %2021 = vmatpush.msra.mxu0 %v243
    %2022 = vmatpush.msra.mxu0 %v239
    %2023 = vmatpush.msra.mxu0 %v235
    %2024 = vmatpush.msra.mxu0 %v231
    %2025 = vmatpush.msra.mxu0 %v227
    %2026 = vmatpush.msra.mxu0 %v223
    %2027 = vmatpush.msra.mxu0 %v219
    %2028 = vmatpush.msra.mxu0 %v215
    %2029 = vmatpush.msra.mxu0 %v211
    %2030 = vmatpush.msra.mxu0 %v207
    %2031 = vmatpush.msra.mxu0 %v203
    %2032 = vmatpush.msra.mxu0 %v199
    %2033 = vmatpush.msra.mxu0 %v195
    %2034 = vmatmul.f32.gmra.mxu0 %v2016
    %v2035 = vpop.f32.mrf.mxu0
    %v2036 = vadd.f32 0.0, %v2035
    %2037 = vmatmul.f32.gmra.mxu0 %v2017
    %v2038 = vpop.f32.mrf.mxu0
    %v2039 = vadd.f32 0.0, %v2038
    %2040 = vdwg.mxu0
    %2041 = vmatpush.msra.mxu0 %v256
    %2042 = vmatpush.msra.mxu0 %v252
    %2043 = vmatpush.msra.mxu0 %v248
    %2044 = vmatpush.msra.mxu0 %v244
    %2045 = vmatpush.msra.mxu0 %v240
    %2046 = vmatpush.msra.mxu0 %v236
    %2047 = vmatpush.msra.mxu0 %v232
    %2048 = vmatpush.msra.mxu0 %v228
    %2049 = vmatpush.msra.mxu0 %v224
    %2050 = vmatpush.msra.mxu0 %v220
    %2051 = vmatpush.msra.mxu0 %v216
    %2052 = vmatpush.msra.mxu0 %v212
    %2053 = vmatpush.msra.mxu0 %v208
    %2054 = vmatpush.msra.mxu0 %v204
    %2055 = vmatpush.msra.mxu0 %v200
    %2056 = vmatpush.msra.mxu0 %v196
    %2057 = vmatmul.f32.gmra.mxu0 %v2016
    %v2058 = vpop.f32.mrf.mxu0
    %v2059 = vadd.f32 0.0, %v2058
    %2060 = vmatmul.f32.gmra.mxu0 %v2017
    %v2061 = vpop.f32.mrf.mxu0
    %v2062 = vadd.f32 0.0, %v2061
    %2063 = vdwg.mxu0
    %2064 = vmatpush.msra.mxu0 %v257
    %2065 = vmatpush.msra.mxu0 %v253
    %2066 = vmatpush.msra.mxu0 %v249
    %2067 = vmatpush.msra.mxu0 %v245
    %2068 = vmatpush.msra.mxu0 %v241
    %2069 = vmatpush.msra.mxu0 %v237
    %2070 = vmatpush.msra.mxu0 %v233
    %2071 = vmatpush.msra.mxu0 %v229
    %2072 = vmatpush.msra.mxu0 %v225
    %2073 = vmatpush.msra.mxu0 %v221
    %2074 = vmatpush.msra.mxu0 %v217
    %2075 = vmatpush.msra.mxu0 %v213
    %2076 = vmatpush.msra.mxu0 %v209
    %2077 = vmatpush.msra.mxu0 %v205
    %2078 = vmatpush.msra.mxu0 %v201
    %2079 = vmatpush.msra.mxu0 %v197
    %2080 = vmatmul.f32.gmra.mxu0 %v2016
    %v2081 = vpop.f32.mrf.mxu0
    %v2082 = vadd.f32 0.0, %v2081
    %2083 = vmatmul.f32.gmra.mxu0 %v2017
    %v2084 = vpop.f32.mrf.mxu0
    %v2085 = vadd.f32 0.0, %v2084
    %2086 = vdwg.mxu0
    %2087 = vmatpush.msra.mxu0 %v258
    %2088 = vmatpush.msra.mxu0 %v254
    %2089 = vmatpush.msra.mxu0 %v250
    %2090 = vmatpush.msra.mxu0 %v246
    %2091 = vmatpush.msra.mxu0 %v242
    %2092 = vmatpush.msra.mxu0 %v238
    %2093 = vmatpush.msra.mxu0 %v234
    %2094 = vmatpush.msra.mxu0 %v230
    %2095 = vmatpush.msra.mxu0 %v226
    %2096 = vmatpush.msra.mxu0 %v222
    %2097 = vmatpush.msra.mxu0 %v218
    %2098 = vmatpush.msra.mxu0 %v214
    %2099 = vmatpush.msra.mxu0 %v210
    %2100 = vmatpush.msra.mxu0 %v206
    %2101 = vmatpush.msra.mxu0 %v202
    %2102 = vmatpush.msra.mxu0 %v198
    %2103 = vmatmul.f32.gmra.mxu0 %v2016
    %v2104 = vpop.f32.mrf.mxu0
    %v2105 = vadd.f32 0.0, %v2104
    %2106 = vmatmul.f32.gmra.mxu0 %v2017
    %v2107 = vpop.f32.mrf.mxu0
    %v2108 = vadd.f32 0.0, %v2107
    %2109 = vdwg.mxu0
    %2110 = vmatpush.msra.mxu0 %v319
    %2111 = vmatpush.msra.mxu0 %v315
    %2112 = vmatpush.msra.mxu0 %v311
    %2113 = vmatpush.msra.mxu0 %v307
    %2114 = vmatpush.msra.mxu0 %v303
    %2115 = vmatpush.msra.mxu0 %v299
    %2116 = vmatpush.msra.mxu0 %v295
    %2117 = vmatpush.msra.mxu0 %v291
    %2118 = vmatpush.msra.mxu0 %v287
    %2119 = vmatpush.msra.mxu0 %v283
    %2120 = vmatpush.msra.mxu0 %v279
    %2121 = vmatpush.msra.mxu0 %v275
    %2122 = vmatpush.msra.mxu0 %v271
    %2123 = vmatpush.msra.mxu0 %v267
    %2124 = vmatpush.msra.mxu0 %v263
    %2125 = vmatpush.msra.mxu0 %v259
    %2126 = vmatmul.f32.gmra.mxu0 %v1871
    %v2127 = vpop.f32.mrf.mxu0
    %v2128 = vadd.f32 %v2036, %v2127
    %2129 = vmatmul.f32.gmra.mxu0 %v1872
    %v2130 = vpop.f32.mrf.mxu0
    %v2131 = vadd.f32 %v2039, %v2130
    %2132 = vdwg.mxu0
    %2133 = vmatpush.msra.mxu0 %v320
    %2134 = vmatpush.msra.mxu0 %v316
    %2135 = vmatpush.msra.mxu0 %v312
    %2136 = vmatpush.msra.mxu0 %v308
    %2137 = vmatpush.msra.mxu0 %v304
    %2138 = vmatpush.msra.mxu0 %v300
    %2139 = vmatpush.msra.mxu0 %v296
    %2140 = vmatpush.msra.mxu0 %v292
    %2141 = vmatpush.msra.mxu0 %v288
    %2142 = vmatpush.msra.mxu0 %v284
    %2143 = vmatpush.msra.mxu0 %v280
    %2144 = vmatpush.msra.mxu0 %v276
    %2145 = vmatpush.msra.mxu0 %v272
    %2146 = vmatpush.msra.mxu0 %v268
    %2147 = vmatpush.msra.mxu0 %v264
    %2148 = vmatpush.msra.mxu0 %v260
    %2149 = vmatmul.f32.gmra.mxu0 %v1871
    %v2150 = vpop.f32.mrf.mxu0
    %v2151 = vadd.f32 %v2059, %v2150
    %2152 = vmatmul.f32.gmra.mxu0 %v1872
    %v2153 = vpop.f32.mrf.mxu0
    %v2154 = vadd.f32 %v2062, %v2153
    %2155 = vdwg.mxu0
    %2156 = vmatpush.msra.mxu0 %v321
    %2157 = vmatpush.msra.mxu0 %v317
    %2158 = vmatpush.msra.mxu0 %v313
    %2159 = vmatpush.msra.mxu0 %v309
    %2160 = vmatpush.msra.mxu0 %v305
    %2161 = vmatpush.msra.mxu0 %v301
    %2162 = vmatpush.msra.mxu0 %v297
    %2163 = vmatpush.msra.mxu0 %v293
    %2164 = vmatpush.msra.mxu0 %v289
    %2165 = vmatpush.msra.mxu0 %v285
    %2166 = vmatpush.msra.mxu0 %v281
    %2167 = vmatpush.msra.mxu0 %v277
    %2168 = vmatpush.msra.mxu0 %v273
    %2169 = vmatpush.msra.mxu0 %v269
    %2170 = vmatpush.msra.mxu0 %v265
    %2171 = vmatpush.msra.mxu0 %v261
    %2172 = vmatmul.f32.gmra.mxu0 %v1871
    %v2173 = vpop.f32.mrf.mxu0
    %v2174 = vadd.f32 %v2082, %v2173
    %2175 = vmatmul.f32.gmra.mxu0 %v1872
    %v2176 = vpop.f32.mrf.mxu0
    %v2177 = vadd.f32 %v2085, %v2176
    %2178 = vdwg.mxu0
    %2179 = vmatpush.msra.mxu0 %v322
    %2180 = vmatpush.msra.mxu0 %v318
    %2181 = vmatpush.msra.mxu0 %v314
    %2182 = vmatpush.msra.mxu0 %v310
    %2183 = vmatpush.msra.mxu0 %v306
    %2184 = vmatpush.msra.mxu0 %v302
    %2185 = vmatpush.msra.mxu0 %v298
    %2186 = vmatpush.msra.mxu0 %v294
    %2187 = vmatpush.msra.mxu0 %v290
    %2188 = vmatpush.msra.mxu0 %v286
    %2189 = vmatpush.msra.mxu0 %v282
    %2190 = vmatpush.msra.mxu0 %v278
    %2191 = vmatpush.msra.mxu0 %v274
    %2192 = vmatpush.msra.mxu0 %v270
    %2193 = vmatpush.msra.mxu0 %v266
    %2194 = vmatpush.msra.mxu0 %v262
    %2195 = vmatmul.f32.gmra.mxu0 %v1871
    %v2196 = vpop.f32.mrf.mxu0
    %v2197 = vadd.f32 %v2105, %v2196
    %2198 = vmatmul.f32.gmra.mxu0 %v1872
    %v2199 = vpop.f32.mrf.mxu0
    %v2200 = vadd.f32 %v2108, %v2199
    %2201 = vdwg.mxu0
    %v2202 = vadd.f32 %v2128, %v325
    %v2203 = vadd.f32 %v2151, %v326
    %v2204 = vadd.f32 %v2174, %v327
    %v2205 = vadd.f32 %v2197, %v328
    %v2206 = vadd.f32 %v2131, %v325
    %v2207 = vadd.f32 %v2154, %v326
    %v2208 = vadd.f32 %v2177, %v327
    %v2209 = vadd.f32 %v2200, %v328
    %v2210 = vmul.f32 %v2202, 0.5
    %v2211 = vmul.f32 %v2203, 0.5
    %v2212 = vmul.f32 %v2204, 0.5
    %v2213 = vmul.f32 %v2206, 0.5
    %v2214 = vmul.f32 %v2207, 0.5
    %v2215 = vmul.f32 %v2208, 0.5
    %v2216 = vtanh.pop %v2210
    %v2217 = vtanh.pop %v2211
    %v2218 = vtanh.pop %v2212
    %v2219 = vtanh.pop %v2213
    %v2220 = vtanh.pop %v2214
    %v2221 = vtanh.pop %v2215
    %v2222 = vmul.f32 %v2216, 0.5
    %v2223 = vmul.f32 %v2217, 0.5
    %v2224 = vmul.f32 %v2218, 0.5
    %v2225 = vmul.f32 %v2219, 0.5
    %v2226 = vmul.f32 %v2220, 0.5
    %v2227 = vmul.f32 %v2221, 0.5
    %v2228 = vadd.f32 %v2222, 0.5
    %v2229 = vadd.f32 %v2223, 0.5
    %v2230 = vadd.f32 %v2224, 0.5
    %v2231 = vadd.f32 %v2225, 0.5
    %v2232 = vadd.f32 %v2226, 0.5
    %v2233 = vadd.f32 %v2227, 0.5
    %v2234 = vtanh.pop %v2205
    %v2235 = vtanh.pop %v2209
    %v2236 = vmul.f32 %v2229, %v1867
    %v2237 = vmul.f32 %v2232, %v1868
    %v2238 = vmul.f32 %v2228, %v2234
    %v2239 = vmul.f32 %v2231, %v2235
    %v2240 = vadd.f32 %v2236, %v2238
    %v2241 = vadd.f32 %v2237, %v2239
    %v2242 = vtanh.pop %v2240
    %v2243 = vtanh.pop %v2241
    %v2244 = vmul.f32 %v2230, %v2242
    %v2245 = vmul.f32 %v2233, %v2243
    %s2246 = scalar_lea.vmem [#allocation2], 256
    %v2247 = vld [vmem:[%s2246] sm:$0xff]
    %v2248 = vld [vmem:[%s2246 + $0x8] sm:$0xff]
    %v2249 = vld [vmem:[%s2246 + $0x10] sm:$0xff]
    %v2250 = vld [vmem:[%s2246 + $0x18] sm:$0xff]
    %v2251 = vld [vmem:[%s2246 + $0x20] sm:$0xff]
    %v2252 = vld [vmem:[%s2246 + $0x28] sm:$0xff]
    %v2253 = vld [vmem:[%s2246 + $0x30] sm:$0xff]
    %v2254 = vld [vmem:[%s2246 + $0x38] sm:$0xff]
    %2255 = vmatpush.msra.mxu0 %v191
    %2256 = vmatpush.msra.mxu0 %v187
    %2257 = vmatpush.msra.mxu0 %v183
    %2258 = vmatpush.msra.mxu0 %v179
    %2259 = vmatpush.msra.mxu0 %v175
    %2260 = vmatpush.msra.mxu0 %v171
    %2261 = vmatpush.msra.mxu0 %v167
    %2262 = vmatpush.msra.mxu0 %v163
    %2263 = vmatpush.msra.mxu0 %v159
    %2264 = vmatpush.msra.mxu0 %v155
    %2265 = vmatpush.msra.mxu0 %v151
    %2266 = vmatpush.msra.mxu0 %v147
    %2267 = vmatpush.msra.mxu0 %v143
    %2268 = vmatpush.msra.mxu0 %v139
    %2269 = vmatpush.msra.mxu0 %v135
    %2270 = vmatpush.msra.mxu0 %v131
    %2271 = vmatmul.f32.gmra.mxu0 %v2016
    %v2272 = vpop.f32.mrf.mxu0
    %v2273 = vadd.f32 0.0, %v2272
    %2274 = vmatmul.f32.gmra.mxu0 %v2017
    %v2275 = vpop.f32.mrf.mxu0
    %v2276 = vadd.f32 0.0, %v2275
    %2277 = vdwg.mxu0
    %2278 = vmatpush.msra.mxu0 %v192
    %2279 = vmatpush.msra.mxu0 %v188
    %2280 = vmatpush.msra.mxu0 %v184
    %2281 = vmatpush.msra.mxu0 %v180
    %2282 = vmatpush.msra.mxu0 %v176
    %2283 = vmatpush.msra.mxu0 %v172
    %2284 = vmatpush.msra.mxu0 %v168
    %2285 = vmatpush.msra.mxu0 %v164
    %2286 = vmatpush.msra.mxu0 %v160
    %2287 = vmatpush.msra.mxu0 %v156
    %2288 = vmatpush.msra.mxu0 %v152
    %2289 = vmatpush.msra.mxu0 %v148
    %2290 = vmatpush.msra.mxu0 %v144
    %2291 = vmatpush.msra.mxu0 %v140
    %2292 = vmatpush.msra.mxu0 %v136
    %2293 = vmatpush.msra.mxu0 %v132
    %2294 = vmatmul.f32.gmra.mxu0 %v2016
    %v2295 = vpop.f32.mrf.mxu0
    %v2296 = vadd.f32 0.0, %v2295
    %2297 = vmatmul.f32.gmra.mxu0 %v2017
    %v2298 = vpop.f32.mrf.mxu0
    %v2299 = vadd.f32 0.0, %v2298
    %2300 = vdwg.mxu0
    %2301 = vmatpush.msra.mxu0 %v193
    %2302 = vmatpush.msra.mxu0 %v189
    %2303 = vmatpush.msra.mxu0 %v185
    %2304 = vmatpush.msra.mxu0 %v181
    %2305 = vmatpush.msra.mxu0 %v177
    %2306 = vmatpush.msra.mxu0 %v173
    %2307 = vmatpush.msra.mxu0 %v169
    %2308 = vmatpush.msra.mxu0 %v165
    %2309 = vmatpush.msra.mxu0 %v161
    %2310 = vmatpush.msra.mxu0 %v157
    %2311 = vmatpush.msra.mxu0 %v153
    %2312 = vmatpush.msra.mxu0 %v149
    %2313 = vmatpush.msra.mxu0 %v145
    %2314 = vmatpush.msra.mxu0 %v141
    %2315 = vmatpush.msra.mxu0 %v137
    %2316 = vmatpush.msra.mxu0 %v133
    %2317 = vmatmul.f32.gmra.mxu0 %v2016
    %v2318 = vpop.f32.mrf.mxu0
    %v2319 = vadd.f32 0.0, %v2318
    %2320 = vmatmul.f32.gmra.mxu0 %v2017
    %v2321 = vpop.f32.mrf.mxu0
    %v2322 = vadd.f32 0.0, %v2321
    %2323 = vdwg.mxu0
    %2324 = vmatpush.msra.mxu0 %v194
    %2325 = vmatpush.msra.mxu0 %v190
    %2326 = vmatpush.msra.mxu0 %v186
    %2327 = vmatpush.msra.mxu0 %v182
    %2328 = vmatpush.msra.mxu0 %v178
    %2329 = vmatpush.msra.mxu0 %v174
    %2330 = vmatpush.msra.mxu0 %v170
    %2331 = vmatpush.msra.mxu0 %v166
    %2332 = vmatpush.msra.mxu0 %v162
    %2333 = vmatpush.msra.mxu0 %v158
    %2334 = vmatpush.msra.mxu0 %v154
    %2335 = vmatpush.msra.mxu0 %v150
    %2336 = vmatpush.msra.mxu0 %v146
    %2337 = vmatpush.msra.mxu0 %v142
    %2338 = vmatpush.msra.mxu0 %v138
    %2339 = vmatpush.msra.mxu0 %v134
    %2340 = vmatmul.f32.gmra.mxu0 %v2016
    %v2341 = vpop.f32.mrf.mxu0
    %v2342 = vadd.f32 0.0, %v2341
    %2343 = vmatmul.f32.gmra.mxu0 %v2017
    %v2344 = vpop.f32.mrf.mxu0
    %v2345 = vadd.f32 0.0, %v2344
    %2346 = vdwg.mxu0
    %v2347 = vadd.f32 %v2247, %v2273
    %v2348 = vadd.f32 %v2248, %v2296
    %v2349 = vadd.f32 %v2249, %v2319
    %v2350 = vadd.f32 %v2250, %v2342
    %v2351 = vadd.f32 %v2251, %v2276
    %v2352 = vadd.f32 %v2252, %v2299
    %v2353 = vadd.f32 %v2253, %v2322
    %v2354 = vadd.f32 %v2254, %v2345
    %v2355 = vmul.f32 %v2347, 0.5
    %v2356 = vmul.f32 %v2348, 0.5
    %v2357 = vmul.f32 %v2349, 0.5
    %v2358 = vmul.f32 %v2351, 0.5
    %v2359 = vmul.f32 %v2352, 0.5
    %v2360 = vmul.f32 %v2353, 0.5
    %v2361 = vtanh.pop %v2355
    %v2362 = vtanh.pop %v2356
    %v2363 = vtanh.pop %v2357
    %v2364 = vtanh.pop %v2358
    %v2365 = vtanh.pop %v2359
    %v2366 = vtanh.pop %v2360
    %v2367 = vmul.f32 %v2361, 0.5
    %v2368 = vmul.f32 %v2362, 0.5
    %v2369 = vmul.f32 %v2363, 0.5
    %v2370 = vmul.f32 %v2364, 0.5
    %v2371 = vmul.f32 %v2365, 0.5
    %v2372 = vmul.f32 %v2366, 0.5
    %v2373 = vadd.f32 %v2367, 0.5
    %v2374 = vadd.f32 %v2368, 0.5
    %v2375 = vadd.f32 %v2369, 0.5
    %v2376 = vadd.f32 %v2370, 0.5
    %v2377 = vadd.f32 %v2371, 0.5
    %v2378 = vadd.f32 %v2372, 0.5
    %v2379 = vtanh.pop %v2350
    %v2380 = vtanh.pop %v2354
    %v2381 = vmul.f32 %v2374, %v2012
    %v2382 = vmul.f32 %v2377, %v2013
    %v2383 = vmul.f32 %v2373, %v2379
    %v2384 = vmul.f32 %v2376, %v2380
    %v2385 = vadd.f32 %v2381, %v2383
    %v2386 = vadd.f32 %v2382, %v2384
    %v2387 = vtanh.pop %v2385
    %v2388 = vtanh.pop %v2386
    %v2389 = vmul.f32 %v2375, %v2387
    %v2390 = vmul.f32 %v2378, %v2388
    %2391 = vmatpush.msra.mxu0 %v255
    %2392 = vmatpush.msra.mxu0 %v251
    %2393 = vmatpush.msra.mxu0 %v247
    %2394 = vmatpush.msra.mxu0 %v243
    %2395 = vmatpush.msra.mxu0 %v239
    %2396 = vmatpush.msra.mxu0 %v235
    %2397 = vmatpush.msra.mxu0 %v231
    %2398 = vmatpush.msra.mxu0 %v227
    %2399 = vmatpush.msra.mxu0 %v223
    %2400 = vmatpush.msra.mxu0 %v219
    %2401 = vmatpush.msra.mxu0 %v215
    %2402 = vmatpush.msra.mxu0 %v211
    %2403 = vmatpush.msra.mxu0 %v207
    %2404 = vmatpush.msra.mxu0 %v203
    %2405 = vmatpush.msra.mxu0 %v199
    %2406 = vmatpush.msra.mxu0 %v195
    %2407 = vmatmul.f32.gmra.mxu0 %v2389
    %v2408 = vpop.f32.mrf.mxu0
    %v2409 = vadd.f32 0.0, %v2408
    %2410 = vmatmul.f32.gmra.mxu0 %v2390
    %v2411 = vpop.f32.mrf.mxu0
    %v2412 = vadd.f32 0.0, %v2411
    %2413 = vdwg.mxu0
    %2414 = vmatpush.msra.mxu0 %v256
    %2415 = vmatpush.msra.mxu0 %v252
    %2416 = vmatpush.msra.mxu0 %v248
    %2417 = vmatpush.msra.mxu0 %v244
    %2418 = vmatpush.msra.mxu0 %v240
    %2419 = vmatpush.msra.mxu0 %v236
    %2420 = vmatpush.msra.mxu0 %v232
    %2421 = vmatpush.msra.mxu0 %v228
    %2422 = vmatpush.msra.mxu0 %v224
    %2423 = vmatpush.msra.mxu0 %v220
    %2424 = vmatpush.msra.mxu0 %v216
    %2425 = vmatpush.msra.mxu0 %v212
    %2426 = vmatpush.msra.mxu0 %v208
    %2427 = vmatpush.msra.mxu0 %v204
    %2428 = vmatpush.msra.mxu0 %v200
    %2429 = vmatpush.msra.mxu0 %v196
    %2430 = vmatmul.f32.gmra.mxu0 %v2389
    %v2431 = vpop.f32.mrf.mxu0
    %v2432 = vadd.f32 0.0, %v2431
    %2433 = vmatmul.f32.gmra.mxu0 %v2390
    %v2434 = vpop.f32.mrf.mxu0
    %v2435 = vadd.f32 0.0, %v2434
    %2436 = vdwg.mxu0
    %2437 = vmatpush.msra.mxu0 %v257
    %2438 = vmatpush.msra.mxu0 %v253
    %2439 = vmatpush.msra.mxu0 %v249
    %2440 = vmatpush.msra.mxu0 %v245
    %2441 = vmatpush.msra.mxu0 %v241
    %2442 = vmatpush.msra.mxu0 %v237
    %2443 = vmatpush.msra.mxu0 %v233
    %2444 = vmatpush.msra.mxu0 %v229
    %2445 = vmatpush.msra.mxu0 %v225
    %2446 = vmatpush.msra.mxu0 %v221
    %2447 = vmatpush.msra.mxu0 %v217
    %2448 = vmatpush.msra.mxu0 %v213
    %2449 = vmatpush.msra.mxu0 %v209
    %2450 = vmatpush.msra.mxu0 %v205
    %2451 = vmatpush.msra.mxu0 %v201
    %2452 = vmatpush.msra.mxu0 %v197
    %2453 = vmatmul.f32.gmra.mxu0 %v2389
    %v2454 = vpop.f32.mrf.mxu0
    %v2455 = vadd.f32 0.0, %v2454
    %2456 = vmatmul.f32.gmra.mxu0 %v2390
    %v2457 = vpop.f32.mrf.mxu0
    %v2458 = vadd.f32 0.0, %v2457
    %2459 = vdwg.mxu0
    %2460 = vmatpush.msra.mxu0 %v258
    %2461 = vmatpush.msra.mxu0 %v254
    %2462 = vmatpush.msra.mxu0 %v250
    %2463 = vmatpush.msra.mxu0 %v246
    %2464 = vmatpush.msra.mxu0 %v242
    %2465 = vmatpush.msra.mxu0 %v238
    %2466 = vmatpush.msra.mxu0 %v234
    %2467 = vmatpush.msra.mxu0 %v230
    %2468 = vmatpush.msra.mxu0 %v226
    %2469 = vmatpush.msra.mxu0 %v222
    %2470 = vmatpush.msra.mxu0 %v218
    %2471 = vmatpush.msra.mxu0 %v214
    %2472 = vmatpush.msra.mxu0 %v210
    %2473 = vmatpush.msra.mxu0 %v206
    %2474 = vmatpush.msra.mxu0 %v202
    %2475 = vmatpush.msra.mxu0 %v198
    %2476 = vmatmul.f32.gmra.mxu0 %v2389
    %v2477 = vpop.f32.mrf.mxu0
    %v2478 = vadd.f32 0.0, %v2477
    %2479 = vmatmul.f32.gmra.mxu0 %v2390
    %v2480 = vpop.f32.mrf.mxu0
    %v2481 = vadd.f32 0.0, %v2480
    %2482 = vdwg.mxu0
    %2483 = vmatpush.msra.mxu0 %v319
    %2484 = vmatpush.msra.mxu0 %v315
    %2485 = vmatpush.msra.mxu0 %v311
    %2486 = vmatpush.msra.mxu0 %v307
    %2487 = vmatpush.msra.mxu0 %v303
    %2488 = vmatpush.msra.mxu0 %v299
    %2489 = vmatpush.msra.mxu0 %v295
    %2490 = vmatpush.msra.mxu0 %v291
    %2491 = vmatpush.msra.mxu0 %v287
    %2492 = vmatpush.msra.mxu0 %v283
    %2493 = vmatpush.msra.mxu0 %v279
    %2494 = vmatpush.msra.mxu0 %v275
    %2495 = vmatpush.msra.mxu0 %v271
    %2496 = vmatpush.msra.mxu0 %v267
    %2497 = vmatpush.msra.mxu0 %v263
    %2498 = vmatpush.msra.mxu0 %v259
    %2499 = vmatmul.f32.gmra.mxu0 %v2244
    %v2500 = vpop.f32.mrf.mxu0
    %v2501 = vadd.f32 %v2409, %v2500
    %2502 = vmatmul.f32.gmra.mxu0 %v2245
    %v2503 = vpop.f32.mrf.mxu0
    %v2504 = vadd.f32 %v2412, %v2503
    %2505 = vdwg.mxu0
    %2506 = vmatpush.msra.mxu0 %v320
    %2507 = vmatpush.msra.mxu0 %v316
    %2508 = vmatpush.msra.mxu0 %v312
    %2509 = vmatpush.msra.mxu0 %v308
    %2510 = vmatpush.msra.mxu0 %v304
    %2511 = vmatpush.msra.mxu0 %v300
    %2512 = vmatpush.msra.mxu0 %v296
    %2513 = vmatpush.msra.mxu0 %v292
    %2514 = vmatpush.msra.mxu0 %v288
    %2515 = vmatpush.msra.mxu0 %v284
    %2516 = vmatpush.msra.mxu0 %v280
    %2517 = vmatpush.msra.mxu0 %v276
    %2518 = vmatpush.msra.mxu0 %v272
    %2519 = vmatpush.msra.mxu0 %v268
    %2520 = vmatpush.msra.mxu0 %v264
    %2521 = vmatpush.msra.mxu0 %v260
    %2522 = vmatmul.f32.gmra.mxu0 %v2244
    %v2523 = vpop.f32.mrf.mxu0
    %v2524 = vadd.f32 %v2432, %v2523
    %2525 = vmatmul.f32.gmra.mxu0 %v2245
    %v2526 = vpop.f32.mrf.mxu0
    %v2527 = vadd.f32 %v2435, %v2526
    %2528 = vdwg.mxu0
    %2529 = vmatpush.msra.mxu0 %v321
    %2530 = vmatpush.msra.mxu0 %v317
    %2531 = vmatpush.msra.mxu0 %v313
    %2532 = vmatpush.msra.mxu0 %v309
    %2533 = vmatpush.msra.mxu0 %v305
    %2534 = vmatpush.msra.mxu0 %v301
    %2535 = vmatpush.msra.mxu0 %v297
    %2536 = vmatpush.msra.mxu0 %v293
    %2537 = vmatpush.msra.mxu0 %v289
    %2538 = vmatpush.msra.mxu0 %v285
    %2539 = vmatpush.msra.mxu0 %v281
    %2540 = vmatpush.msra.mxu0 %v277
    %2541 = vmatpush.msra.mxu0 %v273
    %2542 = vmatpush.msra.mxu0 %v269
    %2543 = vmatpush.msra.mxu0 %v265
    %2544 = vmatpush.msra.mxu0 %v261
    %2545 = vmatmul.f32.gmra.mxu0 %v2244
    %v2546 = vpop.f32.mrf.mxu0
    %v2547 = vadd.f32 %v2455, %v2546
    %2548 = vmatmul.f32.gmra.mxu0 %v2245
    %v2549 = vpop.f32.mrf.mxu0
    %v2550 = vadd.f32 %v2458, %v2549
    %2551 = vdwg.mxu0
    %2552 = vmatpush.msra.mxu0 %v322
    %2553 = vmatpush.msra.mxu0 %v318
    %2554 = vmatpush.msra.mxu0 %v314
    %2555 = vmatpush.msra.mxu0 %v310
    %2556 = vmatpush.msra.mxu0 %v306
    %2557 = vmatpush.msra.mxu0 %v302
    %2558 = vmatpush.msra.mxu0 %v298
    %2559 = vmatpush.msra.mxu0 %v294
    %2560 = vmatpush.msra.mxu0 %v290
    %2561 = vmatpush.msra.mxu0 %v286
    %2562 = vmatpush.msra.mxu0 %v282
    %2563 = vmatpush.msra.mxu0 %v278
    %2564 = vmatpush.msra.mxu0 %v274
    %2565 = vmatpush.msra.mxu0 %v270
    %2566 = vmatpush.msra.mxu0 %v266
    %2567 = vmatpush.msra.mxu0 %v262
    %2568 = vmatmul.f32.gmra.mxu0 %v2244
    %v2569 = vpop.f32.mrf.mxu0
    %v2570 = vadd.f32 %v2478, %v2569
    %2571 = vmatmul.f32.gmra.mxu0 %v2245
    %v2572 = vpop.f32.mrf.mxu0
    %v2573 = vadd.f32 %v2481, %v2572
    %2574 = vdwg.mxu0
    %v2575 = vadd.f32 %v2501, %v325
    %v2576 = vadd.f32 %v2524, %v326
    %v2577 = vadd.f32 %v2547, %v327
    %v2578 = vadd.f32 %v2570, %v328
    %v2579 = vadd.f32 %v2504, %v325
    %v2580 = vadd.f32 %v2527, %v326
    %v2581 = vadd.f32 %v2550, %v327
    %v2582 = vadd.f32 %v2573, %v328
    %v2583 = vmul.f32 %v2575, 0.5
    %v2584 = vmul.f32 %v2576, 0.5
    %v2585 = vmul.f32 %v2577, 0.5
    %v2586 = vmul.f32 %v2579, 0.5
    %v2587 = vmul.f32 %v2580, 0.5
    %v2588 = vmul.f32 %v2581, 0.5
    %v2589 = vtanh.pop %v2583
    %v2590 = vtanh.pop %v2584
    %v2591 = vtanh.pop %v2585
    %v2592 = vtanh.pop %v2586
    %v2593 = vtanh.pop %v2587
    %v2594 = vtanh.pop %v2588
    %v2595 = vmul.f32 %v2589, 0.5
    %v2596 = vmul.f32 %v2590, 0.5
    %v2597 = vmul.f32 %v2591, 0.5
    %v2598 = vmul.f32 %v2592, 0.5
    %v2599 = vmul.f32 %v2593, 0.5
    %v2600 = vmul.f32 %v2594, 0.5
    %v2601 = vadd.f32 %v2595, 0.5
    %v2602 = vadd.f32 %v2596, 0.5
    %v2603 = vadd.f32 %v2597, 0.5
    %v2604 = vadd.f32 %v2598, 0.5
    %v2605 = vadd.f32 %v2599, 0.5
    %v2606 = vadd.f32 %v2600, 0.5
    %v2607 = vtanh.pop %v2578
    %v2608 = vtanh.pop %v2582
    %v2609 = vmul.f32 %v2602, %v2240
    %v2610 = vmul.f32 %v2605, %v2241
    %v2611 = vmul.f32 %v2601, %v2607
    %v2612 = vmul.f32 %v2604, %v2608
    %v2613 = vadd.f32 %v2609, %v2611
    %v2614 = vadd.f32 %v2610, %v2612
    %v2615 = vtanh.pop %v2613
    %v2616 = vtanh.pop %v2614
    %v2617 = vmul.f32 %v2603, %v2615
    %v2618 = vmul.f32 %v2606, %v2616
    %s2619 = scalar_lea.vmem [#allocation2], 320
    %v2620 = vld [vmem:[%s2619] sm:$0xff]
    %v2621 = vld [vmem:[%s2619 + $0x8] sm:$0xff]
    %v2622 = vld [vmem:[%s2619 + $0x10] sm:$0xff]
    %v2623 = vld [vmem:[%s2619 + $0x18] sm:$0xff]
    %v2624 = vld [vmem:[%s2619 + $0x20] sm:$0xff]
    %v2625 = vld [vmem:[%s2619 + $0x28] sm:$0xff]
    %v2626 = vld [vmem:[%s2619 + $0x30] sm:$0xff]
    %v2627 = vld [vmem:[%s2619 + $0x38] sm:$0xff]
    %2628 = vmatpush.msra.mxu0 %v191
    %2629 = vmatpush.msra.mxu0 %v187
    %2630 = vmatpush.msra.mxu0 %v183
    %2631 = vmatpush.msra.mxu0 %v179
    %2632 = vmatpush.msra.mxu0 %v175
    %2633 = vmatpush.msra.mxu0 %v171
    %2634 = vmatpush.msra.mxu0 %v167
    %2635 = vmatpush.msra.mxu0 %v163
    %2636 = vmatpush.msra.mxu0 %v159
    %2637 = vmatpush.msra.mxu0 %v155
    %2638 = vmatpush.msra.mxu0 %v151
    %2639 = vmatpush.msra.mxu0 %v147
    %2640 = vmatpush.msra.mxu0 %v143
    %2641 = vmatpush.msra.mxu0 %v139
    %2642 = vmatpush.msra.mxu0 %v135
    %2643 = vmatpush.msra.mxu0 %v131
    %2644 = vmatmul.f32.gmra.mxu0 %v2389
    %v2645 = vpop.f32.mrf.mxu0
    %v2646 = vadd.f32 0.0, %v2645
    %2647 = vmatmul.f32.gmra.mxu0 %v2390
    %v2648 = vpop.f32.mrf.mxu0
    %v2649 = vadd.f32 0.0, %v2648
    %2650 = vdwg.mxu0
    %2651 = vmatpush.msra.mxu0 %v192
    %2652 = vmatpush.msra.mxu0 %v188
    %2653 = vmatpush.msra.mxu0 %v184
    %2654 = vmatpush.msra.mxu0 %v180
    %2655 = vmatpush.msra.mxu0 %v176
    %2656 = vmatpush.msra.mxu0 %v172
    %2657 = vmatpush.msra.mxu0 %v168
    %2658 = vmatpush.msra.mxu0 %v164
    %2659 = vmatpush.msra.mxu0 %v160
    %2660 = vmatpush.msra.mxu0 %v156
    %2661 = vmatpush.msra.mxu0 %v152
    %2662 = vmatpush.msra.mxu0 %v148
    %2663 = vmatpush.msra.mxu0 %v144
    %2664 = vmatpush.msra.mxu0 %v140
    %2665 = vmatpush.msra.mxu0 %v136
    %2666 = vmatpush.msra.mxu0 %v132
    %2667 = vmatmul.f32.gmra.mxu0 %v2389
    %v2668 = vpop.f32.mrf.mxu0
    %v2669 = vadd.f32 0.0, %v2668
    %2670 = vmatmul.f32.gmra.mxu0 %v2390
    %v2671 = vpop.f32.mrf.mxu0
    %v2672 = vadd.f32 0.0, %v2671
    %2673 = vdwg.mxu0
    %2674 = vmatpush.msra.mxu0 %v193
    %2675 = vmatpush.msra.mxu0 %v189
    %2676 = vmatpush.msra.mxu0 %v185
    %2677 = vmatpush.msra.mxu0 %v181
    %2678 = vmatpush.msra.mxu0 %v177
    %2679 = vmatpush.msra.mxu0 %v173
    %2680 = vmatpush.msra.mxu0 %v169
    %2681 = vmatpush.msra.mxu0 %v165
    %2682 = vmatpush.msra.mxu0 %v161
    %2683 = vmatpush.msra.mxu0 %v157
    %2684 = vmatpush.msra.mxu0 %v153
    %2685 = vmatpush.msra.mxu0 %v149
    %2686 = vmatpush.msra.mxu0 %v145
    %2687 = vmatpush.msra.mxu0 %v141
    %2688 = vmatpush.msra.mxu0 %v137
    %2689 = vmatpush.msra.mxu0 %v133
    %2690 = vmatmul.f32.gmra.mxu0 %v2389
    %v2691 = vpop.f32.mrf.mxu0
    %v2692 = vadd.f32 0.0, %v2691
    %2693 = vmatmul.f32.gmra.mxu0 %v2390
    %v2694 = vpop.f32.mrf.mxu0
    %v2695 = vadd.f32 0.0, %v2694
    %2696 = vdwg.mxu0
    %2697 = vmatpush.msra.mxu0 %v194
    %2698 = vmatpush.msra.mxu0 %v190
    %2699 = vmatpush.msra.mxu0 %v186
    %2700 = vmatpush.msra.mxu0 %v182
    %2701 = vmatpush.msra.mxu0 %v178
    %2702 = vmatpush.msra.mxu0 %v174
    %2703 = vmatpush.msra.mxu0 %v170
    %2704 = vmatpush.msra.mxu0 %v166
    %2705 = vmatpush.msra.mxu0 %v162
    %2706 = vmatpush.msra.mxu0 %v158
    %2707 = vmatpush.msra.mxu0 %v154
    %2708 = vmatpush.msra.mxu0 %v150
    %2709 = vmatpush.msra.mxu0 %v146
    %2710 = vmatpush.msra.mxu0 %v142
    %2711 = vmatpush.msra.mxu0 %v138
    %2712 = vmatpush.msra.mxu0 %v134
    %2713 = vmatmul.f32.gmra.mxu0 %v2389
    %v2714 = vpop.f32.mrf.mxu0
    %v2715 = vadd.f32 0.0, %v2714
    %2716 = vmatmul.f32.gmra.mxu0 %v2390
    %v2717 = vpop.f32.mrf.mxu0
    %v2718 = vadd.f32 0.0, %v2717
    %2719 = vdwg.mxu0
    %v2720 = vadd.f32 %v2620, %v2646
    %v2721 = vadd.f32 %v2621, %v2669
    %v2722 = vadd.f32 %v2622, %v2692
    %v2723 = vadd.f32 %v2623, %v2715
    %v2724 = vadd.f32 %v2624, %v2649
    %v2725 = vadd.f32 %v2625, %v2672
    %v2726 = vadd.f32 %v2626, %v2695
    %v2727 = vadd.f32 %v2627, %v2718
    %v2728 = vmul.f32 %v2720, 0.5
    %v2729 = vmul.f32 %v2721, 0.5
    %v2730 = vmul.f32 %v2722, 0.5
    %v2731 = vmul.f32 %v2724, 0.5
    %v2732 = vmul.f32 %v2725, 0.5
    %v2733 = vmul.f32 %v2726, 0.5
    %v2734 = vtanh.pop %v2728
    %v2735 = vtanh.pop %v2729
    %v2736 = vtanh.pop %v2730
    %v2737 = vtanh.pop %v2731
    %v2738 = vtanh.pop %v2732
    %v2739 = vtanh.pop %v2733
    %v2740 = vmul.f32 %v2734, 0.5
    %v2741 = vmul.f32 %v2735, 0.5
    %v2742 = vmul.f32 %v2736, 0.5
    %v2743 = vmul.f32 %v2737, 0.5
    %v2744 = vmul.f32 %v2738, 0.5
    %v2745 = vmul.f32 %v2739, 0.5
    %v2746 = vadd.f32 %v2740, 0.5
    %v2747 = vadd.f32 %v2741, 0.5
    %v2748 = vadd.f32 %v2742, 0.5
    %v2749 = vadd.f32 %v2743, 0.5
    %v2750 = vadd.f32 %v2744, 0.5
    %v2751 = vadd.f32 %v2745, 0.5
    %v2752 = vtanh.pop %v2723
    %v2753 = vtanh.pop %v2727
    %v2754 = vmul.f32 %v2747, %v2385
    %v2755 = vmul.f32 %v2750, %v2386
    %v2756 = vmul.f32 %v2746, %v2752
    %v2757 = vmul.f32 %v2749, %v2753
    %v2758 = vadd.f32 %v2754, %v2756
    %v2759 = vadd.f32 %v2755, %v2757
    %v2760 = vtanh.pop %v2758
    %v2761 = vtanh.pop %v2759
    %v2762 = vmul.f32 %v2748, %v2760
    %v2763 = vmul.f32 %v2751, %v2761
    %2764 = vmatpush.msra.mxu0 %v255
    %2765 = vmatpush.msra.mxu0 %v251
    %2766 = vmatpush.msra.mxu0 %v247
    %2767 = vmatpush.msra.mxu0 %v243
    %2768 = vmatpush.msra.mxu0 %v239
    %2769 = vmatpush.msra.mxu0 %v235
    %2770 = vmatpush.msra.mxu0 %v231
    %2771 = vmatpush.msra.mxu0 %v227
    %2772 = vmatpush.msra.mxu0 %v223
    %2773 = vmatpush.msra.mxu0 %v219
    %2774 = vmatpush.msra.mxu0 %v215
    %2775 = vmatpush.msra.mxu0 %v211
    %2776 = vmatpush.msra.mxu0 %v207
    %2777 = vmatpush.msra.mxu0 %v203
    %2778 = vmatpush.msra.mxu0 %v199
    %2779 = vmatpush.msra.mxu0 %v195
    %2780 = vmatmul.f32.gmra.mxu0 %v2762
    %v2781 = vpop.f32.mrf.mxu0
    %v2782 = vadd.f32 0.0, %v2781
    %2783 = vmatmul.f32.gmra.mxu0 %v2763
    %v2784 = vpop.f32.mrf.mxu0
    %v2785 = vadd.f32 0.0, %v2784
    %2786 = vdwg.mxu0
    %2787 = vmatpush.msra.mxu0 %v256
    %2788 = vmatpush.msra.mxu0 %v252
    %2789 = vmatpush.msra.mxu0 %v248
    %2790 = vmatpush.msra.mxu0 %v244
    %2791 = vmatpush.msra.mxu0 %v240
    %2792 = vmatpush.msra.mxu0 %v236
    %2793 = vmatpush.msra.mxu0 %v232
    %2794 = vmatpush.msra.mxu0 %v228
    %2795 = vmatpush.msra.mxu0 %v224
    %2796 = vmatpush.msra.mxu0 %v220
    %2797 = vmatpush.msra.mxu0 %v216
    %2798 = vmatpush.msra.mxu0 %v212
    %2799 = vmatpush.msra.mxu0 %v208
    %2800 = vmatpush.msra.mxu0 %v204
    %2801 = vmatpush.msra.mxu0 %v200
    %2802 = vmatpush.msra.mxu0 %v196
    %2803 = vmatmul.f32.gmra.mxu0 %v2762
    %v2804 = vpop.f32.mrf.mxu0
    %v2805 = vadd.f32 0.0, %v2804
    %2806 = vmatmul.f32.gmra.mxu0 %v2763
    %v2807 = vpop.f32.mrf.mxu0
    %v2808 = vadd.f32 0.0, %v2807
    %2809 = vdwg.mxu0
    %2810 = vmatpush.msra.mxu0 %v257
    %2811 = vmatpush.msra.mxu0 %v253
    %2812 = vmatpush.msra.mxu0 %v249
    %2813 = vmatpush.msra.mxu0 %v245
    %2814 = vmatpush.msra.mxu0 %v241
    %2815 = vmatpush.msra.mxu0 %v237
    %2816 = vmatpush.msra.mxu0 %v233
    %2817 = vmatpush.msra.mxu0 %v229
    %2818 = vmatpush.msra.mxu0 %v225
    %2819 = vmatpush.msra.mxu0 %v221
    %2820 = vmatpush.msra.mxu0 %v217
    %2821 = vmatpush.msra.mxu0 %v213
    %2822 = vmatpush.msra.mxu0 %v209
    %2823 = vmatpush.msra.mxu0 %v205
    %2824 = vmatpush.msra.mxu0 %v201
    %2825 = vmatpush.msra.mxu0 %v197
    %2826 = vmatmul.f32.gmra.mxu0 %v2762
    %v2827 = vpop.f32.mrf.mxu0
    %v2828 = vadd.f32 0.0, %v2827
    %2829 = vmatmul.f32.gmra.mxu0 %v2763
    %v2830 = vpop.f32.mrf.mxu0
    %v2831 = vadd.f32 0.0, %v2830
    %2832 = vdwg.mxu0
    %2833 = vmatpush.msra.mxu0 %v258
    %2834 = vmatpush.msra.mxu0 %v254
    %2835 = vmatpush.msra.mxu0 %v250
    %2836 = vmatpush.msra.mxu0 %v246
    %2837 = vmatpush.msra.mxu0 %v242
    %2838 = vmatpush.msra.mxu0 %v238
    %2839 = vmatpush.msra.mxu0 %v234
    %2840 = vmatpush.msra.mxu0 %v230
    %2841 = vmatpush.msra.mxu0 %v226
    %2842 = vmatpush.msra.mxu0 %v222
    %2843 = vmatpush.msra.mxu0 %v218
    %2844 = vmatpush.msra.mxu0 %v214
    %2845 = vmatpush.msra.mxu0 %v210
    %2846 = vmatpush.msra.mxu0 %v206
    %2847 = vmatpush.msra.mxu0 %v202
    %2848 = vmatpush.msra.mxu0 %v198
    %2849 = vmatmul.f32.gmra.mxu0 %v2762
    %v2850 = vpop.f32.mrf.mxu0
    %v2851 = vadd.f32 0.0, %v2850
    %2852 = vmatmul.f32.gmra.mxu0 %v2763
    %v2853 = vpop.f32.mrf.mxu0
    %v2854 = vadd.f32 0.0, %v2853
    %2855 = vdwg.mxu0
    %2856 = vmatpush.msra.mxu0 %v319
    %2857 = vmatpush.msra.mxu0 %v315
    %2858 = vmatpush.msra.mxu0 %v311
    %2859 = vmatpush.msra.mxu0 %v307
    %2860 = vmatpush.msra.mxu0 %v303
    %2861 = vmatpush.msra.mxu0 %v299
    %2862 = vmatpush.msra.mxu0 %v295
    %2863 = vmatpush.msra.mxu0 %v291
    %2864 = vmatpush.msra.mxu0 %v287
    %2865 = vmatpush.msra.mxu0 %v283
    %2866 = vmatpush.msra.mxu0 %v279
    %2867 = vmatpush.msra.mxu0 %v275
    %2868 = vmatpush.msra.mxu0 %v271
    %2869 = vmatpush.msra.mxu0 %v267
    %2870 = vmatpush.msra.mxu0 %v263
    %2871 = vmatpush.msra.mxu0 %v259
    %2872 = vmatmul.f32.gmra.mxu0 %v2617
    %v2873 = vpop.f32.mrf.mxu0
    %v2874 = vadd.f32 %v2782, %v2873
    %2875 = vmatmul.f32.gmra.mxu0 %v2618
    %v2876 = vpop.f32.mrf.mxu0
    %v2877 = vadd.f32 %v2785, %v2876
    %2878 = vdwg.mxu0
    %2879 = vmatpush.msra.mxu0 %v320
    %2880 = vmatpush.msra.mxu0 %v316
    %2881 = vmatpush.msra.mxu0 %v312
    %2882 = vmatpush.msra.mxu0 %v308
    %2883 = vmatpush.msra.mxu0 %v304
    %2884 = vmatpush.msra.mxu0 %v300
    %2885 = vmatpush.msra.mxu0 %v296
    %2886 = vmatpush.msra.mxu0 %v292
    %2887 = vmatpush.msra.mxu0 %v288
    %2888 = vmatpush.msra.mxu0 %v284
    %2889 = vmatpush.msra.mxu0 %v280
    %2890 = vmatpush.msra.mxu0 %v276
    %2891 = vmatpush.msra.mxu0 %v272
    %2892 = vmatpush.msra.mxu0 %v268
    %2893 = vmatpush.msra.mxu0 %v264
    %2894 = vmatpush.msra.mxu0 %v260
    %2895 = vmatmul.f32.gmra.mxu0 %v2617
    %v2896 = vpop.f32.mrf.mxu0
    %v2897 = vadd.f32 %v2805, %v2896
    %2898 = vmatmul.f32.gmra.mxu0 %v2618
    %v2899 = vpop.f32.mrf.mxu0
    %v2900 = vadd.f32 %v2808, %v2899
    %2901 = vdwg.mxu0
    %2902 = vmatpush.msra.mxu0 %v321
    %2903 = vmatpush.msra.mxu0 %v317
    %2904 = vmatpush.msra.mxu0 %v313
    %2905 = vmatpush.msra.mxu0 %v309
    %2906 = vmatpush.msra.mxu0 %v305
    %2907 = vmatpush.msra.mxu0 %v301
    %2908 = vmatpush.msra.mxu0 %v297
    %2909 = vmatpush.msra.mxu0 %v293
    %2910 = vmatpush.msra.mxu0 %v289
    %2911 = vmatpush.msra.mxu0 %v285
    %2912 = vmatpush.msra.mxu0 %v281
    %2913 = vmatpush.msra.mxu0 %v277
    %2914 = vmatpush.msra.mxu0 %v273
    %2915 = vmatpush.msra.mxu0 %v269
    %2916 = vmatpush.msra.mxu0 %v265
    %2917 = vmatpush.msra.mxu0 %v261
    %2918 = vmatmul.f32.gmra.mxu0 %v2617
    %v2919 = vpop.f32.mrf.mxu0
    %v2920 = vadd.f32 %v2828, %v2919
    %2921 = vmatmul.f32.gmra.mxu0 %v2618
    %v2922 = vpop.f32.mrf.mxu0
    %v2923 = vadd.f32 %v2831, %v2922
    %2924 = vdwg.mxu0
    %2925 = vmatpush.msra.mxu0 %v322
    %2926 = vmatpush.msra.mxu0 %v318
    %2927 = vmatpush.msra.mxu0 %v314
    %2928 = vmatpush.msra.mxu0 %v310
    %2929 = vmatpush.msra.mxu0 %v306
    %2930 = vmatpush.msra.mxu0 %v302
    %2931 = vmatpush.msra.mxu0 %v298
    %2932 = vmatpush.msra.mxu0 %v294
    %2933 = vmatpush.msra.mxu0 %v290
    %2934 = vmatpush.msra.mxu0 %v286
    %2935 = vmatpush.msra.mxu0 %v282
    %2936 = vmatpush.msra.mxu0 %v278
    %2937 = vmatpush.msra.mxu0 %v274
    %2938 = vmatpush.msra.mxu0 %v270
    %2939 = vmatpush.msra.mxu0 %v266
    %2940 = vmatpush.msra.mxu0 %v262
    %2941 = vmatmul.f32.gmra.mxu0 %v2617
    %v2942 = vpop.f32.mrf.mxu0
    %v2943 = vadd.f32 %v2851, %v2942
    %2944 = vmatmul.f32.gmra.mxu0 %v2618
    %v2945 = vpop.f32.mrf.mxu0
    %v2946 = vadd.f32 %v2854, %v2945
    %2947 = vdwg.mxu0
    %v2948 = vadd.f32 %v2874, %v325
    %v2949 = vadd.f32 %v2897, %v326
    %v2950 = vadd.f32 %v2920, %v327
    %v2951 = vadd.f32 %v2943, %v328
    %v2952 = vadd.f32 %v2877, %v325
    %v2953 = vadd.f32 %v2900, %v326
    %v2954 = vadd.f32 %v2923, %v327
    %v2955 = vadd.f32 %v2946, %v328
    %v2956 = vmul.f32 %v2948, 0.5
    %v2957 = vmul.f32 %v2949, 0.5
    %v2958 = vmul.f32 %v2950, 0.5
    %v2959 = vmul.f32 %v2952, 0.5
    %v2960 = vmul.f32 %v2953, 0.5
    %v2961 = vmul.f32 %v2954, 0.5
    %v2962 = vtanh.pop %v2956
    %v2963 = vtanh.pop %v2957
    %v2964 = vtanh.pop %v2958
    %v2965 = vtanh.pop %v2959
    %v2966 = vtanh.pop %v2960
    %v2967 = vtanh.pop %v2961
    %v2968 = vmul.f32 %v2962, 0.5
    %v2969 = vmul.f32 %v2963, 0.5
    %v2970 = vmul.f32 %v2964, 0.5
    %v2971 = vmul.f32 %v2965, 0.5
    %v2972 = vmul.f32 %v2966, 0.5
    %v2973 = vmul.f32 %v2967, 0.5
    %v2974 = vadd.f32 %v2968, 0.5
    %v2975 = vadd.f32 %v2969, 0.5
    %v2976 = vadd.f32 %v2970, 0.5
    %v2977 = vadd.f32 %v2971, 0.5
    %v2978 = vadd.f32 %v2972, 0.5
    %v2979 = vadd.f32 %v2973, 0.5
    %v2980 = vtanh.pop %v2951
    %v2981 = vtanh.pop %v2955
    %v2982 = vmul.f32 %v2975, %v2613
    %v2983 = vmul.f32 %v2978, %v2614
    %v2984 = vmul.f32 %v2974, %v2980
    %v2985 = vmul.f32 %v2977, %v2981
    %v2986 = vadd.f32 %v2982, %v2984
    %v2987 = vadd.f32 %v2983, %v2985
    %v2988 = vtanh.pop %v2986
    %v2989 = vtanh.pop %v2987
    %v2990 = vmul.f32 %v2976, %v2988
    %v2991 = vmul.f32 %v2979, %v2989
    %s2992 = scalar_lea.vmem [#allocation2], 384
    %v2993 = vld [vmem:[%s2992] sm:$0xff]
    %v2994 = vld [vmem:[%s2992 + $0x8] sm:$0xff]
    %v2995 = vld [vmem:[%s2992 + $0x10] sm:$0xff]
    %v2996 = vld [vmem:[%s2992 + $0x18] sm:$0xff]
    %v2997 = vld [vmem:[%s2992 + $0x20] sm:$0xff]
    %v2998 = vld [vmem:[%s2992 + $0x28] sm:$0xff]
    %v2999 = vld [vmem:[%s2992 + $0x30] sm:$0xff]
    %v3000 = vld [vmem:[%s2992 + $0x38] sm:$0xff]
    %3001 = vmatpush.msra.mxu0 %v191
    %3002 = vmatpush.msra.mxu0 %v187
    %3003 = vmatpush.msra.mxu0 %v183
    %3004 = vmatpush.msra.mxu0 %v179
    %3005 = vmatpush.msra.mxu0 %v175
    %3006 = vmatpush.msra.mxu0 %v171
    %3007 = vmatpush.msra.mxu0 %v167
    %3008 = vmatpush.msra.mxu0 %v163
    %3009 = vmatpush.msra.mxu0 %v159
    %3010 = vmatpush.msra.mxu0 %v155
    %3011 = vmatpush.msra.mxu0 %v151
    %3012 = vmatpush.msra.mxu0 %v147
    %3013 = vmatpush.msra.mxu0 %v143
    %3014 = vmatpush.msra.mxu0 %v139
    %3015 = vmatpush.msra.mxu0 %v135
    %3016 = vmatpush.msra.mxu0 %v131
    %3017 = vmatmul.f32.gmra.mxu0 %v2762
    %v3018 = vpop.f32.mrf.mxu0
    %v3019 = vadd.f32 0.0, %v3018
    %3020 = vmatmul.f32.gmra.mxu0 %v2763
    %v3021 = vpop.f32.mrf.mxu0
    %v3022 = vadd.f32 0.0, %v3021
    %3023 = vdwg.mxu0
    %3024 = vmatpush.msra.mxu0 %v192
    %3025 = vmatpush.msra.mxu0 %v188
    %3026 = vmatpush.msra.mxu0 %v184
    %3027 = vmatpush.msra.mxu0 %v180
    %3028 = vmatpush.msra.mxu0 %v176
    %3029 = vmatpush.msra.mxu0 %v172
    %3030 = vmatpush.msra.mxu0 %v168
    %3031 = vmatpush.msra.mxu0 %v164
    %3032 = vmatpush.msra.mxu0 %v160
    %3033 = vmatpush.msra.mxu0 %v156
    %3034 = vmatpush.msra.mxu0 %v152
    %3035 = vmatpush.msra.mxu0 %v148
    %3036 = vmatpush.msra.mxu0 %v144
    %3037 = vmatpush.msra.mxu0 %v140
    %3038 = vmatpush.msra.mxu0 %v136
    %3039 = vmatpush.msra.mxu0 %v132
    %3040 = vmatmul.f32.gmra.mxu0 %v2762
    %v3041 = vpop.f32.mrf.mxu0
    %v3042 = vadd.f32 0.0, %v3041
    %3043 = vmatmul.f32.gmra.mxu0 %v2763
    %v3044 = vpop.f32.mrf.mxu0
    %v3045 = vadd.f32 0.0, %v3044
    %3046 = vdwg.mxu0
    %3047 = vmatpush.msra.mxu0 %v193
    %3048 = vmatpush.msra.mxu0 %v189
    %3049 = vmatpush.msra.mxu0 %v185
    %3050 = vmatpush.msra.mxu0 %v181
    %3051 = vmatpush.msra.mxu0 %v177
    %3052 = vmatpush.msra.mxu0 %v173
    %3053 = vmatpush.msra.mxu0 %v169
    %3054 = vmatpush.msra.mxu0 %v165
    %3055 = vmatpush.msra.mxu0 %v161
    %3056 = vmatpush.msra.mxu0 %v157
    %3057 = vmatpush.msra.mxu0 %v153
    %3058 = vmatpush.msra.mxu0 %v149
    %3059 = vmatpush.msra.mxu0 %v145
    %3060 = vmatpush.msra.mxu0 %v141
    %3061 = vmatpush.msra.mxu0 %v137
    %3062 = vmatpush.msra.mxu0 %v133
    %3063 = vmatmul.f32.gmra.mxu0 %v2762
    %v3064 = vpop.f32.mrf.mxu0
    %v3065 = vadd.f32 0.0, %v3064
    %3066 = vmatmul.f32.gmra.mxu0 %v2763
    %v3067 = vpop.f32.mrf.mxu0
    %v3068 = vadd.f32 0.0, %v3067
    %3069 = vdwg.mxu0
    %3070 = vmatpush.msra.mxu0 %v194
    %3071 = vmatpush.msra.mxu0 %v190
    %3072 = vmatpush.msra.mxu0 %v186
    %3073 = vmatpush.msra.mxu0 %v182
    %3074 = vmatpush.msra.mxu0 %v178
    %3075 = vmatpush.msra.mxu0 %v174
    %3076 = vmatpush.msra.mxu0 %v170
    %3077 = vmatpush.msra.mxu0 %v166
    %3078 = vmatpush.msra.mxu0 %v162
    %3079 = vmatpush.msra.mxu0 %v158
    %3080 = vmatpush.msra.mxu0 %v154
    %3081 = vmatpush.msra.mxu0 %v150
    %3082 = vmatpush.msra.mxu0 %v146
    %3083 = vmatpush.msra.mxu0 %v142
    %3084 = vmatpush.msra.mxu0 %v138
    %3085 = vmatpush.msra.mxu0 %v134
    %3086 = vmatmul.f32.gmra.mxu0 %v2762
    %v3087 = vpop.f32.mrf.mxu0
    %v3088 = vadd.f32 0.0, %v3087
    %3089 = vmatmul.f32.gmra.mxu0 %v2763
    %v3090 = vpop.f32.mrf.mxu0
    %v3091 = vadd.f32 0.0, %v3090
    %3092 = vdwg.mxu0
    %v3093 = vadd.f32 %v2993, %v3019
    %v3094 = vadd.f32 %v2994, %v3042
    %v3095 = vadd.f32 %v2995, %v3065
    %v3096 = vadd.f32 %v2996, %v3088
    %v3097 = vadd.f32 %v2997, %v3022
    %v3098 = vadd.f32 %v2998, %v3045
    %v3099 = vadd.f32 %v2999, %v3068
    %v3100 = vadd.f32 %v3000, %v3091
    %v3101 = vmul.f32 %v3093, 0.5
    %v3102 = vmul.f32 %v3094, 0.5
    %v3103 = vmul.f32 %v3095, 0.5
    %v3104 = vmul.f32 %v3097, 0.5
    %v3105 = vmul.f32 %v3098, 0.5
    %v3106 = vmul.f32 %v3099, 0.5
    %v3107 = vtanh.pop %v3101
    %v3108 = vtanh.pop %v3102
    %v3109 = vtanh.pop %v3103
    %v3110 = vtanh.pop %v3104
    %v3111 = vtanh.pop %v3105
    %v3112 = vtanh.pop %v3106
    %v3113 = vmul.f32 %v3107, 0.5
    %v3114 = vmul.f32 %v3108, 0.5
    %v3115 = vmul.f32 %v3109, 0.5
    %v3116 = vmul.f32 %v3110, 0.5
    %v3117 = vmul.f32 %v3111, 0.5
    %v3118 = vmul.f32 %v3112, 0.5
    %v3119 = vadd.f32 %v3113, 0.5
    %v3120 = vadd.f32 %v3114, 0.5
    %v3121 = vadd.f32 %v3115, 0.5
    %v3122 = vadd.f32 %v3116, 0.5
    %v3123 = vadd.f32 %v3117, 0.5
    %v3124 = vadd.f32 %v3118, 0.5
    %v3125 = vtanh.pop %v3096
    %v3126 = vtanh.pop %v3100
    %v3127 = vmul.f32 %v3120, %v2758
    %v3128 = vmul.f32 %v3123, %v2759
    %v3129 = vmul.f32 %v3119, %v3125
    %v3130 = vmul.f32 %v3122, %v3126
    %v3131 = vadd.f32 %v3127, %v3129
    %v3132 = vadd.f32 %v3128, %v3130
    %v3133 = vtanh.pop %v3131
    %v3134 = vtanh.pop %v3132
    %v3135 = vmul.f32 %v3121, %v3133
    %v3136 = vmul.f32 %v3124, %v3134
    %3137 = vmatpush.msra.mxu0 %v255
    %3138 = vmatpush.msra.mxu0 %v251
    %3139 = vmatpush.msra.mxu0 %v247
    %3140 = vmatpush.msra.mxu0 %v243
    %3141 = vmatpush.msra.mxu0 %v239
    %3142 = vmatpush.msra.mxu0 %v235
    %3143 = vmatpush.msra.mxu0 %v231
    %3144 = vmatpush.msra.mxu0 %v227
    %3145 = vmatpush.msra.mxu0 %v223
    %3146 = vmatpush.msra.mxu0 %v219
    %3147 = vmatpush.msra.mxu0 %v215
    %3148 = vmatpush.msra.mxu0 %v211
    %3149 = vmatpush.msra.mxu0 %v207
    %3150 = vmatpush.msra.mxu0 %v203
    %3151 = vmatpush.msra.mxu0 %v199
    %3152 = vmatpush.msra.mxu0 %v195
    %3153 = vmatmul.f32.gmra.mxu0 %v3135
    %v3154 = vpop.f32.mrf.mxu0
    %v3155 = vadd.f32 0.0, %v3154
    %3156 = vmatmul.f32.gmra.mxu0 %v3136
    %v3157 = vpop.f32.mrf.mxu0
    %v3158 = vadd.f32 0.0, %v3157
    %3159 = vdwg.mxu0
    %3160 = vmatpush.msra.mxu0 %v256
    %3161 = vmatpush.msra.mxu0 %v252
    %3162 = vmatpush.msra.mxu0 %v248
    %3163 = vmatpush.msra.mxu0 %v244
    %3164 = vmatpush.msra.mxu0 %v240
    %3165 = vmatpush.msra.mxu0 %v236
    %3166 = vmatpush.msra.mxu0 %v232
    %3167 = vmatpush.msra.mxu0 %v228
    %3168 = vmatpush.msra.mxu0 %v224
    %3169 = vmatpush.msra.mxu0 %v220
    %3170 = vmatpush.msra.mxu0 %v216
    %3171 = vmatpush.msra.mxu0 %v212
    %3172 = vmatpush.msra.mxu0 %v208
    %3173 = vmatpush.msra.mxu0 %v204
    %3174 = vmatpush.msra.mxu0 %v200
    %3175 = vmatpush.msra.mxu0 %v196
    %3176 = vmatmul.f32.gmra.mxu0 %v3135
    %v3177 = vpop.f32.mrf.mxu0
    %v3178 = vadd.f32 0.0, %v3177
    %3179 = vmatmul.f32.gmra.mxu0 %v3136
    %v3180 = vpop.f32.mrf.mxu0
    %v3181 = vadd.f32 0.0, %v3180
    %3182 = vdwg.mxu0
    %3183 = vmatpush.msra.mxu0 %v257
    %3184 = vmatpush.msra.mxu0 %v253
    %3185 = vmatpush.msra.mxu0 %v249
    %3186 = vmatpush.msra.mxu0 %v245
    %3187 = vmatpush.msra.mxu0 %v241
    %3188 = vmatpush.msra.mxu0 %v237
    %3189 = vmatpush.msra.mxu0 %v233
    %3190 = vmatpush.msra.mxu0 %v229
    %3191 = vmatpush.msra.mxu0 %v225
    %3192 = vmatpush.msra.mxu0 %v221
    %3193 = vmatpush.msra.mxu0 %v217
    %3194 = vmatpush.msra.mxu0 %v213
    %3195 = vmatpush.msra.mxu0 %v209
    %3196 = vmatpush.msra.mxu0 %v205
    %3197 = vmatpush.msra.mxu0 %v201
    %3198 = vmatpush.msra.mxu0 %v197
    %3199 = vmatmul.f32.gmra.mxu0 %v3135
    %v3200 = vpop.f32.mrf.mxu0
    %v3201 = vadd.f32 0.0, %v3200
    %3202 = vmatmul.f32.gmra.mxu0 %v3136
    %v3203 = vpop.f32.mrf.mxu0
    %v3204 = vadd.f32 0.0, %v3203
    %3205 = vdwg.mxu0
    %3206 = vmatpush.msra.mxu0 %v258
    %3207 = vmatpush.msra.mxu0 %v254
    %3208 = vmatpush.msra.mxu0 %v250
    %3209 = vmatpush.msra.mxu0 %v246
    %3210 = vmatpush.msra.mxu0 %v242
    %3211 = vmatpush.msra.mxu0 %v238
    %3212 = vmatpush.msra.mxu0 %v234
    %3213 = vmatpush.msra.mxu0 %v230
    %3214 = vmatpush.msra.mxu0 %v226
    %3215 = vmatpush.msra.mxu0 %v222
    %3216 = vmatpush.msra.mxu0 %v218
    %3217 = vmatpush.msra.mxu0 %v214
    %3218 = vmatpush.msra.mxu0 %v210
    %3219 = vmatpush.msra.mxu0 %v206
    %3220 = vmatpush.msra.mxu0 %v202
    %3221 = vmatpush.msra.mxu0 %v198
    %3222 = vmatmul.f32.gmra.mxu0 %v3135
    %v3223 = vpop.f32.mrf.mxu0
    %v3224 = vadd.f32 0.0, %v3223
    %3225 = vmatmul.f32.gmra.mxu0 %v3136
    %v3226 = vpop.f32.mrf.mxu0
    %v3227 = vadd.f32 0.0, %v3226
    %3228 = vdwg.mxu0
    %3229 = vmatpush.msra.mxu0 %v319
    %3230 = vmatpush.msra.mxu0 %v315
    %3231 = vmatpush.msra.mxu0 %v311
    %3232 = vmatpush.msra.mxu0 %v307
    %3233 = vmatpush.msra.mxu0 %v303
    %3234 = vmatpush.msra.mxu0 %v299
    %3235 = vmatpush.msra.mxu0 %v295
    %3236 = vmatpush.msra.mxu0 %v291
    %3237 = vmatpush.msra.mxu0 %v287
    %3238 = vmatpush.msra.mxu0 %v283
    %3239 = vmatpush.msra.mxu0 %v279
    %3240 = vmatpush.msra.mxu0 %v275
    %3241 = vmatpush.msra.mxu0 %v271
    %3242 = vmatpush.msra.mxu0 %v267
    %3243 = vmatpush.msra.mxu0 %v263
    %3244 = vmatpush.msra.mxu0 %v259
    %3245 = vmatmul.f32.gmra.mxu0 %v2990
    %v3246 = vpop.f32.mrf.mxu0
    %v3247 = vadd.f32 %v3155, %v3246
    %3248 = vmatmul.f32.gmra.mxu0 %v2991
    %v3249 = vpop.f32.mrf.mxu0
    %v3250 = vadd.f32 %v3158, %v3249
    %3251 = vdwg.mxu0
    %3252 = vmatpush.msra.mxu0 %v320
    %3253 = vmatpush.msra.mxu0 %v316
    %3254 = vmatpush.msra.mxu0 %v312
    %3255 = vmatpush.msra.mxu0 %v308
    %3256 = vmatpush.msra.mxu0 %v304
    %3257 = vmatpush.msra.mxu0 %v300
    %3258 = vmatpush.msra.mxu0 %v296
    %3259 = vmatpush.msra.mxu0 %v292
    %3260 = vmatpush.msra.mxu0 %v288
    %3261 = vmatpush.msra.mxu0 %v284
    %3262 = vmatpush.msra.mxu0 %v280
    %3263 = vmatpush.msra.mxu0 %v276
    %3264 = vmatpush.msra.mxu0 %v272
    %3265 = vmatpush.msra.mxu0 %v268
    %3266 = vmatpush.msra.mxu0 %v264
    %3267 = vmatpush.msra.mxu0 %v260
    %3268 = vmatmul.f32.gmra.mxu0 %v2990
    %v3269 = vpop.f32.mrf.mxu0
    %v3270 = vadd.f32 %v3178, %v3269
    %3271 = vmatmul.f32.gmra.mxu0 %v2991
    %v3272 = vpop.f32.mrf.mxu0
    %v3273 = vadd.f32 %v3181, %v3272
    %3274 = vdwg.mxu0
    %3275 = vmatpush.msra.mxu0 %v321
    %3276 = vmatpush.msra.mxu0 %v317
    %3277 = vmatpush.msra.mxu0 %v313
    %3278 = vmatpush.msra.mxu0 %v309
    %3279 = vmatpush.msra.mxu0 %v305
    %3280 = vmatpush.msra.mxu0 %v301
    %3281 = vmatpush.msra.mxu0 %v297
    %3282 = vmatpush.msra.mxu0 %v293
    %3283 = vmatpush.msra.mxu0 %v289
    %3284 = vmatpush.msra.mxu0 %v285
    %3285 = vmatpush.msra.mxu0 %v281
    %3286 = vmatpush.msra.mxu0 %v277
    %3287 = vmatpush.msra.mxu0 %v273
    %3288 = vmatpush.msra.mxu0 %v269
    %3289 = vmatpush.msra.mxu0 %v265
    %3290 = vmatpush.msra.mxu0 %v261
    %3291 = vmatmul.f32.gmra.mxu0 %v2990
    %v3292 = vpop.f32.mrf.mxu0
    %v3293 = vadd.f32 %v3201, %v3292
    %3294 = vmatmul.f32.gmra.mxu0 %v2991
    %v3295 = vpop.f32.mrf.mxu0
    %v3296 = vadd.f32 %v3204, %v3295
    %3297 = vdwg.mxu0
    %3298 = vmatpush.msra.mxu0 %v322
    %3299 = vmatpush.msra.mxu0 %v318
    %3300 = vmatpush.msra.mxu0 %v314
    %3301 = vmatpush.msra.mxu0 %v310
    %3302 = vmatpush.msra.mxu0 %v306
    %3303 = vmatpush.msra.mxu0 %v302
    %3304 = vmatpush.msra.mxu0 %v298
    %3305 = vmatpush.msra.mxu0 %v294
    %3306 = vmatpush.msra.mxu0 %v290
    %3307 = vmatpush.msra.mxu0 %v286
    %3308 = vmatpush.msra.mxu0 %v282
    %3309 = vmatpush.msra.mxu0 %v278
    %3310 = vmatpush.msra.mxu0 %v274
    %3311 = vmatpush.msra.mxu0 %v270
    %3312 = vmatpush.msra.mxu0 %v266
    %3313 = vmatpush.msra.mxu0 %v262
    %3314 = vmatmul.f32.gmra.mxu0 %v2990
    %v3315 = vpop.f32.mrf.mxu0
    %v3316 = vadd.f32 %v3224, %v3315
    %3317 = vmatmul.f32.gmra.mxu0 %v2991
    %v3318 = vpop.f32.mrf.mxu0
    %v3319 = vadd.f32 %v3227, %v3318
    %3320 = vdwg.mxu0
    %v3321 = vadd.f32 %v3247, %v325
    %v3322 = vadd.f32 %v3270, %v326
    %v3323 = vadd.f32 %v3293, %v327
    %v3324 = vadd.f32 %v3316, %v328
    %v3325 = vadd.f32 %v3250, %v325
    %v3326 = vadd.f32 %v3273, %v326
    %v3327 = vadd.f32 %v3296, %v327
    %v3328 = vadd.f32 %v3319, %v328
    %v3329 = vmul.f32 %v3321, 0.5
    %v3330 = vmul.f32 %v3322, 0.5
    %v3331 = vmul.f32 %v3323, 0.5
    %v3332 = vmul.f32 %v3325, 0.5
    %v3333 = vmul.f32 %v3326, 0.5
    %v3334 = vmul.f32 %v3327, 0.5
    %v3335 = vtanh.pop %v3329
    %v3336 = vtanh.pop %v3330
    %v3337 = vtanh.pop %v3331
    %v3338 = vtanh.pop %v3332
    %v3339 = vtanh.pop %v3333
    %v3340 = vtanh.pop %v3334
    %v3341 = vmul.f32 %v3335, 0.5
    %v3342 = vmul.f32 %v3336, 0.5
    %v3343 = vmul.f32 %v3337, 0.5
    %v3344 = vmul.f32 %v3338, 0.5
    %v3345 = vmul.f32 %v3339, 0.5
    %v3346 = vmul.f32 %v3340, 0.5
    %v3347 = vadd.f32 %v3341, 0.5
    %v3348 = vadd.f32 %v3342, 0.5
    %v3349 = vadd.f32 %v3343, 0.5
    %v3350 = vadd.f32 %v3344, 0.5
    %v3351 = vadd.f32 %v3345, 0.5
    %v3352 = vadd.f32 %v3346, 0.5
    %v3353 = vtanh.pop %v3324
    %v3354 = vtanh.pop %v3328
    %v3355 = vmul.f32 %v3348, %v2986
    %v3356 = vmul.f32 %v3351, %v2987
    %v3357 = vmul.f32 %v3347, %v3353
    %v3358 = vmul.f32 %v3350, %v3354
    %v3359 = vadd.f32 %v3355, %v3357
    %v3360 = vadd.f32 %v3356, %v3358
    %v3361 = vtanh.pop %v3359
    %v3362 = vtanh.pop %v3360
    %v3363 = vmul.f32 %v3349, %v3361
    %v3364 = vmul.f32 %v3352, %v3362
    %s3365 = scalar_lea.vmem [#allocation2], 448
    %v3366 = vld [vmem:[%s3365] sm:$0xff]
    %v3367 = vld [vmem:[%s3365 + $0x8] sm:$0xff]
    %v3368 = vld [vmem:[%s3365 + $0x10] sm:$0xff]
    %v3369 = vld [vmem:[%s3365 + $0x18] sm:$0xff]
    %v3370 = vld [vmem:[%s3365 + $0x20] sm:$0xff]
    %v3371 = vld [vmem:[%s3365 + $0x28] sm:$0xff]
    %v3372 = vld [vmem:[%s3365 + $0x30] sm:$0xff]
    %v3373 = vld [vmem:[%s3365 + $0x38] sm:$0xff]
    %3374 = vmatpush.msra.mxu0 %v191
    %3375 = vmatpush.msra.mxu0 %v187
    %3376 = vmatpush.msra.mxu0 %v183
    %3377 = vmatpush.msra.mxu0 %v179
    %3378 = vmatpush.msra.mxu0 %v175
    %3379 = vmatpush.msra.mxu0 %v171
    %3380 = vmatpush.msra.mxu0 %v167
    %3381 = vmatpush.msra.mxu0 %v163
    %3382 = vmatpush.msra.mxu0 %v159
    %3383 = vmatpush.msra.mxu0 %v155
    %3384 = vmatpush.msra.mxu0 %v151
    %3385 = vmatpush.msra.mxu0 %v147
    %3386 = vmatpush.msra.mxu0 %v143
    %3387 = vmatpush.msra.mxu0 %v139
    %3388 = vmatpush.msra.mxu0 %v135
    %3389 = vmatpush.msra.mxu0 %v131
    %3390 = vmatmul.f32.gmra.mxu0 %v3135
    %v3391 = vpop.f32.mrf.mxu0
    %v3392 = vadd.f32 0.0, %v3391
    %3393 = vmatmul.f32.gmra.mxu0 %v3136
    %v3394 = vpop.f32.mrf.mxu0
    %v3395 = vadd.f32 0.0, %v3394
    %3396 = vdwg.mxu0
    %3397 = vmatpush.msra.mxu0 %v192
    %3398 = vmatpush.msra.mxu0 %v188
    %3399 = vmatpush.msra.mxu0 %v184
    %3400 = vmatpush.msra.mxu0 %v180
    %3401 = vmatpush.msra.mxu0 %v176
    %3402 = vmatpush.msra.mxu0 %v172
    %3403 = vmatpush.msra.mxu0 %v168
    %3404 = vmatpush.msra.mxu0 %v164
    %3405 = vmatpush.msra.mxu0 %v160
    %3406 = vmatpush.msra.mxu0 %v156
    %3407 = vmatpush.msra.mxu0 %v152
    %3408 = vmatpush.msra.mxu0 %v148
    %3409 = vmatpush.msra.mxu0 %v144
    %3410 = vmatpush.msra.mxu0 %v140
    %3411 = vmatpush.msra.mxu0 %v136
    %3412 = vmatpush.msra.mxu0 %v132
    %3413 = vmatmul.f32.gmra.mxu0 %v3135
    %v3414 = vpop.f32.mrf.mxu0
    %v3415 = vadd.f32 0.0, %v3414
    %3416 = vmatmul.f32.gmra.mxu0 %v3136
    %v3417 = vpop.f32.mrf.mxu0
    %v3418 = vadd.f32 0.0, %v3417
    %3419 = vdwg.mxu0
    %3420 = vmatpush.msra.mxu0 %v193
    %3421 = vmatpush.msra.mxu0 %v189
    %3422 = vmatpush.msra.mxu0 %v185
    %3423 = vmatpush.msra.mxu0 %v181
    %3424 = vmatpush.msra.mxu0 %v177
    %3425 = vmatpush.msra.mxu0 %v173
    %3426 = vmatpush.msra.mxu0 %v169
    %3427 = vmatpush.msra.mxu0 %v165
    %3428 = vmatpush.msra.mxu0 %v161
    %3429 = vmatpush.msra.mxu0 %v157
    %3430 = vmatpush.msra.mxu0 %v153
    %3431 = vmatpush.msra.mxu0 %v149
    %3432 = vmatpush.msra.mxu0 %v145
    %3433 = vmatpush.msra.mxu0 %v141
    %3434 = vmatpush.msra.mxu0 %v137
    %3435 = vmatpush.msra.mxu0 %v133
    %3436 = vmatmul.f32.gmra.mxu0 %v3135
    %v3437 = vpop.f32.mrf.mxu0
    %v3438 = vadd.f32 0.0, %v3437
    %3439 = vmatmul.f32.gmra.mxu0 %v3136
    %v3440 = vpop.f32.mrf.mxu0
    %v3441 = vadd.f32 0.0, %v3440
    %3442 = vdwg.mxu0
    %3443 = vmatpush.msra.mxu0 %v194
    %3444 = vmatpush.msra.mxu0 %v190
    %3445 = vmatpush.msra.mxu0 %v186
    %3446 = vmatpush.msra.mxu0 %v182
    %3447 = vmatpush.msra.mxu0 %v178
    %3448 = vmatpush.msra.mxu0 %v174
    %3449 = vmatpush.msra.mxu0 %v170
    %3450 = vmatpush.msra.mxu0 %v166
    %3451 = vmatpush.msra.mxu0 %v162
    %3452 = vmatpush.msra.mxu0 %v158
    %3453 = vmatpush.msra.mxu0 %v154
    %3454 = vmatpush.msra.mxu0 %v150
    %3455 = vmatpush.msra.mxu0 %v146
    %3456 = vmatpush.msra.mxu0 %v142
    %3457 = vmatpush.msra.mxu0 %v138
    %3458 = vmatpush.msra.mxu0 %v134
    %3459 = vmatmul.f32.gmra.mxu0 %v3135
    %v3460 = vpop.f32.mrf.mxu0
    %v3461 = vadd.f32 0.0, %v3460
    %3462 = vmatmul.f32.gmra.mxu0 %v3136
    %v3463 = vpop.f32.mrf.mxu0
    %v3464 = vadd.f32 0.0, %v3463
    %3465 = vdwg.mxu0
    %v3466 = vadd.f32 %v3366, %v3392
    %v3467 = vadd.f32 %v3367, %v3415
    %v3468 = vadd.f32 %v3368, %v3438
    %v3469 = vadd.f32 %v3369, %v3461
    %v3470 = vadd.f32 %v3370, %v3395
    %v3471 = vadd.f32 %v3371, %v3418
    %v3472 = vadd.f32 %v3372, %v3441
    %v3473 = vadd.f32 %v3373, %v3464
    %v3474 = vmul.f32 %v3466, 0.5
    %v3475 = vmul.f32 %v3467, 0.5
    %v3476 = vmul.f32 %v3468, 0.5
    %v3477 = vmul.f32 %v3470, 0.5
    %v3478 = vmul.f32 %v3471, 0.5
    %v3479 = vmul.f32 %v3472, 0.5
    %v3480 = vtanh.pop %v3474
    %v3481 = vtanh.pop %v3475
    %v3482 = vtanh.pop %v3476
    %v3483 = vtanh.pop %v3477
    %v3484 = vtanh.pop %v3478
    %v3485 = vtanh.pop %v3479
    %v3486 = vmul.f32 %v3480, 0.5
    %v3487 = vmul.f32 %v3481, 0.5
    %v3488 = vmul.f32 %v3482, 0.5
    %v3489 = vmul.f32 %v3483, 0.5
    %v3490 = vmul.f32 %v3484, 0.5
    %v3491 = vmul.f32 %v3485, 0.5
    %v3492 = vadd.f32 %v3486, 0.5
    %v3493 = vadd.f32 %v3487, 0.5
    %v3494 = vadd.f32 %v3488, 0.5
    %v3495 = vadd.f32 %v3489, 0.5
    %v3496 = vadd.f32 %v3490, 0.5
    %v3497 = vadd.f32 %v3491, 0.5
    %v3498 = vtanh.pop %v3469
    %v3499 = vtanh.pop %v3473
    %v3500 = vmul.f32 %v3493, %v3131
    %v3501 = vmul.f32 %v3496, %v3132
    %v3502 = vmul.f32 %v3492, %v3498
    %v3503 = vmul.f32 %v3495, %v3499
    %v3504 = vadd.f32 %v3500, %v3502
    %v3505 = vadd.f32 %v3501, %v3503
    %v3506 = vtanh.pop %v3504
    %v3507 = vtanh.pop %v3505
    %v3508 = vmul.f32 %v3494, %v3506
    %v3509 = vmul.f32 %v3497, %v3507
    %3510 = vmatpush.msra.mxu0 %v255
    %3511 = vmatpush.msra.mxu0 %v251
    %3512 = vmatpush.msra.mxu0 %v247
    %3513 = vmatpush.msra.mxu0 %v243
    %3514 = vmatpush.msra.mxu0 %v239
    %3515 = vmatpush.msra.mxu0 %v235
    %3516 = vmatpush.msra.mxu0 %v231
    %3517 = vmatpush.msra.mxu0 %v227
    %3518 = vmatpush.msra.mxu0 %v223
    %3519 = vmatpush.msra.mxu0 %v219
    %3520 = vmatpush.msra.mxu0 %v215
    %3521 = vmatpush.msra.mxu0 %v211
    %3522 = vmatpush.msra.mxu0 %v207
    %3523 = vmatpush.msra.mxu0 %v203
    %3524 = vmatpush.msra.mxu0 %v199
    %3525 = vmatpush.msra.mxu0 %v195
    %3526 = vmatmul.f32.gmra.mxu0 %v3508
    %v3527 = vpop.f32.mrf.mxu0
    %v3528 = vadd.f32 0.0, %v3527
    %3529 = vmatmul.f32.gmra.mxu0 %v3509
    %v3530 = vpop.f32.mrf.mxu0
    %v3531 = vadd.f32 0.0, %v3530
    %3532 = vdwg.mxu0
    %3533 = vmatpush.msra.mxu0 %v256
    %3534 = vmatpush.msra.mxu0 %v252
    %3535 = vmatpush.msra.mxu0 %v248
    %3536 = vmatpush.msra.mxu0 %v244
    %3537 = vmatpush.msra.mxu0 %v240
    %3538 = vmatpush.msra.mxu0 %v236
    %3539 = vmatpush.msra.mxu0 %v232
    %3540 = vmatpush.msra.mxu0 %v228
    %3541 = vmatpush.msra.mxu0 %v224
    %3542 = vmatpush.msra.mxu0 %v220
    %3543 = vmatpush.msra.mxu0 %v216
    %3544 = vmatpush.msra.mxu0 %v212
    %3545 = vmatpush.msra.mxu0 %v208
    %3546 = vmatpush.msra.mxu0 %v204
    %3547 = vmatpush.msra.mxu0 %v200
    %3548 = vmatpush.msra.mxu0 %v196
    %3549 = vmatmul.f32.gmra.mxu0 %v3508
    %v3550 = vpop.f32.mrf.mxu0
    %v3551 = vadd.f32 0.0, %v3550
    %3552 = vmatmul.f32.gmra.mxu0 %v3509
    %v3553 = vpop.f32.mrf.mxu0
    %v3554 = vadd.f32 0.0, %v3553
    %3555 = vdwg.mxu0
    %3556 = vmatpush.msra.mxu0 %v257
    %3557 = vmatpush.msra.mxu0 %v253
    %3558 = vmatpush.msra.mxu0 %v249
    %3559 = vmatpush.msra.mxu0 %v245
    %3560 = vmatpush.msra.mxu0 %v241
    %3561 = vmatpush.msra.mxu0 %v237
    %3562 = vmatpush.msra.mxu0 %v233
    %3563 = vmatpush.msra.mxu0 %v229
    %3564 = vmatpush.msra.mxu0 %v225
    %3565 = vmatpush.msra.mxu0 %v221
    %3566 = vmatpush.msra.mxu0 %v217
    %3567 = vmatpush.msra.mxu0 %v213
    %3568 = vmatpush.msra.mxu0 %v209
    %3569 = vmatpush.msra.mxu0 %v205
    %3570 = vmatpush.msra.mxu0 %v201
    %3571 = vmatpush.msra.mxu0 %v197
    %3572 = vmatmul.f32.gmra.mxu0 %v3508
    %v3573 = vpop.f32.mrf.mxu0
    %v3574 = vadd.f32 0.0, %v3573
    %3575 = vmatmul.f32.gmra.mxu0 %v3509
    %v3576 = vpop.f32.mrf.mxu0
    %v3577 = vadd.f32 0.0, %v3576
    %3578 = vdwg.mxu0
    %3579 = vmatpush.msra.mxu0 %v258
    %3580 = vmatpush.msra.mxu0 %v254
    %3581 = vmatpush.msra.mxu0 %v250
    %3582 = vmatpush.msra.mxu0 %v246
    %3583 = vmatpush.msra.mxu0 %v242
    %3584 = vmatpush.msra.mxu0 %v238
    %3585 = vmatpush.msra.mxu0 %v234
    %3586 = vmatpush.msra.mxu0 %v230
    %3587 = vmatpush.msra.mxu0 %v226
    %3588 = vmatpush.msra.mxu0 %v222
    %3589 = vmatpush.msra.mxu0 %v218
    %3590 = vmatpush.msra.mxu0 %v214
    %3591 = vmatpush.msra.mxu0 %v210
    %3592 = vmatpush.msra.mxu0 %v206
    %3593 = vmatpush.msra.mxu0 %v202
    %3594 = vmatpush.msra.mxu0 %v198
    %3595 = vmatmul.f32.gmra.mxu0 %v3508
    %v3596 = vpop.f32.mrf.mxu0
    %v3597 = vadd.f32 0.0, %v3596
    %3598 = vmatmul.f32.gmra.mxu0 %v3509
    %v3599 = vpop.f32.mrf.mxu0
    %v3600 = vadd.f32 0.0, %v3599
    %3601 = vdwg.mxu0
    %3602 = vmatpush.msra.mxu0 %v319
    %3603 = vmatpush.msra.mxu0 %v315
    %3604 = vmatpush.msra.mxu0 %v311
    %3605 = vmatpush.msra.mxu0 %v307
    %3606 = vmatpush.msra.mxu0 %v303
    %3607 = vmatpush.msra.mxu0 %v299
    %3608 = vmatpush.msra.mxu0 %v295
    %3609 = vmatpush.msra.mxu0 %v291
    %3610 = vmatpush.msra.mxu0 %v287
    %3611 = vmatpush.msra.mxu0 %v283
    %3612 = vmatpush.msra.mxu0 %v279
    %3613 = vmatpush.msra.mxu0 %v275
    %3614 = vmatpush.msra.mxu0 %v271
    %3615 = vmatpush.msra.mxu0 %v267
    %3616 = vmatpush.msra.mxu0 %v263
    %3617 = vmatpush.msra.mxu0 %v259
    %3618 = vmatmul.f32.gmra.mxu0 %v3363
    %v3619 = vpop.f32.mrf.mxu0
    %v3620 = vadd.f32 %v3528, %v3619
    %3621 = vmatmul.f32.gmra.mxu0 %v3364
    %v3622 = vpop.f32.mrf.mxu0
    %v3623 = vadd.f32 %v3531, %v3622
    %3624 = vdwg.mxu0
    %3625 = vmatpush.msra.mxu0 %v320
    %3626 = vmatpush.msra.mxu0 %v316
    %3627 = vmatpush.msra.mxu0 %v312
    %3628 = vmatpush.msra.mxu0 %v308
    %3629 = vmatpush.msra.mxu0 %v304
    %3630 = vmatpush.msra.mxu0 %v300
    %3631 = vmatpush.msra.mxu0 %v296
    %3632 = vmatpush.msra.mxu0 %v292
    %3633 = vmatpush.msra.mxu0 %v288
    %3634 = vmatpush.msra.mxu0 %v284
    %3635 = vmatpush.msra.mxu0 %v280
    %3636 = vmatpush.msra.mxu0 %v276
    %3637 = vmatpush.msra.mxu0 %v272
    %3638 = vmatpush.msra.mxu0 %v268
    %3639 = vmatpush.msra.mxu0 %v264
    %3640 = vmatpush.msra.mxu0 %v260
    %3641 = vmatmul.f32.gmra.mxu0 %v3363
    %v3642 = vpop.f32.mrf.mxu0
    %v3643 = vadd.f32 %v3551, %v3642
    %3644 = vmatmul.f32.gmra.mxu0 %v3364
    %v3645 = vpop.f32.mrf.mxu0
    %v3646 = vadd.f32 %v3554, %v3645
    %3647 = vdwg.mxu0
    %3648 = vmatpush.msra.mxu0 %v321
    %3649 = vmatpush.msra.mxu0 %v317
    %3650 = vmatpush.msra.mxu0 %v313
    %3651 = vmatpush.msra.mxu0 %v309
    %3652 = vmatpush.msra.mxu0 %v305
    %3653 = vmatpush.msra.mxu0 %v301
    %3654 = vmatpush.msra.mxu0 %v297
    %3655 = vmatpush.msra.mxu0 %v293
    %3656 = vmatpush.msra.mxu0 %v289
    %3657 = vmatpush.msra.mxu0 %v285
    %3658 = vmatpush.msra.mxu0 %v281
    %3659 = vmatpush.msra.mxu0 %v277
    %3660 = vmatpush.msra.mxu0 %v273
    %3661 = vmatpush.msra.mxu0 %v269
    %3662 = vmatpush.msra.mxu0 %v265
    %3663 = vmatpush.msra.mxu0 %v261
    %3664 = vmatmul.f32.gmra.mxu0 %v3363
    %v3665 = vpop.f32.mrf.mxu0
    %v3666 = vadd.f32 %v3574, %v3665
    %3667 = vmatmul.f32.gmra.mxu0 %v3364
    %v3668 = vpop.f32.mrf.mxu0
    %v3669 = vadd.f32 %v3577, %v3668
    %3670 = vdwg.mxu0
    %3671 = vmatpush.msra.mxu0 %v322
    %3672 = vmatpush.msra.mxu0 %v318
    %3673 = vmatpush.msra.mxu0 %v314
    %3674 = vmatpush.msra.mxu0 %v310
    %3675 = vmatpush.msra.mxu0 %v306
    %3676 = vmatpush.msra.mxu0 %v302
    %3677 = vmatpush.msra.mxu0 %v298
    %3678 = vmatpush.msra.mxu0 %v294
    %3679 = vmatpush.msra.mxu0 %v290
    %3680 = vmatpush.msra.mxu0 %v286
    %3681 = vmatpush.msra.mxu0 %v282
    %3682 = vmatpush.msra.mxu0 %v278
    %3683 = vmatpush.msra.mxu0 %v274
    %3684 = vmatpush.msra.mxu0 %v270
    %3685 = vmatpush.msra.mxu0 %v266
    %3686 = vmatpush.msra.mxu0 %v262
    %3687 = vmatmul.f32.gmra.mxu0 %v3363
    %v3688 = vpop.f32.mrf.mxu0
    %v3689 = vadd.f32 %v3597, %v3688
    %3690 = vmatmul.f32.gmra.mxu0 %v3364
    %v3691 = vpop.f32.mrf.mxu0
    %v3692 = vadd.f32 %v3600, %v3691
    %3693 = vdwg.mxu0
    %v3694 = vadd.f32 %v3620, %v325
    %v3695 = vadd.f32 %v3643, %v326
    %v3696 = vadd.f32 %v3666, %v327
    %v3697 = vadd.f32 %v3689, %v328
    %v3698 = vadd.f32 %v3623, %v325
    %v3699 = vadd.f32 %v3646, %v326
    %v3700 = vadd.f32 %v3669, %v327
    %v3701 = vadd.f32 %v3692, %v328
    %v3702 = vmul.f32 %v3694, 0.5
    %v3703 = vmul.f32 %v3695, 0.5
    %v3704 = vmul.f32 %v3696, 0.5
    %v3705 = vmul.f32 %v3698, 0.5
    %v3706 = vmul.f32 %v3699, 0.5
    %v3707 = vmul.f32 %v3700, 0.5
    %v3708 = vtanh.pop %v3702
    %v3709 = vtanh.pop %v3703
    %v3710 = vtanh.pop %v3704
    %v3711 = vtanh.pop %v3705
    %v3712 = vtanh.pop %v3706
    %v3713 = vtanh.pop %v3707
    %v3714 = vmul.f32 %v3708, 0.5
    %v3715 = vmul.f32 %v3709, 0.5
    %v3716 = vmul.f32 %v3710, 0.5
    %v3717 = vmul.f32 %v3711, 0.5
    %v3718 = vmul.f32 %v3712, 0.5
    %v3719 = vmul.f32 %v3713, 0.5
    %v3720 = vadd.f32 %v3714, 0.5
    %v3721 = vadd.f32 %v3715, 0.5
    %v3722 = vadd.f32 %v3716, 0.5
    %v3723 = vadd.f32 %v3717, 0.5
    %v3724 = vadd.f32 %v3718, 0.5
    %v3725 = vadd.f32 %v3719, 0.5
    %v3726 = vtanh.pop %v3697
    %v3727 = vtanh.pop %v3701
    %v3728 = vmul.f32 %v3721, %v3359
    %v3729 = vmul.f32 %v3724, %v3360
    %v3730 = vmul.f32 %v3720, %v3726
    %v3731 = vmul.f32 %v3723, %v3727
    %v3732 = vadd.f32 %v3728, %v3730
    %v3733 = vadd.f32 %v3729, %v3731
    %v3734 = vtanh.pop %v3732
    %v3735 = vtanh.pop %v3733
    %v3736 = vmul.f32 %v3722, %v3734
    %v3737 = vmul.f32 %v3725, %v3735
    %3738 = vst [vmem:[#allocation3] sm:$0xff] %v3508
    %3739 = vst [vmem:[#allocation3 + $0x8] sm:$0xff] %v3509
    %3740 = vst [vmem:[#allocation4] sm:$0xff] %v3504
    %3741 = vst [vmem:[#allocation4 + $0x8] sm:$0xff] %v3505
    %3742 = vst [vmem:[#allocation5] sm:$0xff] %v3736
    %3743 = vst [vmem:[#allocation5 + $0x8] sm:$0xff] %v3737
    %3744 = vst [vmem:[#allocation6] sm:$0xff] %v3732
    %3745 = vst [vmem:[#allocation6 + $0x8] sm:$0xff] %v3733
    // Predicated region
    $region58: #{tpu_custom_call.1} parent=1 // pred_check
      %p3746 = pneg %p119
    $region59: #{tpu_custom_call.1} parent=1 // pred_check_branch
      %3748 = sbr.rel (%p3746) target = $region61
    $region60: #{tpu_custom_call.1} parent=1 // pred_region
      %3749 = vst [vmem:[#allocation18] sm:$0xff] %v3736
      %3750 = vst [vmem:[#allocation18 + $0x8] sm:$0xff] %v3737
    $region61: #{tpu_custom_call.1} parent=1 // pred_fallthru
      _
    // Predicated region
    $region62: #{tpu_custom_call.1} parent=1 // pred_check
      _
    $region63: #{tpu_custom_call.1} parent=1 // pred_check_branch
      %3752 = sbr.rel (0) target = $region65
    $region64: #{tpu_custom_call.1} parent=1 // pred_region
      %3754 = vsyncadd [#allocation9], 0
      %s3755 = sshll.u32 [#allocation18], 4
      %s3756 = int_to_ptr.vmem [resolvable:$true] %s3755
      %s3757 = sshll.u32 %s7, 4
      %s3758 = int_to_ptr.hbm [resolvable:$true] %s3757
      %3763 = dma.vmem_to_hbm [thread:$0]  %s3756, 256, %s3758, [#allocation9], 128, 128, 8
    $region65: #{tpu_custom_call.1} parent=1 // pred_fallthru
      _
    // Predicated region
    $region66: #{tpu_custom_call.1} parent=1 // pred_check
      _
    $region67: #{tpu_custom_call.1} parent=1 // pred_check_branch
      %3765 = sbr.rel (0) target = $region69
    $region68: #{tpu_custom_call.1} parent=1 // pred_region
      %3767 = dma.done [#allocation9], 256
    $region69: #{tpu_custom_call.1} parent=1 // pred_fallthru
      _
    %3768 = vsyncpa [#allocation8], 1
    %3769 = vsyncpa [#allocation11], 1
    %3770 = vsyncpa [#allocation14], 1
    %3771 = vsyncpa [#allocation17], 1
    %3772 = vsyncpa [#allocation9], 1

</llo_original>
